<compile_context>
chip_gen: v7x
topology: tpu7x:2x2x1
jax: 0.10.0
libtpu: 0.0.40
codegen_flags: <defaults>
</compile_context>

<pallas_src>
import functools

import jax
import jax.numpy as jnp
from jax.experimental import pallas as pl
from jax.experimental.pallas import tpu as pltpu


# --------------------------------- kernel ------------------------------------
def mnet_kernel(x_ref, masks_ref, w1_ref, w2_ref, tau_ref, o_ref, col_ref, *,
                num_blocks, W, mxu_dtype):
    C, Rs = x_ref.shape               # Rs = images_per_step * H * W
    K_pad = col_ref.shape[0]          # round_up(9*C + 1, 8)
    f32 = jnp.float32

    # Tap table: (lane shift, mask-row index or None).  Shifts are modulo the
    # full lane width Rs (several images): the per-image boundary masks zero
    # every position whose 3x3 source would cross a spatial/image boundary, so
    # the circular roll never leaks pixels between adjacent images.
    taps = []
    mi = 0
    for ky in range(3):
        for kx in range(3):
            dy, dx = ky - 1, kx - 1
            if dy == 0 and dx == 0:
                taps.append((0, None))          # center tap: no shift, no mask
            else:
                taps.append(((-(dy * W + dx)) % Rs, mi))
                mi += 1

    # Constant tail of the im2col operand: a ones row (contracts with the
    # folded bias/BN-shift column of the weights) followed by zero padding
    # rows (their weight columns are zero).  Written once per grid step.
    tail = K_pad - 9 * C
    row = jax.lax.broadcasted_iota(jnp.int32, (tail, Rs), 0)
    col_ref[pl.ds(9 * C, tail), :] = jnp.where(row == 0, 1.0, 0.0).astype(mxu_dtype)

    def conv3x3_bn(x_f32, w):                   # x: (C, Rs) f32, w: (C, K_pad)
        xc = x_f32.astype(mxu_dtype)            # one cast per conv
        for t, (shift, m) in enumerate(taps):
            y = xc if shift == 0 else pltpu.roll(xc, shift=shift, axis=1)  # XLU
            if m is not None:
                y = y * masks_ref[m:m + 1, :]   # VPU boundary mask (MXU dtype)
            col_ref[pl.ds(t * C, C), :] = y     # static sublane offsets
        # One MXU matmul: conv + bias + BN (shift folded into column 9C).
        return jnp.dot(w, col_ref[...], preferred_element_type=f32)

    out = x_ref[...].astype(f32)                # residual carry stays f32
    for blk in range(num_blocks):               # fully unrolled block loop
        h = jnp.maximum(conv3x3_bn(out, w1_ref[blk]), 0.0)          # ReLU
        out = jnp.maximum(conv3x3_bn(h, w2_ref[blk]) + out, 0.0)    # res + ReLU
    o_ref[...] = jnp.maximum(out - tau_ref[0], 0.0)                 # ReLU(out - tau)


# ------------------------------ host helpers ---------------------------------
def build_tap_masks(H, W, images, dtype):
    """(8, images*H*W) per-tap boundary masks (non-center taps, row-major ky,kx)."""
    R = H * W
    p = jnp.arange(R)
    hh = p // W
    ww = p % W
    rows = []
    for ky in range(3):
        for kx in range(3):
            dy, dx = ky - 1, kx - 1
            if dy == 0 and dx == 0:
                continue
            valid = ((hh + dy >= 0) & (hh + dy < H) &
                     (ww + dx >= 0) & (ww + dx < W))
            rows.append(valid)
    m = jnp.stack(rows).astype(jnp.float32)           # (8, R)
    return jnp.tile(m, (1, images)).astype(dtype)     # (8, images*R)


def fold_conv_bn(w, cb, g, be, rm, rv, eps=1e-5):
    """Fold Conv2d bias + eval-mode BN into a single (C, K_pad) matmul weight.

    BN(conv(x,w)+cb) = (sc*w)(*)x + ((cb-rm)*sc + be),  sc = g/sqrt(rv+eps).
    K layout: [ky, kx, Cin] flattened (matches the kernel's tap order), the
    per-channel shift in column 9*Cin, zero padding up to a multiple of 8.
    """
    sc = g / jnp.sqrt(rv + eps)                                    # (NB, C)
    w_f = w * sc[:, :, None, None, None]
    nb, co, ci = w.shape[0], w.shape[1], w.shape[2]
    w_k = jnp.transpose(w_f, (0, 1, 3, 4, 2)).reshape(nb, co, 9 * ci)
    shift = (cb - rm) * sc + be                                    # (NB, C)
    k_pad = ((9 * ci + 1 + 7) // 8) * 8
    w_full = jnp.zeros((nb, co, k_pad), w.dtype)
    w_full = w_full.at[:, :, :9 * ci].set(w_k)
    w_full = w_full.at[:, :, 9 * ci].set(shift)
    return w_full


def _default_images_per_step(N, R, C):
    """Widen lanes per step while keeping >=2 grid steps (v7x megacore) and a
    bounded im2col scratch footprint."""
    best = 1
    for d in range(1, N + 1):
        if N % d:
            continue
        if d * R * (9 * C + 8) * 2 > 16 * 1024 * 1024:   # bf16 scratch cap
            continue
        if N >= 2 and N // d < 2:
            continue
        best = d
    return best


def _pick_vmem_limit(C, Rs, K_pad, num_blocks, mxu_bytes):
    est = (2 * 2 * C * Rs * 4                       # x + out blocks, dbl-buffered
           + K_pad * Rs * mxu_bytes                 # persistent im2col scratch
           + 2 * 8 * Rs * mxu_bytes                 # masks
           + 2 * 2 * num_blocks * C * K_pad * mxu_bytes)   # weight stacks
    limit = max(32 << 20, min(2 * est + (8 << 20), 96 << 20))
    try:
        cap = pltpu.get_tpu_info().vmem_capacity_bytes
        limit = min(limit, (3 * cap) // 4)          # 96 MiB v5e/v6e, 48 MiB v7x
    except Exception:
        limit = min(limit, 48 << 20)                # safe on every generation
    return int(limit)


# --------------------------------- wrapper -----------------------------------
def mnet_pallas(x_nchw, w1_full, w2_full, tau, *, num_blocks, H, W,
                images_per_step=None, mxu_dtype=jnp.bfloat16):
    N, C = x_nchw.shape[:2]
    R = H * W
    if images_per_step is None:
        images_per_step = _default_images_per_step(N, R, C)
    assert N % images_per_step == 0
    G = N // images_per_step
    Rs = images_per_step * R

    # (N, C, H, W) -> (G, C, images_per_step*H*W): images concatenated on lanes.
    x3d = (x_nchw.astype(jnp.float32)
           .reshape(G, images_per_step, C, R)
           .transpose(0, 2, 1, 3)
           .reshape(G, C, Rs))

    masks = build_tap_masks(H, W, images_per_step, mxu_dtype)   # (8, Rs)
    w1 = w1_full.astype(mxu_dtype)                              # (NB, C, K_pad)
    w2 = w2_full.astype(mxu_dtype)
    K_pad = w1.shape[-1]
    mxu_bytes = jnp.dtype(mxu_dtype).itemsize

    kern = functools.partial(mnet_kernel, num_blocks=num_blocks, W=W,
                             mxu_dtype=mxu_dtype)

    out = pl.pallas_call(
        kern,
        out_shape=jax.ShapeDtypeStruct((G, C, Rs), jnp.float32),
        grid=(G,),
        in_specs=[
            pl.BlockSpec((None, C, Rs), lambda g: (g, 0, 0)),    # activations
            pl.BlockSpec(masks.shape, lambda g: (0, 0)),         # boundary masks
            pl.BlockSpec(w1.shape, lambda g: (0, 0, 0)),         # conv1 weights
            pl.BlockSpec(w2.shape, lambda g: (0, 0, 0)),         # conv2 weights
            pl.BlockSpec(memory_space=pltpu.MemorySpace.SMEM),   # tau scalar
        ],
        out_specs=pl.BlockSpec((None, C, Rs), lambda g: (g, 0, 0)),
        scratch_shapes=[pltpu.VMEM((K_pad, Rs), mxu_dtype)],     # im2col scratch
        compiler_params=pltpu.CompilerParams(
            dimension_semantics=("parallel",),                   # megacore on v7x
            vmem_limit_bytes=_pick_vmem_limit(C, Rs, K_pad, num_blocks,
                                              mxu_bytes)),
    )(x3d, masks, w1, w2, tau)

    return (out.reshape(G, C, images_per_step, R)
            .transpose(0, 2, 1, 3)
            .reshape(N, C, H, W))


# ----------------------------- pure-JAX reference ----------------------------
def _conv3x3_ref(x, w, bias):
    y = jax.lax.conv_general_dilated(
        x, w, window_strides=(1, 1), padding="SAME",
        dimension_numbers=("NCHW", "OIHW", "NCHW"),
        precision=jax.lax.Precision.HIGHEST)
    return y + bias[None, :, None, None]


def _bn_eval(x, g, b, rm, rv, eps=1e-5):
    inv = g / jnp.sqrt(rv + eps)
    return (x - rm[None, :, None, None]) * inv[None, :, None, None] \
        + b[None, :, None, None]


def mnet_reference(x, p, tau, num_blocks):
    out = x
    for blk in range(num_blocks):
        res = out
        h = _conv3x3_ref(out, p["w1"][blk], p["cb1"][blk])
        h = _bn_eval(h, p["g1"][blk], p["be1"][blk], p["rm1"][blk], p["rv1"][blk])
        h = jnp.maximum(h, 0.0)
        h = _conv3x3_ref(h, p["w2"][blk], p["cb2"][blk])
        h = _bn_eval(h, p["g2"][blk], p["be2"][blk], p["rm2"][blk], p["rv2"][blk])
        out = jnp.maximum(h + res, 0.0)
    return jnp.maximum(out - tau, 0.0)


# --------------------------------- main ---------------------------------------
if __name__ == "__main__":
    N, C, H, W = 4, 8, 16, 16        # batch, planes, spatial (R = 256/image)
    NUM_BLOCKS = 2
    TAU = 0.5
    EPS = 1e-5

    key = jax.random.PRNGKey(0)
    ks = jax.random.split(key, 16)
    fan = (C * 9) ** 0.5

    x = jax.random.normal(ks[0], (N, C, H, W), jnp.float32)

    params = dict(
        w1=jax.random.normal(ks[1], (NUM_BLOCKS, C, C, 3, 3), jnp.float32) / fan,
        w2=jax.random.normal(ks[2], (NUM_BLOCKS, C, C, 3, 3), jnp.float32) / fan,
        cb1=0.05 * jax.random.normal(ks[3], (NUM_BLOCKS, C), jnp.float32),
        cb2=0.05 * jax.random.normal(ks[4], (NUM_BLOCKS, C), jnp.float32),
        g1=1.0 + 0.1 * jax.random.normal(ks[5], (NUM_BLOCKS, C), jnp.float32),
        g2=1.0 + 0.1 * jax.random.normal(ks[6], (NUM_BLOCKS, C), jnp.float32),
        be1=0.1 * jax.random.normal(ks[7], (NUM_BLOCKS, C), jnp.float32),
        be2=0.1 * jax.random.normal(ks[8], (NUM_BLOCKS, C), jnp.float32),
        rm1=0.05 * jax.random.normal(ks[9], (NUM_BLOCKS, C), jnp.float32),
        rm2=0.05 * jax.random.normal(ks[10], (NUM_BLOCKS, C), jnp.float32),
        rv1=jax.random.uniform(ks[11], (NUM_BLOCKS, C), jnp.float32, 0.5, 1.5),
        rv2=jax.random.uniform(ks[12], (NUM_BLOCKS, C), jnp.float32, 0.5, 1.5),
    )

    w1_full = fold_conv_bn(params["w1"], params["cb1"], params["g1"],
                           params["be1"], params["rm1"], params["rv1"], EPS)
    w2_full = fold_conv_bn(params["w2"], params["cb2"], params["g2"],
                           params["be2"], params["rm2"], params["rv2"], EPS)
    tau = jnp.array([TAU], jnp.float32)

    out_ref = mnet_reference(x, params, TAU, NUM_BLOCKS)

    # f32 MXU operands: validates roll/mask/im2col/bias-fold logic tightly.
    out_f32 = mnet_pallas(x, w1_full, w2_full, tau,
                          num_blocks=NUM_BLOCKS, H=H, W=W,
                          mxu_dtype=jnp.float32)
    jax.block_until_ready(out_f32)

    # bf16 MXU operands (production perf config), f32 accumulation / residual.
    out_bf16 = mnet_pallas(x, w1_full, w2_full, tau,
                           num_blocks=NUM_BLOCKS, H=H, W=W,
                           mxu_dtype=jnp.bfloat16)
    jax.block_until_ready(out_bf16)

    assert out_f32.shape == (N, C, H, W)
    assert out_bf16.shape == (N, C, H, W)
    err32 = float(jnp.max(jnp.abs(out_f32 - out_ref)))
    err16 = float(jnp.max(jnp.abs(out_bf16 - out_ref)))
    assert err32 < 1e-3, f"f32-path max abs err too large: {err32}"
    assert err16 < 5e-2, f"bf16-path max abs err too large: {err16}"

    print("KERNEL_OK")
</pallas_src>

<mosaic_0001>
module attributes {stable_mosaic.version = 11 : i64} {
  func.func @mnet_kernel(%arg0: i32, %arg1: memref<1x8x512xf32, #tpu.memory_space<vmem>>, %arg2: memref<8x512xf32, #tpu.memory_space<vmem>>, %arg3: memref<2x8x80xf32, #tpu.memory_space<vmem>>, %arg4: memref<2x8x80xf32, #tpu.memory_space<vmem>>, %arg5: memref<1xf32, #tpu.memory_space<smem>>, %arg6: memref<1x8x512xf32, #tpu.memory_space<vmem>>, %arg7: memref<80x512xf32, #tpu.memory_space<vmem>>) attributes {dimension_semantics = [#tpu.dimension_semantics<parallel>], iteration_bounds = array<i64: 2>, scalar_prefetch = 0 : i64, scratch_operands = 1 : i64, tpu.core_type = #tpu.core_type<tc>, window_params = [{transform_indices = @transform_0, window_bounds = array<i64: 1, 8, 512>}, {pipeline_mode = #tpu.pipeline_mode<synchronous>, transform_indices = @transform_1, window_bounds = array<i64: 8, 512>}, {pipeline_mode = #tpu.pipeline_mode<synchronous>, transform_indices = @transform_2, window_bounds = array<i64: 2, 8, 80>}, {pipeline_mode = #tpu.pipeline_mode<synchronous>, transform_indices = @transform_3, window_bounds = array<i64: 2, 8, 80>}, {transform_indices = @transform_4, window_bounds = array<i64: 1>}, {transform_indices = @transform_5, window_bounds = array<i64: 1, 8, 512>}]} {
    %0 = tpu.iota {dimensions = array<i32: 0>} : vector<8x512xi32>
    %c0_i32 = arith.constant 0 : i32
    %1 = vector.broadcast %c0_i32 : i32 to vector<8x512xi32>
    %2 = arith.cmpi eq, %0, %1 : vector<8x512xi32>
    %cst = arith.constant 1.000000e+00 : f32
    %cst_0 = arith.constant 0.000000e+00 : f32
    %3 = vector.broadcast %cst : f32 to vector<8x512xf32>
    %4 = vector.broadcast %cst_0 : f32 to vector<8x512xf32>
    %5 = arith.select %2, %3, %4 : vector<8x512xi1>, vector<8x512xf32>
    %c72 = arith.constant 72 : index
    %c0 = arith.constant 0 : index
    %6 = vector.load %arg7[%c72, %c0] : memref<80x512xf32, #tpu.memory_space<vmem>>, vector<8x512xf32>
    tpu.vector_store %arg7[%c72, %c0], %5 {strides = array<i32>} : memref<80x512xf32, #tpu.memory_space<vmem>>, vector<8x512xf32>,
    %c0_1 = arith.constant 0 : index
    %c0_2 = arith.constant 0 : index
    %c0_3 = arith.constant 0 : index
    %7 = vector.load %arg1[%c0_1, %c0_2, %c0_3] : memref<1x8x512xf32, #tpu.memory_space<vmem>>, vector<1x8x512xf32>
    %8 = vector.shape_cast %7 : vector<1x8x512xf32> to vector<8x512xf32>
    %c0_4 = arith.constant 0 : index
    %c0_5 = arith.constant 0 : index
    %c0_6 = arith.constant 0 : index
    %9 = vector.load %arg3[%c0_4, %c0_5, %c0_6] : memref<2x8x80xf32, #tpu.memory_space<vmem>>, vector<1x8x80xf32>
    %10 = vector.shape_cast %9 : vector<1x8x80xf32> to vector<8x80xf32>
    %c17_i32 = arith.constant 17 : i32
    %11 = tpu.dynamic_rotate %8 by %c17_i32 dim 1 : vector<8x512xf32>, i32 -> vector<8x512xf32>
    %c0_7 = arith.constant 0 : index
    %c0_8 = arith.constant 0 : index
    %12 = vector.load %arg2[%c0_7, %c0_8] : memref<8x512xf32, #tpu.memory_space<vmem>>, vector<1x512xf32>
    %13 = vector.broadcast %12 : vector<1x512xf32> to vector<8x512xf32>
    %14 = arith.mulf %11, %13 : vector<8x512xf32>
    %c0_9 = arith.constant 0 : index
    %c0_10 = arith.constant 0 : index
    %15 = vector.load %arg7[%c0_9, %c0_10] : memref<80x512xf32, #tpu.memory_space<vmem>>, vector<8x512xf32>
    tpu.vector_store %arg7[%c0_9, %c0_10], %14 {strides = array<i32>} : memref<80x512xf32, #tpu.memory_space<vmem>>, vector<8x512xf32>,
    %c16_i32 = arith.constant 16 : i32
    %16 = tpu.dynamic_rotate %8 by %c16_i32 dim 1 : vector<8x512xf32>, i32 -> vector<8x512xf32>
    %c1 = arith.constant 1 : index
    %c0_11 = arith.constant 0 : index
    %17 = vector.load %arg2[%c1, %c0_11] : memref<8x512xf32, #tpu.memory_space<vmem>>, vector<1x512xf32>
    %18 = vector.broadcast %17 : vector<1x512xf32> to vector<8x512xf32>
    %19 = arith.mulf %16, %18 : vector<8x512xf32>
    %c8 = arith.constant 8 : index
    %c0_12 = arith.constant 0 : index
    %20 = vector.load %arg7[%c8, %c0_12] : memref<80x512xf32, #tpu.memory_space<vmem>>, vector<8x512xf32>
    tpu.vector_store %arg7[%c8, %c0_12], %19 {strides = array<i32>} : memref<80x512xf32, #tpu.memory_space<vmem>>, vector<8x512xf32>,
    %c15_i32 = arith.constant 15 : i32
    %21 = tpu.dynamic_rotate %8 by %c15_i32 dim 1 : vector<8x512xf32>, i32 -> vector<8x512xf32>
    %c2 = arith.constant 2 : index
    %c0_13 = arith.constant 0 : index
    %22 = vector.load %arg2[%c2, %c0_13] : memref<8x512xf32, #tpu.memory_space<vmem>>, vector<1x512xf32>
    %23 = vector.broadcast %22 : vector<1x512xf32> to vector<8x512xf32>
    %24 = arith.mulf %21, %23 : vector<8x512xf32>
    %c16 = arith.constant 16 : index
    %c0_14 = arith.constant 0 : index
    %25 = vector.load %arg7[%c16, %c0_14] : memref<80x512xf32, #tpu.memory_space<vmem>>, vector<8x512xf32>
    tpu.vector_store %arg7[%c16, %c0_14], %24 {strides = array<i32>} : memref<80x512xf32, #tpu.memory_space<vmem>>, vector<8x512xf32>,
    %c1_i32 = arith.constant 1 : i32
    %26 = tpu.dynamic_rotate %8 by %c1_i32 dim 1 : vector<8x512xf32>, i32 -> vector<8x512xf32>
    %c3 = arith.constant 3 : index
    %c0_15 = arith.constant 0 : index
    %27 = vector.load %arg2[%c3, %c0_15] : memref<8x512xf32, #tpu.memory_space<vmem>>, vector<1x512xf32>
    %28 = vector.broadcast %27 : vector<1x512xf32> to vector<8x512xf32>
    %29 = arith.mulf %26, %28 : vector<8x512xf32>
    %c24 = arith.constant 24 : index
    %c0_16 = arith.constant 0 : index
    %30 = vector.load %arg7[%c24, %c0_16] : memref<80x512xf32, #tpu.memory_space<vmem>>, vector<8x512xf32>
    tpu.vector_store %arg7[%c24, %c0_16], %29 {strides = array<i32>} : memref<80x512xf32, #tpu.memory_space<vmem>>, vector<8x512xf32>,
    %c32 = arith.constant 32 : index
    %c0_17 = arith.constant 0 : index
    %31 = vector.load %arg7[%c32, %c0_17] : memref<80x512xf32, #tpu.memory_space<vmem>>, vector<8x512xf32>
    tpu.vector_store %arg7[%c32, %c0_17], %8 {strides = array<i32>} : memref<80x512xf32, #tpu.memory_space<vmem>>, vector<8x512xf32>,
    %c511_i32 = arith.constant 511 : i32
    %32 = tpu.dynamic_rotate %8 by %c511_i32 dim 1 : vector<8x512xf32>, i32 -> vector<8x512xf32>
    %c4 = arith.constant 4 : index
    %c0_18 = arith.constant 0 : index
    %33 = vector.load %arg2[%c4, %c0_18] : memref<8x512xf32, #tpu.memory_space<vmem>>, vector<1x512xf32>
    %34 = vector.broadcast %33 : vector<1x512xf32> to vector<8x512xf32>
    %35 = arith.mulf %32, %34 : vector<8x512xf32>
    %c40 = arith.constant 40 : index
    %c0_19 = arith.constant 0 : index
    %36 = vector.load %arg7[%c40, %c0_19] : memref<80x512xf32, #tpu.memory_space<vmem>>, vector<8x512xf32>
    tpu.vector_store %arg7[%c40, %c0_19], %35 {strides = array<i32>} : memref<80x512xf32, #tpu.memory_space<vmem>>, vector<8x512xf32>,
    %c497_i32 = arith.constant 497 : i32
    %37 = tpu.dynamic_rotate %8 by %c497_i32 dim 1 : vector<8x512xf32>, i32 -> vector<8x512xf32>
    %c5 = arith.constant 5 : index
    %c0_20 = arith.constant 0 : index
    %38 = vector.load %arg2[%c5, %c0_20] : memref<8x512xf32, #tpu.memory_space<vmem>>, vector<1x512xf32>
    %39 = vector.broadcast %38 : vector<1x512xf32> to vector<8x512xf32>
    %40 = arith.mulf %37, %39 : vector<8x512xf32>
    %c48 = arith.constant 48 : index
    %c0_21 = arith.constant 0 : index
    %41 = vector.load %arg7[%c48, %c0_21] : memref<80x512xf32, #tpu.memory_space<vmem>>, vector<8x512xf32>
    tpu.vector_store %arg7[%c48, %c0_21], %40 {strides = array<i32>} : memref<80x512xf32, #tpu.memory_space<vmem>>, vector<8x512xf32>,
    %c496_i32 = arith.constant 496 : i32
    %42 = tpu.dynamic_rotate %8 by %c496_i32 dim 1 : vector<8x512xf32>, i32 -> vector<8x512xf32>
    %c6 = arith.constant 6 : index
    %c0_22 = arith.constant 0 : index
    %43 = vector.load %arg2[%c6, %c0_22] : memref<8x512xf32, #tpu.memory_space<vmem>>, vector<1x512xf32>
    %44 = vector.broadcast %43 : vector<1x512xf32> to vector<8x512xf32>
    %45 = arith.mulf %42, %44 : vector<8x512xf32>
    %c56 = arith.constant 56 : index
    %c0_23 = arith.constant 0 : index
    %46 = vector.load %arg7[%c56, %c0_23] : memref<80x512xf32, #tpu.memory_space<vmem>>, vector<8x512xf32>
    tpu.vector_store %arg7[%c56, %c0_23], %45 {strides = array<i32>} : memref<80x512xf32, #tpu.memory_space<vmem>>, vector<8x512xf32>,
    %c495_i32 = arith.constant 495 : i32
    %47 = tpu.dynamic_rotate %8 by %c495_i32 dim 1 : vector<8x512xf32>, i32 -> vector<8x512xf32>
    %c7 = arith.constant 7 : index
    %c0_24 = arith.constant 0 : index
    %48 = vector.load %arg2[%c7, %c0_24] : memref<8x512xf32, #tpu.memory_space<vmem>>, vector<1x512xf32>
    %49 = vector.broadcast %48 : vector<1x512xf32> to vector<8x512xf32>
    %50 = arith.mulf %47, %49 : vector<8x512xf32>
    %c64 = arith.constant 64 : index
    %c0_25 = arith.constant 0 : index
    %51 = vector.load %arg7[%c64, %c0_25] : memref<80x512xf32, #tpu.memory_space<vmem>>, vector<8x512xf32>
    tpu.vector_store %arg7[%c64, %c0_25], %50 {strides = array<i32>} : memref<80x512xf32, #tpu.memory_space<vmem>>, vector<8x512xf32>,
    %c0_26 = arith.constant 0 : index
    %c0_27 = arith.constant 0 : index
    %52 = vector.load %arg7[%c0_26, %c0_27] : memref<80x512xf32, #tpu.memory_space<vmem>>, vector<80x512xf32>
    %cst_28 = arith.constant dense<0.000000e+00> : vector<8x512xf32>
    %53 = tpu.matmul %10, %52, %cst_28 {dimension_numbers = #tpu.dot_dimension_numbers<[1], [0], [0], [1], [0, 0, 1, 1], [], []>} : vector<8x80xf32>, vector<80x512xf32>, vector<8x512xf32> -> vector<8x512xf32>
    %cst_29 = arith.constant 0.000000e+00 : f32
    %54 = vector.broadcast %cst_29 : f32 to vector<8x512xf32>
    %55 = arith.maximumf %53, %54 : vector<8x512xf32>
    %c0_30 = arith.constant 0 : index
    %c0_31 = arith.constant 0 : index
    %c0_32 = arith.constant 0 : index
    %56 = vector.load %arg4[%c0_30, %c0_31, %c0_32] : memref<2x8x80xf32, #tpu.memory_space<vmem>>, vector<1x8x80xf32>
    %57 = vector.shape_cast %56 : vector<1x8x80xf32> to vector<8x80xf32>
    %c17_i32_33 = arith.constant 17 : i32
    %58 = tpu.dynamic_rotate %55 by %c17_i32_33 dim 1 : vector<8x512xf32>, i32 -> vector<8x512xf32>
    %c0_34 = arith.constant 0 : index
    %c0_35 = arith.constant 0 : index
    %59 = vector.load %arg2[%c0_34, %c0_35] : memref<8x512xf32, #tpu.memory_space<vmem>>, vector<1x512xf32>
    %60 = vector.broadcast %59 : vector<1x512xf32> to vector<8x512xf32>
    %61 = arith.mulf %58, %60 : vector<8x512xf32>
    %c0_36 = arith.constant 0 : index
    %c0_37 = arith.constant 0 : index
    %62 = vector.load %arg7[%c0_36, %c0_37] : memref<80x512xf32, #tpu.memory_space<vmem>>, vector<8x512xf32>
    tpu.vector_store %arg7[%c0_36, %c0_37], %61 {strides = array<i32>} : memref<80x512xf32, #tpu.memory_space<vmem>>, vector<8x512xf32>,
    %c16_i32_38 = arith.constant 16 : i32
    %63 = tpu.dynamic_rotate %55 by %c16_i32_38 dim 1 : vector<8x512xf32>, i32 -> vector<8x512xf32>
    %c1_39 = arith.constant 1 : index
    %c0_40 = arith.constant 0 : index
    %64 = vector.load %arg2[%c1_39, %c0_40] : memref<8x512xf32, #tpu.memory_space<vmem>>, vector<1x512xf32>
    %65 = vector.broadcast %64 : vector<1x512xf32> to vector<8x512xf32>
    %66 = arith.mulf %63, %65 : vector<8x512xf32>
    %c8_41 = arith.constant 8 : index
    %c0_42 = arith.constant 0 : index
    %67 = vector.load %arg7[%c8_41, %c0_42] : memref<80x512xf32, #tpu.memory_space<vmem>>, vector<8x512xf32>
    tpu.vector_store %arg7[%c8_41, %c0_42], %66 {strides = array<i32>} : memref<80x512xf32, #tpu.memory_space<vmem>>, vector<8x512xf32>,
    %c15_i32_43 = arith.constant 15 : i32
    %68 = tpu.dynamic_rotate %55 by %c15_i32_43 dim 1 : vector<8x512xf32>, i32 -> vector<8x512xf32>
    %c2_44 = arith.constant 2 : index
    %c0_45 = arith.constant 0 : index
    %69 = vector.load %arg2[%c2_44, %c0_45] : memref<8x512xf32, #tpu.memory_space<vmem>>, vector<1x512xf32>
    %70 = vector.broadcast %69 : vector<1x512xf32> to vector<8x512xf32>
    %71 = arith.mulf %68, %70 : vector<8x512xf32>
    %c16_46 = arith.constant 16 : index
    %c0_47 = arith.constant 0 : index
    %72 = vector.load %arg7[%c16_46, %c0_47] : memref<80x512xf32, #tpu.memory_space<vmem>>, vector<8x512xf32>
    tpu.vector_store %arg7[%c16_46, %c0_47], %71 {strides = array<i32>} : memref<80x512xf32, #tpu.memory_space<vmem>>, vector<8x512xf32>,
    %c1_i32_48 = arith.constant 1 : i32
    %73 = tpu.dynamic_rotate %55 by %c1_i32_48 dim 1 : vector<8x512xf32>, i32 -> vector<8x512xf32>
    %c3_49 = arith.constant 3 : index
    %c0_50 = arith.constant 0 : index
    %74 = vector.load %arg2[%c3_49, %c0_50] : memref<8x512xf32, #tpu.memory_space<vmem>>, vector<1x512xf32>
    %75 = vector.broadcast %74 : vector<1x512xf32> to vector<8x512xf32>
    %76 = arith.mulf %73, %75 : vector<8x512xf32>
    %c24_51 = arith.constant 24 : index
    %c0_52 = arith.constant 0 : index
    %77 = vector.load %arg7[%c24_51, %c0_52] : memref<80x512xf32, #tpu.memory_space<vmem>>, vector<8x512xf32>
    tpu.vector_store %arg7[%c24_51, %c0_52], %76 {strides = array<i32>} : memref<80x512xf32, #tpu.memory_space<vmem>>, vector<8x512xf32>,
    %c32_53 = arith.constant 32 : index
    %c0_54 = arith.constant 0 : index
    %78 = vector.load %arg7[%c32_53, %c0_54] : memref<80x512xf32, #tpu.memory_space<vmem>>, vector<8x512xf32>
    tpu.vector_store %arg7[%c32_53, %c0_54], %55 {strides = array<i32>} : memref<80x512xf32, #tpu.memory_space<vmem>>, vector<8x512xf32>,
    %c511_i32_55 = arith.constant 511 : i32
    %79 = tpu.dynamic_rotate %55 by %c511_i32_55 dim 1 : vector<8x512xf32>, i32 -> vector<8x512xf32>
    %c4_56 = arith.constant 4 : index
    %c0_57 = arith.constant 0 : index
    %80 = vector.load %arg2[%c4_56, %c0_57] : memref<8x512xf32, #tpu.memory_space<vmem>>, vector<1x512xf32>
    %81 = vector.broadcast %80 : vector<1x512xf32> to vector<8x512xf32>
    %82 = arith.mulf %79, %81 : vector<8x512xf32>
    %c40_58 = arith.constant 40 : index
    %c0_59 = arith.constant 0 : index
    %83 = vector.load %arg7[%c40_58, %c0_59] : memref<80x512xf32, #tpu.memory_space<vmem>>, vector<8x512xf32>
    tpu.vector_store %arg7[%c40_58, %c0_59], %82 {strides = array<i32>} : memref<80x512xf32, #tpu.memory_space<vmem>>, vector<8x512xf32>,
    %c497_i32_60 = arith.constant 497 : i32
    %84 = tpu.dynamic_rotate %55 by %c497_i32_60 dim 1 : vector<8x512xf32>, i32 -> vector<8x512xf32>
    %c5_61 = arith.constant 5 : index
    %c0_62 = arith.constant 0 : index
    %85 = vector.load %arg2[%c5_61, %c0_62] : memref<8x512xf32, #tpu.memory_space<vmem>>, vector<1x512xf32>
    %86 = vector.broadcast %85 : vector<1x512xf32> to vector<8x512xf32>
    %87 = arith.mulf %84, %86 : vector<8x512xf32>
    %c48_63 = arith.constant 48 : index
    %c0_64 = arith.constant 0 : index
    %88 = vector.load %arg7[%c48_63, %c0_64] : memref<80x512xf32, #tpu.memory_space<vmem>>, vector<8x512xf32>
    tpu.vector_store %arg7[%c48_63, %c0_64], %87 {strides = array<i32>} : memref<80x512xf32, #tpu.memory_space<vmem>>, vector<8x512xf32>,
    %c496_i32_65 = arith.constant 496 : i32
    %89 = tpu.dynamic_rotate %55 by %c496_i32_65 dim 1 : vector<8x512xf32>, i32 -> vector<8x512xf32>
    %c6_66 = arith.constant 6 : index
    %c0_67 = arith.constant 0 : index
    %90 = vector.load %arg2[%c6_66, %c0_67] : memref<8x512xf32, #tpu.memory_space<vmem>>, vector<1x512xf32>
    %91 = vector.broadcast %90 : vector<1x512xf32> to vector<8x512xf32>
    %92 = arith.mulf %89, %91 : vector<8x512xf32>
    %c56_68 = arith.constant 56 : index
    %c0_69 = arith.constant 0 : index
    %93 = vector.load %arg7[%c56_68, %c0_69] : memref<80x512xf32, #tpu.memory_space<vmem>>, vector<8x512xf32>
    tpu.vector_store %arg7[%c56_68, %c0_69], %92 {strides = array<i32>} : memref<80x512xf32, #tpu.memory_space<vmem>>, vector<8x512xf32>,
    %c495_i32_70 = arith.constant 495 : i32
    %94 = tpu.dynamic_rotate %55 by %c495_i32_70 dim 1 : vector<8x512xf32>, i32 -> vector<8x512xf32>
    %c7_71 = arith.constant 7 : index
    %c0_72 = arith.constant 0 : index
    %95 = vector.load %arg2[%c7_71, %c0_72] : memref<8x512xf32, #tpu.memory_space<vmem>>, vector<1x512xf32>
    %96 = vector.broadcast %95 : vector<1x512xf32> to vector<8x512xf32>
    %97 = arith.mulf %94, %96 : vector<8x512xf32>
    %c64_73 = arith.constant 64 : index
    %c0_74 = arith.constant 0 : index
    %98 = vector.load %arg7[%c64_73, %c0_74] : memref<80x512xf32, #tpu.memory_space<vmem>>, vector<8x512xf32>
    tpu.vector_store %arg7[%c64_73, %c0_74], %97 {strides = array<i32>} : memref<80x512xf32, #tpu.memory_space<vmem>>, vector<8x512xf32>,
    %c0_75 = arith.constant 0 : index
    %c0_76 = arith.constant 0 : index
    %99 = vector.load %arg7[%c0_75, %c0_76] : memref<80x512xf32, #tpu.memory_space<vmem>>, vector<80x512xf32>
    %cst_77 = arith.constant dense<0.000000e+00> : vector<8x512xf32>
    %100 = tpu.matmul %57, %99, %cst_77 {dimension_numbers = #tpu.dot_dimension_numbers<[1], [0], [0], [1], [0, 0, 1, 1], [], []>} : vector<8x80xf32>, vector<80x512xf32>, vector<8x512xf32> -> vector<8x512xf32>
    %101 = arith.addf %100, %8 : vector<8x512xf32>
    %cst_78 = arith.constant 0.000000e+00 : f32
    %102 = vector.broadcast %cst_78 : f32 to vector<8x512xf32>
    %103 = arith.maximumf %101, %102 : vector<8x512xf32>
    %c1_79 = arith.constant 1 : index
    %c0_80 = arith.constant 0 : index
    %c0_81 = arith.constant 0 : index
    %104 = vector.load %arg3[%c1_79, %c0_80, %c0_81] : memref<2x8x80xf32, #tpu.memory_space<vmem>>, vector<1x8x80xf32>
    %105 = vector.shape_cast %104 : vector<1x8x80xf32> to vector<8x80xf32>
    %c17_i32_82 = arith.constant 17 : i32
    %106 = tpu.dynamic_rotate %103 by %c17_i32_82 dim 1 : vector<8x512xf32>, i32 -> vector<8x512xf32>
    %c0_83 = arith.constant 0 : index
    %c0_84 = arith.constant 0 : index
    %107 = vector.load %arg2[%c0_83, %c0_84] : memref<8x512xf32, #tpu.memory_space<vmem>>, vector<1x512xf32>
    %108 = vector.broadcast %107 : vector<1x512xf32> to vector<8x512xf32>
    %109 = arith.mulf %106, %108 : vector<8x512xf32>
    %c0_85 = arith.constant 0 : index
    %c0_86 = arith.constant 0 : index
    %110 = vector.load %arg7[%c0_85, %c0_86] : memref<80x512xf32, #tpu.memory_space<vmem>>, vector<8x512xf32>
    tpu.vector_store %arg7[%c0_85, %c0_86], %109 {strides = array<i32>} : memref<80x512xf32, #tpu.memory_space<vmem>>, vector<8x512xf32>,
    %c16_i32_87 = arith.constant 16 : i32
    %111 = tpu.dynamic_rotate %103 by %c16_i32_87 dim 1 : vector<8x512xf32>, i32 -> vector<8x512xf32>
    %c1_88 = arith.constant 1 : index
    %c0_89 = arith.constant 0 : index
    %112 = vector.load %arg2[%c1_88, %c0_89] : memref<8x512xf32, #tpu.memory_space<vmem>>, vector<1x512xf32>
    %113 = vector.broadcast %112 : vector<1x512xf32> to vector<8x512xf32>
    %114 = arith.mulf %111, %113 : vector<8x512xf32>
    %c8_90 = arith.constant 8 : index
    %c0_91 = arith.constant 0 : index
    %115 = vector.load %arg7[%c8_90, %c0_91] : memref<80x512xf32, #tpu.memory_space<vmem>>, vector<8x512xf32>
    tpu.vector_store %arg7[%c8_90, %c0_91], %114 {strides = array<i32>} : memref<80x512xf32, #tpu.memory_space<vmem>>, vector<8x512xf32>,
    %c15_i32_92 = arith.constant 15 : i32
    %116 = tpu.dynamic_rotate %103 by %c15_i32_92 dim 1 : vector<8x512xf32>, i32 -> vector<8x512xf32>
    %c2_93 = arith.constant 2 : index
    %c0_94 = arith.constant 0 : index
    %117 = vector.load %arg2[%c2_93, %c0_94] : memref<8x512xf32, #tpu.memory_space<vmem>>, vector<1x512xf32>
    %118 = vector.broadcast %117 : vector<1x512xf32> to vector<8x512xf32>
    %119 = arith.mulf %116, %118 : vector<8x512xf32>
    %c16_95 = arith.constant 16 : index
    %c0_96 = arith.constant 0 : index
    %120 = vector.load %arg7[%c16_95, %c0_96] : memref<80x512xf32, #tpu.memory_space<vmem>>, vector<8x512xf32>
    tpu.vector_store %arg7[%c16_95, %c0_96], %119 {strides = array<i32>} : memref<80x512xf32, #tpu.memory_space<vmem>>, vector<8x512xf32>,
    %c1_i32_97 = arith.constant 1 : i32
    %121 = tpu.dynamic_rotate %103 by %c1_i32_97 dim 1 : vector<8x512xf32>, i32 -> vector<8x512xf32>
    %c3_98 = arith.constant 3 : index
    %c0_99 = arith.constant 0 : index
    %122 = vector.load %arg2[%c3_98, %c0_99] : memref<8x512xf32, #tpu.memory_space<vmem>>, vector<1x512xf32>
    %123 = vector.broadcast %122 : vector<1x512xf32> to vector<8x512xf32>
    %124 = arith.mulf %121, %123 : vector<8x512xf32>
    %c24_100 = arith.constant 24 : index
    %c0_101 = arith.constant 0 : index
    %125 = vector.load %arg7[%c24_100, %c0_101] : memref<80x512xf32, #tpu.memory_space<vmem>>, vector<8x512xf32>
    tpu.vector_store %arg7[%c24_100, %c0_101], %124 {strides = array<i32>} : memref<80x512xf32, #tpu.memory_space<vmem>>, vector<8x512xf32>,
    %c32_102 = arith.constant 32 : index
    %c0_103 = arith.constant 0 : index
    %126 = vector.load %arg7[%c32_102, %c0_103] : memref<80x512xf32, #tpu.memory_space<vmem>>, vector<8x512xf32>
    tpu.vector_store %arg7[%c32_102, %c0_103], %103 {strides = array<i32>} : memref<80x512xf32, #tpu.memory_space<vmem>>, vector<8x512xf32>,
    %c511_i32_104 = arith.constant 511 : i32
    %127 = tpu.dynamic_rotate %103 by %c511_i32_104 dim 1 : vector<8x512xf32>, i32 -> vector<8x512xf32>
    %c4_105 = arith.constant 4 : index
    %c0_106 = arith.constant 0 : index
    %128 = vector.load %arg2[%c4_105, %c0_106] : memref<8x512xf32, #tpu.memory_space<vmem>>, vector<1x512xf32>
    %129 = vector.broadcast %128 : vector<1x512xf32> to vector<8x512xf32>
    %130 = arith.mulf %127, %129 : vector<8x512xf32>
    %c40_107 = arith.constant 40 : index
    %c0_108 = arith.constant 0 : index
    %131 = vector.load %arg7[%c40_107, %c0_108] : memref<80x512xf32, #tpu.memory_space<vmem>>, vector<8x512xf32>
    tpu.vector_store %arg7[%c40_107, %c0_108], %130 {strides = array<i32>} : memref<80x512xf32, #tpu.memory_space<vmem>>, vector<8x512xf32>,
    %c497_i32_109 = arith.constant 497 : i32
    %132 = tpu.dynamic_rotate %103 by %c497_i32_109 dim 1 : vector<8x512xf32>, i32 -> vector<8x512xf32>
    %c5_110 = arith.constant 5 : index
    %c0_111 = arith.constant 0 : index
    %133 = vector.load %arg2[%c5_110, %c0_111] : memref<8x512xf32, #tpu.memory_space<vmem>>, vector<1x512xf32>
    %134 = vector.broadcast %133 : vector<1x512xf32> to vector<8x512xf32>
    %135 = arith.mulf %132, %134 : vector<8x512xf32>
    %c48_112 = arith.constant 48 : index
    %c0_113 = arith.constant 0 : index
    %136 = vector.load %arg7[%c48_112, %c0_113] : memref<80x512xf32, #tpu.memory_space<vmem>>, vector<8x512xf32>
    tpu.vector_store %arg7[%c48_112, %c0_113], %135 {strides = array<i32>} : memref<80x512xf32, #tpu.memory_space<vmem>>, vector<8x512xf32>,
    %c496_i32_114 = arith.constant 496 : i32
    %137 = tpu.dynamic_rotate %103 by %c496_i32_114 dim 1 : vector<8x512xf32>, i32 -> vector<8x512xf32>
    %c6_115 = arith.constant 6 : index
    %c0_116 = arith.constant 0 : index
    %138 = vector.load %arg2[%c6_115, %c0_116] : memref<8x512xf32, #tpu.memory_space<vmem>>, vector<1x512xf32>
    %139 = vector.broadcast %138 : vector<1x512xf32> to vector<8x512xf32>
    %140 = arith.mulf %137, %139 : vector<8x512xf32>
    %c56_117 = arith.constant 56 : index
    %c0_118 = arith.constant 0 : index
    %141 = vector.load %arg7[%c56_117, %c0_118] : memref<80x512xf32, #tpu.memory_space<vmem>>, vector<8x512xf32>
    tpu.vector_store %arg7[%c56_117, %c0_118], %140 {strides = array<i32>} : memref<80x512xf32, #tpu.memory_space<vmem>>, vector<8x512xf32>,
    %c495_i32_119 = arith.constant 495 : i32
    %142 = tpu.dynamic_rotate %103 by %c495_i32_119 dim 1 : vector<8x512xf32>, i32 -> vector<8x512xf32>
    %c7_120 = arith.constant 7 : index
    %c0_121 = arith.constant 0 : index
    %143 = vector.load %arg2[%c7_120, %c0_121] : memref<8x512xf32, #tpu.memory_space<vmem>>, vector<1x512xf32>
    %144 = vector.broadcast %143 : vector<1x512xf32> to vector<8x512xf32>
    %145 = arith.mulf %142, %144 : vector<8x512xf32>
    %c64_122 = arith.constant 64 : index
    %c0_123 = arith.constant 0 : index
    %146 = vector.load %arg7[%c64_122, %c0_123] : memref<80x512xf32, #tpu.memory_space<vmem>>, vector<8x512xf32>
    tpu.vector_store %arg7[%c64_122, %c0_123], %145 {strides = array<i32>} : memref<80x512xf32, #tpu.memory_space<vmem>>, vector<8x512xf32>,
    %c0_124 = arith.constant 0 : index
    %c0_125 = arith.constant 0 : index
    %147 = vector.load %arg7[%c0_124, %c0_125] : memref<80x512xf32, #tpu.memory_space<vmem>>, vector<80x512xf32>
    %cst_126 = arith.constant dense<0.000000e+00> : vector<8x512xf32>
    %148 = tpu.matmul %105, %147, %cst_126 {dimension_numbers = #tpu.dot_dimension_numbers<[1], [0], [0], [1], [0, 0, 1, 1], [], []>} : vector<8x80xf32>, vector<80x512xf32>, vector<8x512xf32> -> vector<8x512xf32>
    %cst_127 = arith.constant 0.000000e+00 : f32
    %149 = vector.broadcast %cst_127 : f32 to vector<8x512xf32>
    %150 = arith.maximumf %148, %149 : vector<8x512xf32>
    %c1_128 = arith.constant 1 : index
    %c0_129 = arith.constant 0 : index
    %c0_130 = arith.constant 0 : index
    %151 = vector.load %arg4[%c1_128, %c0_129, %c0_130] : memref<2x8x80xf32, #tpu.memory_space<vmem>>, vector<1x8x80xf32>
    %152 = vector.shape_cast %151 : vector<1x8x80xf32> to vector<8x80xf32>
    %c17_i32_131 = arith.constant 17 : i32
    %153 = tpu.dynamic_rotate %150 by %c17_i32_131 dim 1 : vector<8x512xf32>, i32 -> vector<8x512xf32>
    %c0_132 = arith.constant 0 : index
    %c0_133 = arith.constant 0 : index
    %154 = vector.load %arg2[%c0_132, %c0_133] : memref<8x512xf32, #tpu.memory_space<vmem>>, vector<1x512xf32>
    %155 = vector.broadcast %154 : vector<1x512xf32> to vector<8x512xf32>
    %156 = arith.mulf %153, %155 : vector<8x512xf32>
    %c0_134 = arith.constant 0 : index
    %c0_135 = arith.constant 0 : index
    %157 = vector.load %arg7[%c0_134, %c0_135] : memref<80x512xf32, #tpu.memory_space<vmem>>, vector<8x512xf32>
    tpu.vector_store %arg7[%c0_134, %c0_135], %156 {strides = array<i32>} : memref<80x512xf32, #tpu.memory_space<vmem>>, vector<8x512xf32>,
    %c16_i32_136 = arith.constant 16 : i32
    %158 = tpu.dynamic_rotate %150 by %c16_i32_136 dim 1 : vector<8x512xf32>, i32 -> vector<8x512xf32>
    %c1_137 = arith.constant 1 : index
    %c0_138 = arith.constant 0 : index
    %159 = vector.load %arg2[%c1_137, %c0_138] : memref<8x512xf32, #tpu.memory_space<vmem>>, vector<1x512xf32>
    %160 = vector.broadcast %159 : vector<1x512xf32> to vector<8x512xf32>
    %161 = arith.mulf %158, %160 : vector<8x512xf32>
    %c8_139 = arith.constant 8 : index
    %c0_140 = arith.constant 0 : index
    %162 = vector.load %arg7[%c8_139, %c0_140] : memref<80x512xf32, #tpu.memory_space<vmem>>, vector<8x512xf32>
    tpu.vector_store %arg7[%c8_139, %c0_140], %161 {strides = array<i32>} : memref<80x512xf32, #tpu.memory_space<vmem>>, vector<8x512xf32>,
    %c15_i32_141 = arith.constant 15 : i32
    %163 = tpu.dynamic_rotate %150 by %c15_i32_141 dim 1 : vector<8x512xf32>, i32 -> vector<8x512xf32>
    %c2_142 = arith.constant 2 : index
    %c0_143 = arith.constant 0 : index
    %164 = vector.load %arg2[%c2_142, %c0_143] : memref<8x512xf32, #tpu.memory_space<vmem>>, vector<1x512xf32>
    %165 = vector.broadcast %164 : vector<1x512xf32> to vector<8x512xf32>
    %166 = arith.mulf %163, %165 : vector<8x512xf32>
    %c16_144 = arith.constant 16 : index
    %c0_145 = arith.constant 0 : index
    %167 = vector.load %arg7[%c16_144, %c0_145] : memref<80x512xf32, #tpu.memory_space<vmem>>, vector<8x512xf32>
    tpu.vector_store %arg7[%c16_144, %c0_145], %166 {strides = array<i32>} : memref<80x512xf32, #tpu.memory_space<vmem>>, vector<8x512xf32>,
    %c1_i32_146 = arith.constant 1 : i32
    %168 = tpu.dynamic_rotate %150 by %c1_i32_146 dim 1 : vector<8x512xf32>, i32 -> vector<8x512xf32>
    %c3_147 = arith.constant 3 : index
    %c0_148 = arith.constant 0 : index
    %169 = vector.load %arg2[%c3_147, %c0_148] : memref<8x512xf32, #tpu.memory_space<vmem>>, vector<1x512xf32>
    %170 = vector.broadcast %169 : vector<1x512xf32> to vector<8x512xf32>
    %171 = arith.mulf %168, %170 : vector<8x512xf32>
    %c24_149 = arith.constant 24 : index
    %c0_150 = arith.constant 0 : index
    %172 = vector.load %arg7[%c24_149, %c0_150] : memref<80x512xf32, #tpu.memory_space<vmem>>, vector<8x512xf32>
    tpu.vector_store %arg7[%c24_149, %c0_150], %171 {strides = array<i32>} : memref<80x512xf32, #tpu.memory_space<vmem>>, vector<8x512xf32>,
    %c32_151 = arith.constant 32 : index
    %c0_152 = arith.constant 0 : index
    %173 = vector.load %arg7[%c32_151, %c0_152] : memref<80x512xf32, #tpu.memory_space<vmem>>, vector<8x512xf32>
    tpu.vector_store %arg7[%c32_151, %c0_152], %150 {strides = array<i32>} : memref<80x512xf32, #tpu.memory_space<vmem>>, vector<8x512xf32>,
    %c511_i32_153 = arith.constant 511 : i32
    %174 = tpu.dynamic_rotate %150 by %c511_i32_153 dim 1 : vector<8x512xf32>, i32 -> vector<8x512xf32>
    %c4_154 = arith.constant 4 : index
    %c0_155 = arith.constant 0 : index
    %175 = vector.load %arg2[%c4_154, %c0_155] : memref<8x512xf32, #tpu.memory_space<vmem>>, vector<1x512xf32>
    %176 = vector.broadcast %175 : vector<1x512xf32> to vector<8x512xf32>
    %177 = arith.mulf %174, %176 : vector<8x512xf32>
    %c40_156 = arith.constant 40 : index
    %c0_157 = arith.constant 0 : index
    %178 = vector.load %arg7[%c40_156, %c0_157] : memref<80x512xf32, #tpu.memory_space<vmem>>, vector<8x512xf32>
    tpu.vector_store %arg7[%c40_156, %c0_157], %177 {strides = array<i32>} : memref<80x512xf32, #tpu.memory_space<vmem>>, vector<8x512xf32>,
    %c497_i32_158 = arith.constant 497 : i32
    %179 = tpu.dynamic_rotate %150 by %c497_i32_158 dim 1 : vector<8x512xf32>, i32 -> vector<8x512xf32>
    %c5_159 = arith.constant 5 : index
    %c0_160 = arith.constant 0 : index
    %180 = vector.load %arg2[%c5_159, %c0_160] : memref<8x512xf32, #tpu.memory_space<vmem>>, vector<1x512xf32>
    %181 = vector.broadcast %180 : vector<1x512xf32> to vector<8x512xf32>
    %182 = arith.mulf %179, %181 : vector<8x512xf32>
    %c48_161 = arith.constant 48 : index
    %c0_162 = arith.constant 0 : index
    %183 = vector.load %arg7[%c48_161, %c0_162] : memref<80x512xf32, #tpu.memory_space<vmem>>, vector<8x512xf32>
    tpu.vector_store %arg7[%c48_161, %c0_162], %182 {strides = array<i32>} : memref<80x512xf32, #tpu.memory_space<vmem>>, vector<8x512xf32>,
    %c496_i32_163 = arith.constant 496 : i32
    %184 = tpu.dynamic_rotate %150 by %c496_i32_163 dim 1 : vector<8x512xf32>, i32 -> vector<8x512xf32>
    %c6_164 = arith.constant 6 : index
    %c0_165 = arith.constant 0 : index
    %185 = vector.load %arg2[%c6_164, %c0_165] : memref<8x512xf32, #tpu.memory_space<vmem>>, vector<1x512xf32>
    %186 = vector.broadcast %185 : vector<1x512xf32> to vector<8x512xf32>
    %187 = arith.mulf %184, %186 : vector<8x512xf32>
    %c56_166 = arith.constant 56 : index
    %c0_167 = arith.constant 0 : index
    %188 = vector.load %arg7[%c56_166, %c0_167] : memref<80x512xf32, #tpu.memory_space<vmem>>, vector<8x512xf32>
    tpu.vector_store %arg7[%c56_166, %c0_167], %187 {strides = array<i32>} : memref<80x512xf32, #tpu.memory_space<vmem>>, vector<8x512xf32>,
    %c495_i32_168 = arith.constant 495 : i32
    %189 = tpu.dynamic_rotate %150 by %c495_i32_168 dim 1 : vector<8x512xf32>, i32 -> vector<8x512xf32>
    %c7_169 = arith.constant 7 : index
    %c0_170 = arith.constant 0 : index
    %190 = vector.load %arg2[%c7_169, %c0_170] : memref<8x512xf32, #tpu.memory_space<vmem>>, vector<1x512xf32>
    %191 = vector.broadcast %190 : vector<1x512xf32> to vector<8x512xf32>
    %192 = arith.mulf %189, %191 : vector<8x512xf32>
    %c64_171 = arith.constant 64 : index
    %c0_172 = arith.constant 0 : index
    %193 = vector.load %arg7[%c64_171, %c0_172] : memref<80x512xf32, #tpu.memory_space<vmem>>, vector<8x512xf32>
    tpu.vector_store %arg7[%c64_171, %c0_172], %192 {strides = array<i32>} : memref<80x512xf32, #tpu.memory_space<vmem>>, vector<8x512xf32>,
    %c0_173 = arith.constant 0 : index
    %c0_174 = arith.constant 0 : index
    %194 = vector.load %arg7[%c0_173, %c0_174] : memref<80x512xf32, #tpu.memory_space<vmem>>, vector<80x512xf32>
    %cst_175 = arith.constant dense<0.000000e+00> : vector<8x512xf32>
    %195 = tpu.matmul %152, %194, %cst_175 {dimension_numbers = #tpu.dot_dimension_numbers<[1], [0], [0], [1], [0, 0, 1, 1], [], []>} : vector<8x80xf32>, vector<80x512xf32>, vector<8x512xf32> -> vector<8x512xf32>
    %196 = arith.addf %195, %103 : vector<8x512xf32>
    %cst_176 = arith.constant 0.000000e+00 : f32
    %197 = vector.broadcast %cst_176 : f32 to vector<8x512xf32>
    %198 = arith.maximumf %196, %197 : vector<8x512xf32>
    %c0_177 = arith.constant 0 : index
    %199 = memref.load %arg5[%c0_177] : memref<1xf32, #tpu.memory_space<smem>>
    %200 = vector.broadcast %199 : f32 to vector<8x512xf32>
    %201 = arith.subf %198, %200 : vector<8x512xf32>
    %cst_178 = arith.constant 0.000000e+00 : f32
    %202 = vector.broadcast %cst_178 : f32 to vector<8x512xf32>
    %203 = arith.maximumf %201, %202 : vector<8x512xf32>
    %c0_179 = arith.constant 0 : index
    %c0_180 = arith.constant 0 : index
    %c0_181 = arith.constant 0 : index
    %204 = vector.load %arg6[%c0_179, %c0_180, %c0_181] : memref<1x8x512xf32, #tpu.memory_space<vmem>>, vector<1x8x512xf32>
    %205 = vector.shape_cast %204 : vector<1x8x512xf32> to vector<8x512xf32>
    %206 = vector.shape_cast %203 : vector<8x512xf32> to vector<1x8x512xf32>
    tpu.vector_store %arg6[%c0_179, %c0_180, %c0_181], %206 {strides = array<i32>} : memref<1x8x512xf32, #tpu.memory_space<vmem>>, vector<1x8x512xf32>,
    return
  }
  func.func @transform_0(%arg0: i32) -> (i32, i32, i32) {
    %c0_i32 = arith.constant 0 : i32
    %c0_i32_0 = arith.constant 0 : i32
    %c0_i32_1 = arith.constant 0 : i32
    return %arg0, %c0_i32, %c0_i32_0 : i32, i32, i32
  }
  func.func @transform_1(%arg0: i32) -> (i32, i32) {
    %c0_i32 = arith.constant 0 : i32
    %c0_i32_0 = arith.constant 0 : i32
    %c0_i32_1 = arith.constant 0 : i32
    return %c0_i32, %c0_i32_0 : i32, i32
  }
  func.func @transform_2(%arg0: i32) -> (i32, i32, i32) {
    %c0_i32 = arith.constant 0 : i32
    %c0_i32_0 = arith.constant 0 : i32
    %c0_i32_1 = arith.constant 0 : i32
    %c0_i32_2 = arith.constant 0 : i32
    return %c0_i32, %c0_i32_0, %c0_i32_1 : i32, i32, i32
  }
  func.func @transform_3(%arg0: i32) -> (i32, i32, i32) {
    %c0_i32 = arith.constant 0 : i32
    %c0_i32_0 = arith.constant 0 : i32
    %c0_i32_1 = arith.constant 0 : i32
    %c0_i32_2 = arith.constant 0 : i32
    return %c0_i32, %c0_i32_0, %c0_i32_1 : i32, i32, i32
  }
  func.func @transform_4(%arg0: i32) -> i32 {
    %c0_i32 = arith.constant 0 : i32
    %c0_i32_0 = arith.constant 0 : i32
    return %c0_i32 : i32
  }
  func.func @transform_5(%arg0: i32) -> (i32, i32, i32) {
    %c0_i32 = arith.constant 0 : i32
    %c0_i32_0 = arith.constant 0 : i32
    %c0_i32_1 = arith.constant 0 : i32
    return %arg0, %c0_i32, %c0_i32_0 : i32, i32, i32
  }
}

</mosaic_0001>

<llo_original>
// kernel: tpu_custom_call.1
$region0: #{tpu_custom_call.1}
  #allocation0 [shape = 'u32[]', space=smem, size = 0x4, offset = 0x4, fixed_abs, tag = 'smem constant byte address 0x4 - core index']
  #allocation1 [shape = 'u32[144,128]{1,0:T(1,128)}', space=vmem, size = 0x12000, scoped, tag = 'internal scratch']
  #allocation2 [shape = 'f32[80,512]{1,0:T(8,128)}', space=vmem, size = 0x28000, scoped, tag = 'scratch operand']
  #allocation3 [shape = 'f32[1]{0:T(128)S(6)}', space=smem, size = 0x200, scoped, tag = 'scoped memory for tpu_custom_call.1']
  %s0 = inlined_call_operand.hbm [shape: f32[2,8,512], index: 0, kind: input, shape index: {}]
  %s1 = inlined_call_operand.hbm [shape: f32[8,512], index: 1, kind: input, shape index: {}]
  %s2 = inlined_call_operand.hbm [shape: f32[2,8,80], index: 2, kind: input, shape index: {}]
  %s3 = inlined_call_operand.hbm [shape: f32[2,8,80], index: 3, kind: input, shape index: {}]
  %s4 = inlined_call_operand.<no memory space> [shape: f32[1], index: 4, kind: input, shape index: {}]
  %s5 = inlined_call_operand.hbm [shape: f32[2,8,512], index: 5, kind: output, shape index: {}]
  %s6 = sld [smem:[#allocation0]]
  $region69: #{tpu_custom_call.1} parent=0
    _
  %s8 = ssub.s32 1, %s6
  %s9 = scalar_select 0, %s8, %s6
  %10 = sst [smem:[#allocation3]] %s4
  $region1: #{tpu_custom_call.1} parent=0
    #allocation4 [shape = 'u8[32768]{0}', space=vmem, size = 0x8000, scoped, tag = 'input window, operand 0']
    #allocation5 [shape = 's32[2]{0}', space=sflag, size = 0x8, scoped, tag = 'scoped memory for tpu_custom_call.1']
    #allocation6 [shape = 's32[2]{0}', space=sflag, size = 0x8, scoped, tag = 'scoped memory for tpu_custom_call.1']
    #allocation7 [shape = 'u8[16384]{0}', space=vmem, size = 0x4000, scoped, tag = 'input window, operand 1, single buffered']
    #allocation8 [shape = 's32[1]{0}', space=sflag, size = 0x4, scoped, tag = 'scoped memory for tpu_custom_call.1']
    #allocation9 [shape = 'u8[8192]{0}', space=vmem, size = 0x2000, scoped, tag = 'input window, operand 2, single buffered']
    #allocation10 [shape = 'u8[8192]{0}', space=vmem, size = 0x2000, scoped, tag = 'input window, operand 3, single buffered']
    #allocation11 [shape = 's32[1]{0}', space=sflag, size = 0x4, scoped, tag = 'scoped memory for tpu_custom_call.1']
    #allocation12 [shape = 'u8[32768]{0}', space=vmem, size = 0x8000, scoped, tag = 'output window, operand 0']
    %11 = vsyncpa [#allocation5], 0
    %s12 = scalar_lea.sflag [#allocation5], 1
    %13 = vsyncpa %s12, 0
    %14 = vsyncpa [#allocation8], 0
    %15 = vsyncpa [#allocation11], 0
    %16 = vsyncpa [#allocation6], 0
    %s17 = scalar_lea.sflag [#allocation6], 1
    %18 = vsyncpa %s17, 0
    loop: start=0, step=1, limit=4
    $region2: #{tpu_custom_call.1} parent=1 // loop_pre_header
      _
    $region3: #{tpu_custom_call.1} parent=1 // loop_header
      %s20 = sphi 0, %s24
      %p21 = scmp.ge.s32.totalorder %s20, 4
      %s30 = sphi 0, %s32
      %s33 = sphi 0, %s30
      %s34 = sphi 0, %s33
      %s50 = sphi 0, %s34
      %s54 = sphi 0, %s54
      %s56 = sphi 0, %s54
      %s57 = sphi 0, %s56
      %s71 = sphi 0, %s57
      %s75 = sphi 0, %s75
      %s77 = sphi 0, %s75
      %s78 = sphi 0, %s77
      %s92 = sphi 0, %s78
      %s96 = sphi 0, %s96
      %s98 = sphi 0, %s96
      %s99 = sphi 0, %s98
      %s113 = sphi 0, %s99
      %s117 = sphi 0, %s117
      %s119 = sphi 0, %s117
      %s120 = sphi 0, %s119
      %s134 = sphi 0, %s120
      %s140 = sphi 0, %s142
      %s143 = sphi 0, %s140
      %s144 = sphi 0, %s143
      %s160 = sphi 0, %s144
    $region4: #{tpu_custom_call.1} parent=1 // loop_header_branch
      %23 = sbr.rel (%p21) target = $region8
    $region5: #{tpu_custom_call.1} parent=1 // loop_body
      %s25 = ssub.s32 %s20, 1
      %s26 = ssub.s32 %s20, 2
      %s27 = sadd.s32 %s20, 1
      %s28 = ssub.s32 %s20, %s27
      %p29 = scmp.eq.s32.totalorder %s28, 0
      %s31 = sadd.s32 %s30, 1
      %s32 = scalar_select %p29, %s30, %s31
      %p35 = pneg %p29
      %p36 = scmp.eq.s32.totalorder %s20, 1
      %p37 = por %p35, %p36
      %p38 = scmp.ne.s32.totalorder %s30, %s33
      %p39 = scmp.eq.s32.totalorder %s20, 0
      %p40 = por %p38, %p39
      %p41 = scmp.ne.s32.totalorder %s30, %s33
      %p42 = scmp.eq.s32.totalorder %s25, 1
      %p43 = por %p41, %p42
      %p44 = scmp.ne.s32.totalorder %s33, %s34
      %p45 = scmp.eq.s32.totalorder %s25, 0
      %p46 = por %p44, %p45
      %p47 = scmp.ne.s32.totalorder %s33, %s34
      %p48 = scmp.eq.s32.totalorder %s26, 1
      %p49 = por %p47, %p48
      %p51 = scmp.ne.s32.totalorder %s34, %s50
      %p52 = scmp.eq.s32.totalorder %s26, 0
      %p53 = por %p51, %p52
      %s55 = sadd.s32 %s54, 1
      %p58 = scmp.eq.s32.totalorder %s20, 1
      %p59 = scmp.ne.s32.totalorder %s54, %s56
      %p60 = scmp.eq.s32.totalorder %s20, 0
      %p61 = por %p59, %p60
      %p62 = scmp.ne.s32.totalorder %s54, %s56
      %p63 = scmp.eq.s32.totalorder %s25, 1
      %p64 = por %p62, %p63
      %p65 = scmp.ne.s32.totalorder %s56, %s57
      %p66 = scmp.eq.s32.totalorder %s25, 0
      %p67 = por %p65, %p66
      %p68 = scmp.ne.s32.totalorder %s56, %s57
      %p69 = scmp.eq.s32.totalorder %s26, 1
      %p70 = por %p68, %p69
      %p72 = scmp.ne.s32.totalorder %s57, %s71
      %p73 = scmp.eq.s32.totalorder %s26, 0
      %p74 = por %p72, %p73
      %s76 = sadd.s32 %s75, 1
      %p79 = scmp.eq.s32.totalorder %s20, 1
      %p80 = scmp.ne.s32.totalorder %s75, %s77
      %p81 = scmp.eq.s32.totalorder %s20, 0
      %p82 = por %p80, %p81
      %p83 = scmp.ne.s32.totalorder %s75, %s77
      %p84 = scmp.eq.s32.totalorder %s25, 1
      %p85 = por %p83, %p84
      %p86 = scmp.ne.s32.totalorder %s77, %s78
      %p87 = scmp.eq.s32.totalorder %s25, 0
      %p88 = por %p86, %p87
      %p89 = scmp.ne.s32.totalorder %s77, %s78
      %p90 = scmp.eq.s32.totalorder %s26, 1
      %p91 = por %p89, %p90
      %p93 = scmp.ne.s32.totalorder %s78, %s92
      %p94 = scmp.eq.s32.totalorder %s26, 0
      %p95 = por %p93, %p94
      %s97 = sadd.s32 %s96, 1
      %p100 = scmp.eq.s32.totalorder %s20, 1
      %p101 = scmp.ne.s32.totalorder %s96, %s98
      %p102 = scmp.eq.s32.totalorder %s20, 0
      %p103 = por %p101, %p102
      %p104 = scmp.ne.s32.totalorder %s96, %s98
      %p105 = scmp.eq.s32.totalorder %s25, 1
      %p106 = por %p104, %p105
      %p107 = scmp.ne.s32.totalorder %s98, %s99
      %p108 = scmp.eq.s32.totalorder %s25, 0
      %p109 = por %p107, %p108
      %p110 = scmp.ne.s32.totalorder %s98, %s99
      %p111 = scmp.eq.s32.totalorder %s26, 1
      %p112 = por %p110, %p111
      %p114 = scmp.ne.s32.totalorder %s99, %s113
      %p115 = scmp.eq.s32.totalorder %s26, 0
      %p116 = por %p114, %p115
      %s118 = sadd.s32 %s117, 1
      %p121 = scmp.eq.s32.totalorder %s20, 1
      %p122 = scmp.ne.s32.totalorder %s117, %s119
      %p123 = scmp.eq.s32.totalorder %s20, 0
      %p124 = por %p122, %p123
      %p125 = scmp.ne.s32.totalorder %s117, %s119
      %p126 = scmp.eq.s32.totalorder %s25, 1
      %p127 = por %p125, %p126
      %p128 = scmp.ne.s32.totalorder %s119, %s120
      %p129 = scmp.eq.s32.totalorder %s25, 0
      %p130 = por %p128, %p129
      %p131 = scmp.ne.s32.totalorder %s119, %s120
      %p132 = scmp.eq.s32.totalorder %s26, 1
      %p133 = por %p131, %p132
      %p135 = scmp.ne.s32.totalorder %s120, %s134
      %p136 = scmp.eq.s32.totalorder %s26, 0
      %p137 = por %p135, %p136
      %s138 = ssub.s32 %s20, %s27
      %p139 = scmp.eq.s32.totalorder %s138, 0
      %s141 = sadd.s32 %s140, 1
      %s142 = scalar_select %p139, %s140, %s141
      %p145 = pneg %p139
      %p146 = scmp.eq.s32.totalorder %s20, 1
      %p147 = por %p145, %p146
      %p148 = scmp.ne.s32.totalorder %s140, %s143
      %p149 = scmp.eq.s32.totalorder %s20, 0
      %p150 = por %p148, %p149
      %p151 = scmp.ne.s32.totalorder %s140, %s143
      %p152 = scmp.eq.s32.totalorder %s25, 1
      %p153 = por %p151, %p152
      %p154 = scmp.ne.s32.totalorder %s143, %s144
      %p155 = scmp.eq.s32.totalorder %s25, 0
      %p156 = por %p154, %p155
      %p157 = scmp.ne.s32.totalorder %s143, %s144
      %p158 = scmp.eq.s32.totalorder %s26, 1
      %p159 = por %p157, %p158
      %p161 = scmp.ne.s32.totalorder %s144, %s160
      %p162 = scmp.eq.s32.totalorder %s26, 0
      %p163 = por %p161, %p162
      %p164 = scmp.le.s32.totalorder 1, %s20
      %p165 = scmp.lt.s32.totalorder %s20, 3
      %p166 = pnand %p164, %p165
      %p167 = pneg %p166
      // Predicated region
      $region9: #{tpu_custom_call.1} parent=5 // pred_check
        _
      $region10: #{tpu_custom_call.1} parent=5 // pred_check_branch
        %169 = sbr.rel (%p166) target = $region12
      $region11: #{tpu_custom_call.1} parent=5 // pred_region
        %s170 = ssub.s32 %s20, 1
        // Predicated region
        $region13: #{tpu_custom_call.1} parent=11 // pred_check
          %p171 = pneg %p67
        $region14: #{tpu_custom_call.1} parent=11 // pred_check_branch
          %173 = sbr.rel (%p171) target = $region16
        $region15: #{tpu_custom_call.1} parent=11 // pred_region
          %s175 = ssub.s32 512, 512
          %176 = vsyncadd [#allocation8], %s175
          %s178 = sshll.u32 [#allocation7], 4
          %s179 = int_to_ptr.vmem [resolvable:$true] %s178
          %181 = dma.hbm_to_vmem [thread:$0]  %s1, 512, %s179, [#allocation8]
        $region16: #{tpu_custom_call.1} parent=11 // pred_fallthru
          _
        // Predicated region
        $region17: #{tpu_custom_call.1} parent=11 // pred_check
          %p182 = pneg %p88
        $region18: #{tpu_custom_call.1} parent=11 // pred_check_branch
          %184 = sbr.rel (%p182) target = $region20
        $region19: #{tpu_custom_call.1} parent=11 // pred_region
          %s186 = ssub.s32 256, 256
          %187 = vsyncadd [#allocation8], %s186
          %s188 = sshll.u32 [#allocation9], 4
          %s189 = int_to_ptr.vmem [resolvable:$true] %s188
          %194 = dma.hbm_to_vmem [thread:$0]  %s2, 256, %s189, [#allocation8], 128, 128, 8
        $region20: #{tpu_custom_call.1} parent=11 // pred_fallthru
          _
        // Predicated region
        $region21: #{tpu_custom_call.1} parent=11 // pred_check
          %p195 = pneg %p109
        $region22: #{tpu_custom_call.1} parent=11 // pred_check_branch
          %197 = sbr.rel (%p195) target = $region24
        $region23: #{tpu_custom_call.1} parent=11 // pred_region
          %s199 = ssub.s32 256, 256
          %200 = vsyncadd [#allocation11], %s199
          %s201 = sshll.u32 [#allocation10], 4
          %s202 = int_to_ptr.vmem [resolvable:$true] %s201
          %207 = dma.hbm_to_vmem [thread:$0]  %s3, 256, %s202, [#allocation11], 128, 128, 8
        $region24: #{tpu_custom_call.1} parent=11 // pred_fallthru
          _
        // Predicated region
        $region25: #{tpu_custom_call.1} parent=11 // pred_check
          %p208 = pneg %p130
        $region26: #{tpu_custom_call.1} parent=11 // pred_check_branch
          %210 = sbr.rel (%p208) target = $region28
        $region27: #{tpu_custom_call.1} parent=11 // pred_region
          _
        $region28: #{tpu_custom_call.1} parent=11 // pred_fallthru
          _
      $region12: #{tpu_custom_call.1} parent=5 // pred_fallthru
        _
      %p211 = scmp.lt.s32.totalorder %s20, 2
      // Predicated region
      $region29: #{tpu_custom_call.1} parent=5 // pred_check
        %p212 = pneg %p211
      $region30: #{tpu_custom_call.1} parent=5 // pred_check_branch
        %214 = sbr.rel (%p212) target = $region32
      $region31: #{tpu_custom_call.1} parent=5 // pred_region
        // Predicated region
        $region33: #{tpu_custom_call.1} parent=31 // pred_check
          %p215 = pneg %p40
        $region34: #{tpu_custom_call.1} parent=31 // pred_check_branch
          %217 = sbr.rel (%p215) target = $region36
        $region35: #{tpu_custom_call.1} parent=31 // pred_region
          %s218 = sand.u32 %s30, 1
          %s219 = scalar_lea.sflag [#allocation5], %s218
          %s220 = sand.u32 %s30, 1
          %s221 = smul.addr %s220, 32
          %s222 = scalar_lea.vmem [#allocation4], %s221
          %s224 = ssub.s32 512, 512
          %225 = vsyncadd %s219, %s224
          %s226 = smul.addr %s20, 4
          %s227 = smul.addr %s226, 128
          %s228 = scalar_lea.hbm %s0, %s227
          %s230 = sshll.u32 %s222, 4
          %s231 = int_to_ptr.vmem [resolvable:$true] %s230
          %233 = dma.hbm_to_vmem [thread:$0]  %s228, 512, %s231, %s219
        $region36: #{tpu_custom_call.1} parent=31 // pred_fallthru
          _
      $region32: #{tpu_custom_call.1} parent=5 // pred_fallthru
        _
      %p234 = scmp.le.s32.totalorder 1, %s20
      %p235 = scmp.lt.s32.totalorder %s20, 3
      %p236 = pnand %p234, %p235
      %p237 = pneg %p236
      // Predicated region
      $region37: #{tpu_custom_call.1} parent=5 // pred_check
        _
      $region38: #{tpu_custom_call.1} parent=5 // pred_check_branch
        %239 = sbr.rel (%p236) target = $region40
      $region39: #{tpu_custom_call.1} parent=5 // pred_region
        %s240 = ssub.s32 %s20, 1
        %s241 = sand.u32 %s33, 1
        %s242 = scalar_lea.sflag [#allocation5], %s241
        %s243 = sand.u32 %s33, 1
        %s244 = smul.addr %s243, 32
        %s245 = scalar_lea.vmem [#allocation4], %s244
        // Predicated region
        $region41: #{tpu_custom_call.1} parent=39 // pred_check
          %p246 = pneg %p46
        $region42: #{tpu_custom_call.1} parent=39 // pred_check_branch
          %248 = sbr.rel (%p246) target = $region44
        $region43: #{tpu_custom_call.1} parent=39 // pred_region
          %249 = dma.done %s242, 512
        $region44: #{tpu_custom_call.1} parent=39 // pred_fallthru
          _
        // Predicated region
        $region45: #{tpu_custom_call.1} parent=39 // pred_check
          %p250 = pneg %p67
        $region46: #{tpu_custom_call.1} parent=39 // pred_check_branch
          %252 = sbr.rel (%p250) target = $region48
        $region47: #{tpu_custom_call.1} parent=39 // pred_region
          %253 = dma.done [#allocation8], 512
        $region48: #{tpu_custom_call.1} parent=39 // pred_fallthru
          _
        // Predicated region
        $region49: #{tpu_custom_call.1} parent=39 // pred_check
          %p254 = pneg %p88
        $region50: #{tpu_custom_call.1} parent=39 // pred_check_branch
          %256 = sbr.rel (%p254) target = $region52
        $region51: #{tpu_custom_call.1} parent=39 // pred_region
          %257 = dma.done [#allocation8], 256
        $region52: #{tpu_custom_call.1} parent=39 // pred_fallthru
          _
        // Predicated region
        $region53: #{tpu_custom_call.1} parent=39 // pred_check
          %p258 = pneg %p109
        $region54: #{tpu_custom_call.1} parent=39 // pred_check_branch
          %260 = sbr.rel (%p258) target = $region56
        $region55: #{tpu_custom_call.1} parent=39 // pred_region
          %261 = dma.done [#allocation11], 256
        $region56: #{tpu_custom_call.1} parent=39 // pred_fallthru
          _
        %s262 = sand.u32 %s33, 1
        %s263 = scalar_lea.sflag [#allocation5], %s262
        %s264 = sand.u32 %s33, 1
        %s265 = smul.addr %s264, 32
        %s266 = scalar_lea.vmem [#allocation4], %s265
        %p267 = pneg %p46
        %p268 = pneg %p43
        %p269 = pneg %p67
        %p270 = pneg %p64
        %p271 = pneg %p88
        %p272 = pneg %p85
        %p273 = pneg %p109
        %p274 = pneg %p106
        %p275 = pneg %p130
        %p276 = pneg %p127
        %p277 = pneg %p156
        %p278 = pneg %p153
        %s279 = sand.u32 %s143, 1
        %s280 = scalar_lea.sflag [#allocation6], %s279
        %s281 = sand.u32 %s143, 1
        %s282 = smul.addr %s281, 32
        %s283 = scalar_lea.vmem [#allocation12], %s282
        %v284 = vlaneseq
        %v285 = vshrl.u32 %v284, 7
        %vm286 = vcmp.eq.s32.totalorder %v285, 0
        %v287 = vsel %vm286, 1.0, 0.0
        %288 = vst [vmem:[#allocation2 + $0x120] sm:$0xff] %v287
        %289 = vst [vmem:[#allocation2 + $0x128] sm:$0xff] %v287
        %290 = vst [vmem:[#allocation2 + $0x130] sm:$0xff] %v287
        %291 = vst [vmem:[#allocation2 + $0x138] sm:$0xff] %v287
        %v292 = vld [vmem:[%s245] sm:$0xff]
        %v293 = vld [vmem:[%s245 + $0x8] sm:$0xff]
        %v294 = vld [vmem:[%s245 + $0x10] sm:$0xff]
        %v295 = vld [vmem:[%s245 + $0x18] sm:$0xff]
        %v296 = vld [vmem:[#allocation9] sm:$0xff]
        %297 = vrot.lane.b32.xlu0 %v292, 17
        %v298 = vpop.permute.xlu0 %297
        %299 = vrot.lane.b32.xlu0 %v293, 17
        %v300 = vpop.permute.xlu0 %299
        %301 = vrot.lane.b32.xlu0 %v294, 17
        %v302 = vpop.permute.xlu0 %301
        %303 = vrot.lane.b32.xlu0 %v295, 17
        %v304 = vpop.permute.xlu0 %303
        %v305 = vlaneseq
        %v306 = vand.u32 %v305, 127
        %vm307 = vcmp.lt.s32.totalorder %v306, 17
        %v308 = vsel %vm307, %v302, %v304
        %v309 = vsel %vm307, %v300, %v302
        %v310 = vsel %vm307, %v298, %v300
        %v311 = vsel %vm307, %v304, %v298
        %v312 = vld [vmem:[#allocation7] ss:$8 sm:$0xf]
        %v314 = vlaneseq
        %v315 = vshrl.u32 %v314, 7
        %v316 = vsub.s32 0, %v315
        %v317 = vrot.slane %v312, %v316
        %v318 = vlaneseq
        %v319 = vshrl.u32 %v318, 7
        %v320 = vsub.s32 1, %v319
        %v321 = vrot.slane %v312, %v320
        %v322 = vlaneseq
        %v323 = vshrl.u32 %v322, 7
        %v324 = vsub.s32 2, %v323
        %v325 = vrot.slane %v312, %v324
        %v326 = vlaneseq
        %v327 = vshrl.u32 %v326, 7
        %v328 = vsub.s32 3, %v327
        %v329 = vrot.slane %v312, %v328
        %v334 = vmul.f32 %v311, %v317
        %v335 = vmul.f32 %v310, %v321
        %v336 = vmul.f32 %v309, %v325
        %v337 = vmul.f32 %v308, %v329
        %338 = vst [vmem:[#allocation2] sm:$0xff] %v334
        %339 = vst [vmem:[#allocation2 + $0x8] sm:$0xff] %v335
        %340 = vst [vmem:[#allocation2 + $0x10] sm:$0xff] %v336
        %341 = vst [vmem:[#allocation2 + $0x18] sm:$0xff] %v337
        %342 = vrot.lane.b32.xlu0 %v292, 16
        %v343 = vpop.permute.xlu0 %342
        %344 = vrot.lane.b32.xlu0 %v293, 16
        %v345 = vpop.permute.xlu0 %344
        %346 = vrot.lane.b32.xlu0 %v294, 16
        %v347 = vpop.permute.xlu0 %346
        %348 = vrot.lane.b32.xlu0 %v295, 16
        %v349 = vpop.permute.xlu0 %348
        %vm350 = vcmp.lt.s32.totalorder %v306, 16
        %v351 = vsel %vm350, %v347, %v349
        %v352 = vsel %vm350, %v345, %v347
        %v353 = vsel %vm350, %v343, %v345
        %v354 = vsel %vm350, %v349, %v343
        %s355 = scalar_lea.vmem [#allocation7], 1
        %v356 = vld [vmem:[%s355] ss:$8 sm:$0xf]
        %v358 = vlaneseq
        %v359 = vshrl.u32 %v358, 7
        %v360 = vsub.s32 0, %v359
        %v361 = vrot.slane %v356, %v360
        %v362 = vlaneseq
        %v363 = vshrl.u32 %v362, 7
        %v364 = vsub.s32 1, %v363
        %v365 = vrot.slane %v356, %v364
        %v366 = vlaneseq
        %v367 = vshrl.u32 %v366, 7
        %v368 = vsub.s32 2, %v367
        %v369 = vrot.slane %v356, %v368
        %v370 = vlaneseq
        %v371 = vshrl.u32 %v370, 7
        %v372 = vsub.s32 3, %v371
        %v373 = vrot.slane %v356, %v372
        %v378 = vmul.f32 %v354, %v361
        %v379 = vmul.f32 %v353, %v365
        %v380 = vmul.f32 %v352, %v369
        %v381 = vmul.f32 %v351, %v373
        %382 = vst [vmem:[#allocation2 + $0x20] sm:$0xff] %v378
        %383 = vst [vmem:[#allocation2 + $0x28] sm:$0xff] %v379
        %384 = vst [vmem:[#allocation2 + $0x30] sm:$0xff] %v380
        %385 = vst [vmem:[#allocation2 + $0x38] sm:$0xff] %v381
        %386 = vrot.lane.b32.xlu0 %v292, 15
        %v387 = vpop.permute.xlu0 %386
        %388 = vrot.lane.b32.xlu0 %v293, 15
        %v389 = vpop.permute.xlu0 %388
        %390 = vrot.lane.b32.xlu0 %v294, 15
        %v391 = vpop.permute.xlu0 %390
        %392 = vrot.lane.b32.xlu0 %v295, 15
        %v393 = vpop.permute.xlu0 %392
        %vm394 = vcmp.lt.s32.totalorder %v306, 15
        %v395 = vsel %vm394, %v391, %v393
        %v396 = vsel %vm394, %v389, %v391
        %v397 = vsel %vm394, %v387, %v389
        %v398 = vsel %vm394, %v393, %v387
        %s399 = scalar_lea.vmem [#allocation7], 2
        %v400 = vld [vmem:[%s399] ss:$8 sm:$0xf]
        %v402 = vlaneseq
        %v403 = vshrl.u32 %v402, 7
        %v404 = vsub.s32 0, %v403
        %v405 = vrot.slane %v400, %v404
        %v406 = vlaneseq
        %v407 = vshrl.u32 %v406, 7
        %v408 = vsub.s32 1, %v407
        %v409 = vrot.slane %v400, %v408
        %v410 = vlaneseq
        %v411 = vshrl.u32 %v410, 7
        %v412 = vsub.s32 2, %v411
        %v413 = vrot.slane %v400, %v412
        %v414 = vlaneseq
        %v415 = vshrl.u32 %v414, 7
        %v416 = vsub.s32 3, %v415
        %v417 = vrot.slane %v400, %v416
        %v422 = vmul.f32 %v398, %v405
        %v423 = vmul.f32 %v397, %v409
        %v424 = vmul.f32 %v396, %v413
        %v425 = vmul.f32 %v395, %v417
        %426 = vst [vmem:[#allocation2 + $0x40] sm:$0xff] %v422
        %427 = vst [vmem:[#allocation2 + $0x48] sm:$0xff] %v423
        %428 = vst [vmem:[#allocation2 + $0x50] sm:$0xff] %v424
        %429 = vst [vmem:[#allocation2 + $0x58] sm:$0xff] %v425
        %430 = vrot.lane.b32.xlu0 %v292, 1
        %v431 = vpop.permute.xlu0 %430
        %432 = vrot.lane.b32.xlu0 %v293, 1
        %v433 = vpop.permute.xlu0 %432
        %434 = vrot.lane.b32.xlu0 %v294, 1
        %v435 = vpop.permute.xlu0 %434
        %436 = vrot.lane.b32.xlu0 %v295, 1
        %v437 = vpop.permute.xlu0 %436
        %vm438 = vcmp.lt.s32.totalorder %v306, 1
        %v439 = vsel %vm438, %v435, %v437
        %v440 = vsel %vm438, %v433, %v435
        %v441 = vsel %vm438, %v431, %v433
        %v442 = vsel %vm438, %v437, %v431
        %s443 = scalar_lea.vmem [#allocation7], 3
        %v444 = vld [vmem:[%s443] ss:$8 sm:$0xf]
        %v446 = vlaneseq
        %v447 = vshrl.u32 %v446, 7
        %v448 = vsub.s32 0, %v447
        %v449 = vrot.slane %v444, %v448
        %v450 = vlaneseq
        %v451 = vshrl.u32 %v450, 7
        %v452 = vsub.s32 1, %v451
        %v453 = vrot.slane %v444, %v452
        %v454 = vlaneseq
        %v455 = vshrl.u32 %v454, 7
        %v456 = vsub.s32 2, %v455
        %v457 = vrot.slane %v444, %v456
        %v458 = vlaneseq
        %v459 = vshrl.u32 %v458, 7
        %v460 = vsub.s32 3, %v459
        %v461 = vrot.slane %v444, %v460
        %v466 = vmul.f32 %v442, %v449
        %v467 = vmul.f32 %v441, %v453
        %v468 = vmul.f32 %v440, %v457
        %v469 = vmul.f32 %v439, %v461
        %470 = vst [vmem:[#allocation2 + $0x60] sm:$0xff] %v466
        %471 = vst [vmem:[#allocation2 + $0x68] sm:$0xff] %v467
        %472 = vst [vmem:[#allocation2 + $0x70] sm:$0xff] %v468
        %473 = vst [vmem:[#allocation2 + $0x78] sm:$0xff] %v469
        %474 = vst [vmem:[#allocation2 + $0x80] sm:$0xff] %v292
        %475 = vst [vmem:[#allocation2 + $0x88] sm:$0xff] %v293
        %476 = vst [vmem:[#allocation2 + $0x90] sm:$0xff] %v294
        %477 = vst [vmem:[#allocation2 + $0x98] sm:$0xff] %v295
        %478 = vrot.lane.b32.xlu0 %v292, 127
        %v479 = vpop.permute.xlu0 %478
        %480 = vrot.lane.b32.xlu0 %v293, 127
        %v481 = vpop.permute.xlu0 %480
        %482 = vrot.lane.b32.xlu0 %v294, 127
        %v483 = vpop.permute.xlu0 %482
        %484 = vrot.lane.b32.xlu0 %v295, 127
        %v485 = vpop.permute.xlu0 %484
        %vm486 = vcmp.lt.s32.totalorder %v306, 127
        %v487 = vsel %vm486, %v483, %v485
        %v488 = vsel %vm486, %v481, %v483
        %v489 = vsel %vm486, %v479, %v481
        %v490 = vsel %vm486, %v485, %v479
        %s491 = scalar_lea.vmem [#allocation7], 4
        %v492 = vld [vmem:[%s491] ss:$8 sm:$0xf]
        %v494 = vlaneseq
        %v495 = vshrl.u32 %v494, 7
        %v496 = vsub.s32 0, %v495
        %v497 = vrot.slane %v492, %v496
        %v498 = vlaneseq
        %v499 = vshrl.u32 %v498, 7
        %v500 = vsub.s32 1, %v499
        %v501 = vrot.slane %v492, %v500
        %v502 = vlaneseq
        %v503 = vshrl.u32 %v502, 7
        %v504 = vsub.s32 2, %v503
        %v505 = vrot.slane %v492, %v504
        %v506 = vlaneseq
        %v507 = vshrl.u32 %v506, 7
        %v508 = vsub.s32 3, %v507
        %v509 = vrot.slane %v492, %v508
        %v514 = vmul.f32 %v489, %v497
        %v515 = vmul.f32 %v488, %v501
        %v516 = vmul.f32 %v487, %v505
        %v517 = vmul.f32 %v490, %v509
        %518 = vst [vmem:[#allocation2 + $0xa0] sm:$0xff] %v514
        %519 = vst [vmem:[#allocation2 + $0xa8] sm:$0xff] %v515
        %520 = vst [vmem:[#allocation2 + $0xb0] sm:$0xff] %v516
        %521 = vst [vmem:[#allocation2 + $0xb8] sm:$0xff] %v517
        %522 = vrot.lane.b32.xlu0 %v292, 113
        %v523 = vpop.permute.xlu0 %522
        %524 = vrot.lane.b32.xlu0 %v293, 113
        %v525 = vpop.permute.xlu0 %524
        %526 = vrot.lane.b32.xlu0 %v294, 113
        %v527 = vpop.permute.xlu0 %526
        %528 = vrot.lane.b32.xlu0 %v295, 113
        %v529 = vpop.permute.xlu0 %528
        %vm530 = vcmp.lt.s32.totalorder %v306, 113
        %v531 = vsel %vm530, %v527, %v529
        %v532 = vsel %vm530, %v525, %v527
        %v533 = vsel %vm530, %v523, %v525
        %v534 = vsel %vm530, %v529, %v523
        %s535 = scalar_lea.vmem [#allocation7], 5
        %v536 = vld [vmem:[%s535] ss:$8 sm:$0xf]
        %v538 = vlaneseq
        %v539 = vshrl.u32 %v538, 7
        %v540 = vsub.s32 0, %v539
        %v541 = vrot.slane %v536, %v540
        %v542 = vlaneseq
        %v543 = vshrl.u32 %v542, 7
        %v544 = vsub.s32 1, %v543
        %v545 = vrot.slane %v536, %v544
        %v546 = vlaneseq
        %v547 = vshrl.u32 %v546, 7
        %v548 = vsub.s32 2, %v547
        %v549 = vrot.slane %v536, %v548
        %v550 = vlaneseq
        %v551 = vshrl.u32 %v550, 7
        %v552 = vsub.s32 3, %v551
        %v553 = vrot.slane %v536, %v552
        %v558 = vmul.f32 %v533, %v541
        %v559 = vmul.f32 %v532, %v545
        %v560 = vmul.f32 %v531, %v549
        %v561 = vmul.f32 %v534, %v553
        %562 = vst [vmem:[#allocation2 + $0xc0] sm:$0xff] %v558
        %563 = vst [vmem:[#allocation2 + $0xc8] sm:$0xff] %v559
        %564 = vst [vmem:[#allocation2 + $0xd0] sm:$0xff] %v560
        %565 = vst [vmem:[#allocation2 + $0xd8] sm:$0xff] %v561
        %566 = vrot.lane.b32.xlu0 %v292, 112
        %v567 = vpop.permute.xlu0 %566
        %568 = vrot.lane.b32.xlu0 %v293, 112
        %v569 = vpop.permute.xlu0 %568
        %570 = vrot.lane.b32.xlu0 %v294, 112
        %v571 = vpop.permute.xlu0 %570
        %572 = vrot.lane.b32.xlu0 %v295, 112
        %v573 = vpop.permute.xlu0 %572
        %vm574 = vcmp.lt.s32.totalorder %v306, 112
        %v575 = vsel %vm574, %v571, %v573
        %v576 = vsel %vm574, %v569, %v571
        %v577 = vsel %vm574, %v567, %v569
        %v578 = vsel %vm574, %v573, %v567
        %s579 = scalar_lea.vmem [#allocation7], 6
        %v580 = vld [vmem:[%s579] ss:$8 sm:$0xf]
        %v582 = vlaneseq
        %v583 = vshrl.u32 %v582, 7
        %v584 = vsub.s32 0, %v583
        %v585 = vrot.slane %v580, %v584
        %v586 = vlaneseq
        %v587 = vshrl.u32 %v586, 7
        %v588 = vsub.s32 1, %v587
        %v589 = vrot.slane %v580, %v588
        %v590 = vlaneseq
        %v591 = vshrl.u32 %v590, 7
        %v592 = vsub.s32 2, %v591
        %v593 = vrot.slane %v580, %v592
        %v594 = vlaneseq
        %v595 = vshrl.u32 %v594, 7
        %v596 = vsub.s32 3, %v595
        %v597 = vrot.slane %v580, %v596
        %v602 = vmul.f32 %v577, %v585
        %v603 = vmul.f32 %v576, %v589
        %v604 = vmul.f32 %v575, %v593
        %v605 = vmul.f32 %v578, %v597
        %606 = vst [vmem:[#allocation2 + $0xe0] sm:$0xff] %v602
        %607 = vst [vmem:[#allocation2 + $0xe8] sm:$0xff] %v603
        %608 = vst [vmem:[#allocation2 + $0xf0] sm:$0xff] %v604
        %609 = vst [vmem:[#allocation2 + $0xf8] sm:$0xff] %v605
        %610 = vrot.lane.b32.xlu0 %v292, 111
        %v611 = vpop.permute.xlu0 %610
        %612 = vrot.lane.b32.xlu0 %v293, 111
        %v613 = vpop.permute.xlu0 %612
        %614 = vrot.lane.b32.xlu0 %v294, 111
        %v615 = vpop.permute.xlu0 %614
        %616 = vrot.lane.b32.xlu0 %v295, 111
        %v617 = vpop.permute.xlu0 %616
        %vm618 = vcmp.lt.s32.totalorder %v306, 111
        %v619 = vsel %vm618, %v615, %v617
        %v620 = vsel %vm618, %v613, %v615
        %v621 = vsel %vm618, %v611, %v613
        %v622 = vsel %vm618, %v617, %v611
        %s623 = scalar_lea.vmem [#allocation7], 7
        %v624 = vld [vmem:[%s623] ss:$8 sm:$0xf]
        %v626 = vlaneseq
        %v627 = vshrl.u32 %v626, 7
        %v628 = vsub.s32 0, %v627
        %v629 = vrot.slane %v624, %v628
        %v630 = vlaneseq
        %v631 = vshrl.u32 %v630, 7
        %v632 = vsub.s32 1, %v631
        %v633 = vrot.slane %v624, %v632
        %v634 = vlaneseq
        %v635 = vshrl.u32 %v634, 7
        %v636 = vsub.s32 2, %v635
        %v637 = vrot.slane %v624, %v636
        %v638 = vlaneseq
        %v639 = vshrl.u32 %v638, 7
        %v640 = vsub.s32 3, %v639
        %v641 = vrot.slane %v624, %v640
        %v646 = vmul.f32 %v621, %v629
        %v647 = vmul.f32 %v620, %v633
        %v648 = vmul.f32 %v619, %v637
        %v649 = vmul.f32 %v622, %v641
        %650 = vst [vmem:[#allocation2 + $0x100] sm:$0xff] %v646
        %651 = vst [vmem:[#allocation2 + $0x108] sm:$0xff] %v647
        %652 = vst [vmem:[#allocation2 + $0x110] sm:$0xff] %v648
        %653 = vst [vmem:[#allocation2 + $0x118] sm:$0xff] %v649
        %v654 = vld [vmem:[#allocation2] sm:$0xff]
        %v655 = vld [vmem:[#allocation2 + $0x8] sm:$0xff]
        %v656 = vld [vmem:[#allocation2 + $0x10] sm:$0xff]
        %v657 = vld [vmem:[#allocation2 + $0x18] sm:$0xff]
        %v658 = vld [vmem:[#allocation2 + $0x20] sm:$0xff]
        %v659 = vld [vmem:[#allocation2 + $0x28] sm:$0xff]
        %v660 = vld [vmem:[#allocation2 + $0x30] sm:$0xff]
        %v661 = vld [vmem:[#allocation2 + $0x38] sm:$0xff]
        %v662 = vld [vmem:[#allocation2 + $0x40] sm:$0xff]
        %v663 = vld [vmem:[#allocation2 + $0x48] sm:$0xff]
        %v664 = vld [vmem:[#allocation2 + $0x50] sm:$0xff]
        %v665 = vld [vmem:[#allocation2 + $0x58] sm:$0xff]
        %v666 = vld [vmem:[#allocation2 + $0x60] sm:$0xff]
        %v667 = vld [vmem:[#allocation2 + $0x68] sm:$0xff]
        %v668 = vld [vmem:[#allocation2 + $0x70] sm:$0xff]
        %v669 = vld [vmem:[#allocation2 + $0x78] sm:$0xff]
        %v670 = vld [vmem:[#allocation2 + $0x80] sm:$0xff]
        %v671 = vld [vmem:[#allocation2 + $0x88] sm:$0xff]
        %v672 = vld [vmem:[#allocation2 + $0x90] sm:$0xff]
        %v673 = vld [vmem:[#allocation2 + $0x98] sm:$0xff]
        %v674 = vld [vmem:[#allocation2 + $0xa0] sm:$0xff]
        %v675 = vld [vmem:[#allocation2 + $0xa8] sm:$0xff]
        %v676 = vld [vmem:[#allocation2 + $0xb0] sm:$0xff]
        %v677 = vld [vmem:[#allocation2 + $0xb8] sm:$0xff]
        %v678 = vld [vmem:[#allocation2 + $0xc0] sm:$0xff]
        %v679 = vld [vmem:[#allocation2 + $0xc8] sm:$0xff]
        %v680 = vld [vmem:[#allocation2 + $0xd0] sm:$0xff]
        %v681 = vld [vmem:[#allocation2 + $0xd8] sm:$0xff]
        %v682 = vld [vmem:[#allocation2 + $0xe0] sm:$0xff]
        %v683 = vld [vmem:[#allocation2 + $0xe8] sm:$0xff]
        %v684 = vld [vmem:[#allocation2 + $0xf0] sm:$0xff]
        %v685 = vld [vmem:[#allocation2 + $0xf8] sm:$0xff]
        %v686 = vld [vmem:[#allocation2 + $0x100] sm:$0xff]
        %v687 = vld [vmem:[#allocation2 + $0x108] sm:$0xff]
        %v688 = vld [vmem:[#allocation2 + $0x110] sm:$0xff]
        %v689 = vld [vmem:[#allocation2 + $0x118] sm:$0xff]
        %v690 = vld [vmem:[#allocation2 + $0x120] sm:$0xff]
        %v691 = vld [vmem:[#allocation2 + $0x128] sm:$0xff]
        %v692 = vld [vmem:[#allocation2 + $0x130] sm:$0xff]
        %v693 = vld [vmem:[#allocation2 + $0x138] sm:$0xff]
        %vm694 = vcmask 654336
        %v696 = vsel %vm694, %v296, 0
        %698 = vmatprep.subr.mxu0 %v655
        %699 = vmatpush1.msra.mxu0 %v654
        %700 = vmatprep.subr.mxu0 %v659
        %701 = vmatpush1.msra.mxu0 %v658
        %702 = vmatprep.subr.mxu0 %v663
        %703 = vmatpush1.msra.mxu0 %v662
        %704 = vmatprep.subr.mxu0 %v667
        %705 = vmatpush1.msra.mxu0 %v666
        %706 = vmatprep.subr.mxu0 %v671
        %707 = vmatpush1.msra.mxu0 %v670
        %708 = vmatprep.subr.mxu0 %v675
        %709 = vmatpush1.msra.mxu0 %v674
        %710 = vmatprep.subr.mxu0 %v679
        %711 = vmatpush1.msra.mxu0 %v678
        %712 = vmatprep.subr.mxu0 %v683
        %713 = vmatpush1.msra.mxu0 %v682
        %714 = vmatprep.subr.mxu0 %v687
        %715 = vmatpush1.msra.mxu0 %v686
        %716 = vmatprep.subr.mxu0 %v691
        %717 = vmatpush1.msra.mxu0 %v690
        %718 = vmatprep.subr.mxu0 0.0
        %719 = vmatpush1.msra.mxu0 0.0
        %720 = vmatprep.subr.mxu0 0.0
        %721 = vmatpush1.msra.mxu0 0.0
        %722 = vmatprep.subr.mxu0 0.0
        %723 = vmatpush1.msra.mxu0 0.0
        %724 = vmatprep.subr.mxu0 0.0
        %725 = vmatpush1.msra.mxu0 0.0
        %726 = vmatprep.subr.mxu0 0.0
        %727 = vmatpush1.msra.mxu0 0.0
        %728 = vmatprep.subr.mxu0 0.0
        %729 = vmatpush1.msra.mxu0 0.0
        %730 = vmatprep.subr.mxu0 0.0
        %731 = vmatpush1.msra.mxu0 0.0
        %732 = vmatprep.subr.mxu0 0.0
        %733 = vmatpush1.msra.mxu0 0.0
        %734 = vmatprep.subr.mxu0 0.0
        %735 = vmatpush1.msra.mxu0 0.0
        %736 = vmatprep.subr.mxu0 0.0
        %737 = vmatpush1.msra.mxu0 0.0
        %738 = vmatprep.subr.mxu0 0.0
        %739 = vmatpush1.msra.mxu0 0.0
        %740 = vmatprep.subr.mxu0 0.0
        %741 = vmatpush1.msra.mxu0 0.0
        %742 = vmatprep.subr.mxu0 0.0
        %743 = vmatpush1.msra.mxu0 0.0
        %744 = vmatprep.subr.mxu0 0.0
        %745 = vmatpush1.msra.mxu0 0.0
        %746 = vmatprep.subr.mxu0 0.0
        %747 = vmatpush1.msra.mxu0 0.0
        %748 = vmatprep.subr.mxu0 0.0
        %749 = vmatpush1.msra.mxu0 0.0
        %750 = vmatprep.subr.mxu0 0.0
        %751 = vmatpush1.msra.mxu0 0.0
        %752 = vmatprep.subr.mxu0 0.0
        %753 = vmatpush1.msra.mxu0 0.0
        %754 = vmatprep.subr.mxu0 0.0
        %755 = vmatpush1.msra.mxu0 0.0
        %756 = vmatprep.subr.mxu0 0.0
        %757 = vmatpush1.msra.mxu0 0.0
        %758 = vmatprep.subr.mxu0 0.0
        %759 = vmatpush1.msra.mxu0 0.0
        %760 = vmatprep.subr.mxu0 0.0
        %761 = vmatpush1.msra.mxu0 0.0
        %762 = vmatprep.mubr.f32.mxu0 0.0
        %763 = vmatmul.mubr.f32.gmra.mrb[0].mxu0 %v696
        %v764 = vpop.f32.mrb[0].mxu0
        %v765 = vadd.f32 0.0, %v764
        %v766 = vpop.f32.mrb[0].mxu0
        %v767 = vadd.f32 0.0, %v766
        %768 = vdwg.mxu0
        %769 = vmatprep.subr.mxu0 %v657
        %770 = vmatpush1.msra.mxu0 %v656
        %771 = vmatprep.subr.mxu0 %v661
        %772 = vmatpush1.msra.mxu0 %v660
        %773 = vmatprep.subr.mxu0 %v665
        %774 = vmatpush1.msra.mxu0 %v664
        %775 = vmatprep.subr.mxu0 %v669
        %776 = vmatpush1.msra.mxu0 %v668
        %777 = vmatprep.subr.mxu0 %v673
        %778 = vmatpush1.msra.mxu0 %v672
        %779 = vmatprep.subr.mxu0 %v677
        %780 = vmatpush1.msra.mxu0 %v676
        %781 = vmatprep.subr.mxu0 %v681
        %782 = vmatpush1.msra.mxu0 %v680
        %783 = vmatprep.subr.mxu0 %v685
        %784 = vmatpush1.msra.mxu0 %v684
        %785 = vmatprep.subr.mxu0 %v689
        %786 = vmatpush1.msra.mxu0 %v688
        %787 = vmatprep.subr.mxu0 %v693
        %788 = vmatpush1.msra.mxu0 %v692
        %789 = vmatprep.subr.mxu0 0.0
        %790 = vmatpush1.msra.mxu0 0.0
        %791 = vmatprep.subr.mxu0 0.0
        %792 = vmatpush1.msra.mxu0 0.0
        %793 = vmatprep.subr.mxu0 0.0
        %794 = vmatpush1.msra.mxu0 0.0
        %795 = vmatprep.subr.mxu0 0.0
        %796 = vmatpush1.msra.mxu0 0.0
        %797 = vmatprep.subr.mxu0 0.0
        %798 = vmatpush1.msra.mxu0 0.0
        %799 = vmatprep.subr.mxu0 0.0
        %800 = vmatpush1.msra.mxu0 0.0
        %801 = vmatprep.subr.mxu0 0.0
        %802 = vmatpush1.msra.mxu0 0.0
        %803 = vmatprep.subr.mxu0 0.0
        %804 = vmatpush1.msra.mxu0 0.0
        %805 = vmatprep.subr.mxu0 0.0
        %806 = vmatpush1.msra.mxu0 0.0
        %807 = vmatprep.subr.mxu0 0.0
        %808 = vmatpush1.msra.mxu0 0.0
        %809 = vmatprep.subr.mxu0 0.0
        %810 = vmatpush1.msra.mxu0 0.0
        %811 = vmatprep.subr.mxu0 0.0
        %812 = vmatpush1.msra.mxu0 0.0
        %813 = vmatprep.subr.mxu0 0.0
        %814 = vmatpush1.msra.mxu0 0.0
        %815 = vmatprep.subr.mxu0 0.0
        %816 = vmatpush1.msra.mxu0 0.0
        %817 = vmatprep.subr.mxu0 0.0
        %818 = vmatpush1.msra.mxu0 0.0
        %819 = vmatprep.subr.mxu0 0.0
        %820 = vmatpush1.msra.mxu0 0.0
        %821 = vmatprep.subr.mxu0 0.0
        %822 = vmatpush1.msra.mxu0 0.0
        %823 = vmatprep.subr.mxu0 0.0
        %824 = vmatpush1.msra.mxu0 0.0
        %825 = vmatprep.subr.mxu0 0.0
        %826 = vmatpush1.msra.mxu0 0.0
        %827 = vmatprep.subr.mxu0 0.0
        %828 = vmatpush1.msra.mxu0 0.0
        %829 = vmatprep.subr.mxu0 0.0
        %830 = vmatpush1.msra.mxu0 0.0
        %831 = vmatprep.subr.mxu0 0.0
        %832 = vmatpush1.msra.mxu0 0.0
        %833 = vmatprep.mubr.f32.mxu0 0.0
        %834 = vmatmul.mubr.f32.gmra.mrb[0].mxu0 %v696
        %v835 = vpop.f32.mrb[0].mxu0
        %v836 = vadd.f32 0.0, %v835
        %v837 = vpop.f32.mrb[0].mxu0
        %v838 = vadd.f32 0.0, %v837
        %839 = vdwg.mxu0
        %v840 = vmax.f32 %v765, 0.0
        %v841 = vmax.f32 %v767, 0.0
        %v842 = vmax.f32 %v836, 0.0
        %v843 = vmax.f32 %v838, 0.0
        %v844 = vld [vmem:[#allocation10] sm:$0xff]
        %845 = vrot.lane.b32.xlu0 %v840, 17
        %v846 = vpop.permute.xlu0 %845
        %847 = vrot.lane.b32.xlu0 %v841, 17
        %v848 = vpop.permute.xlu0 %847
        %849 = vrot.lane.b32.xlu0 %v842, 17
        %v850 = vpop.permute.xlu0 %849
        %851 = vrot.lane.b32.xlu0 %v843, 17
        %v852 = vpop.permute.xlu0 %851
        %v853 = vsel %vm307, %v850, %v852
        %v854 = vsel %vm307, %v848, %v850
        %v855 = vsel %vm307, %v846, %v848
        %v856 = vsel %vm307, %v852, %v846
        %v857 = vld [vmem:[#allocation7] ss:$8 sm:$0xf]
        %v859 = vlaneseq
        %v860 = vshrl.u32 %v859, 7
        %v861 = vsub.s32 0, %v860
        %v862 = vrot.slane %v857, %v861
        %v863 = vlaneseq
        %v864 = vshrl.u32 %v863, 7
        %v865 = vsub.s32 1, %v864
        %v866 = vrot.slane %v857, %v865
        %v867 = vlaneseq
        %v868 = vshrl.u32 %v867, 7
        %v869 = vsub.s32 2, %v868
        %v870 = vrot.slane %v857, %v869
        %v871 = vlaneseq
        %v872 = vshrl.u32 %v871, 7
        %v873 = vsub.s32 3, %v872
        %v874 = vrot.slane %v857, %v873
        %v879 = vmul.f32 %v856, %v862
        %v880 = vmul.f32 %v855, %v866
        %v881 = vmul.f32 %v854, %v870
        %v882 = vmul.f32 %v853, %v874
        %883 = vst [vmem:[#allocation2] sm:$0xff] %v879
        %884 = vst [vmem:[#allocation2 + $0x8] sm:$0xff] %v880
        %885 = vst [vmem:[#allocation2 + $0x10] sm:$0xff] %v881
        %886 = vst [vmem:[#allocation2 + $0x18] sm:$0xff] %v882
        %887 = vrot.lane.b32.xlu0 %v840, 16
        %v888 = vpop.permute.xlu0 %887
        %889 = vrot.lane.b32.xlu0 %v841, 16
        %v890 = vpop.permute.xlu0 %889
        %891 = vrot.lane.b32.xlu0 %v842, 16
        %v892 = vpop.permute.xlu0 %891
        %893 = vrot.lane.b32.xlu0 %v843, 16
        %v894 = vpop.permute.xlu0 %893
        %v895 = vsel %vm350, %v892, %v894
        %v896 = vsel %vm350, %v890, %v892
        %v897 = vsel %vm350, %v888, %v890
        %v898 = vsel %vm350, %v894, %v888
        %v899 = vld [vmem:[%s355] ss:$8 sm:$0xf]
        %v901 = vlaneseq
        %v902 = vshrl.u32 %v901, 7
        %v903 = vsub.s32 0, %v902
        %v904 = vrot.slane %v899, %v903
        %v905 = vlaneseq
        %v906 = vshrl.u32 %v905, 7
        %v907 = vsub.s32 1, %v906
        %v908 = vrot.slane %v899, %v907
        %v909 = vlaneseq
        %v910 = vshrl.u32 %v909, 7
        %v911 = vsub.s32 2, %v910
        %v912 = vrot.slane %v899, %v911
        %v913 = vlaneseq
        %v914 = vshrl.u32 %v913, 7
        %v915 = vsub.s32 3, %v914
        %v916 = vrot.slane %v899, %v915
        %v921 = vmul.f32 %v898, %v904
        %v922 = vmul.f32 %v897, %v908
        %v923 = vmul.f32 %v896, %v912
        %v924 = vmul.f32 %v895, %v916
        %925 = vst [vmem:[#allocation2 + $0x20] sm:$0xff] %v921
        %926 = vst [vmem:[#allocation2 + $0x28] sm:$0xff] %v922
        %927 = vst [vmem:[#allocation2 + $0x30] sm:$0xff] %v923
        %928 = vst [vmem:[#allocation2 + $0x38] sm:$0xff] %v924
        %929 = vrot.lane.b32.xlu0 %v840, 15
        %v930 = vpop.permute.xlu0 %929
        %931 = vrot.lane.b32.xlu0 %v841, 15
        %v932 = vpop.permute.xlu0 %931
        %933 = vrot.lane.b32.xlu0 %v842, 15
        %v934 = vpop.permute.xlu0 %933
        %935 = vrot.lane.b32.xlu0 %v843, 15
        %v936 = vpop.permute.xlu0 %935
        %v937 = vsel %vm394, %v934, %v936
        %v938 = vsel %vm394, %v932, %v934
        %v939 = vsel %vm394, %v930, %v932
        %v940 = vsel %vm394, %v936, %v930
        %v941 = vld [vmem:[%s399] ss:$8 sm:$0xf]
        %v943 = vlaneseq
        %v944 = vshrl.u32 %v943, 7
        %v945 = vsub.s32 0, %v944
        %v946 = vrot.slane %v941, %v945
        %v947 = vlaneseq
        %v948 = vshrl.u32 %v947, 7
        %v949 = vsub.s32 1, %v948
        %v950 = vrot.slane %v941, %v949
        %v951 = vlaneseq
        %v952 = vshrl.u32 %v951, 7
        %v953 = vsub.s32 2, %v952
        %v954 = vrot.slane %v941, %v953
        %v955 = vlaneseq
        %v956 = vshrl.u32 %v955, 7
        %v957 = vsub.s32 3, %v956
        %v958 = vrot.slane %v941, %v957
        %v963 = vmul.f32 %v940, %v946
        %v964 = vmul.f32 %v939, %v950
        %v965 = vmul.f32 %v938, %v954
        %v966 = vmul.f32 %v937, %v958
        %967 = vst [vmem:[#allocation2 + $0x40] sm:$0xff] %v963
        %968 = vst [vmem:[#allocation2 + $0x48] sm:$0xff] %v964
        %969 = vst [vmem:[#allocation2 + $0x50] sm:$0xff] %v965
        %970 = vst [vmem:[#allocation2 + $0x58] sm:$0xff] %v966
        %971 = vrot.lane.b32.xlu0 %v840, 1
        %v972 = vpop.permute.xlu0 %971
        %973 = vrot.lane.b32.xlu0 %v841, 1
        %v974 = vpop.permute.xlu0 %973
        %975 = vrot.lane.b32.xlu0 %v842, 1
        %v976 = vpop.permute.xlu0 %975
        %977 = vrot.lane.b32.xlu0 %v843, 1
        %v978 = vpop.permute.xlu0 %977
        %v979 = vsel %vm438, %v976, %v978
        %v980 = vsel %vm438, %v974, %v976
        %v981 = vsel %vm438, %v972, %v974
        %v982 = vsel %vm438, %v978, %v972
        %v983 = vld [vmem:[%s443] ss:$8 sm:$0xf]
        %v985 = vlaneseq
        %v986 = vshrl.u32 %v985, 7
        %v987 = vsub.s32 0, %v986
        %v988 = vrot.slane %v983, %v987
        %v989 = vlaneseq
        %v990 = vshrl.u32 %v989, 7
        %v991 = vsub.s32 1, %v990
        %v992 = vrot.slane %v983, %v991
        %v993 = vlaneseq
        %v994 = vshrl.u32 %v993, 7
        %v995 = vsub.s32 2, %v994
        %v996 = vrot.slane %v983, %v995
        %v997 = vlaneseq
        %v998 = vshrl.u32 %v997, 7
        %v999 = vsub.s32 3, %v998
        %v1000 = vrot.slane %v983, %v999
        %v1005 = vmul.f32 %v982, %v988
        %v1006 = vmul.f32 %v981, %v992
        %v1007 = vmul.f32 %v980, %v996
        %v1008 = vmul.f32 %v979, %v1000
        %1009 = vst [vmem:[#allocation2 + $0x60] sm:$0xff] %v1005
        %1010 = vst [vmem:[#allocation2 + $0x68] sm:$0xff] %v1006
        %1011 = vst [vmem:[#allocation2 + $0x70] sm:$0xff] %v1007
        %1012 = vst [vmem:[#allocation2 + $0x78] sm:$0xff] %v1008
        %1013 = vst [vmem:[#allocation2 + $0x80] sm:$0xff] %v840
        %1014 = vst [vmem:[#allocation2 + $0x88] sm:$0xff] %v841
        %1015 = vst [vmem:[#allocation2 + $0x90] sm:$0xff] %v842
        %1016 = vst [vmem:[#allocation2 + $0x98] sm:$0xff] %v843
        %1017 = vrot.lane.b32.xlu0 %v840, 127
        %v1018 = vpop.permute.xlu0 %1017
        %1019 = vrot.lane.b32.xlu0 %v841, 127
        %v1020 = vpop.permute.xlu0 %1019
        %1021 = vrot.lane.b32.xlu0 %v842, 127
        %v1022 = vpop.permute.xlu0 %1021
        %1023 = vrot.lane.b32.xlu0 %v843, 127
        %v1024 = vpop.permute.xlu0 %1023
        %v1025 = vsel %vm486, %v1022, %v1024
        %v1026 = vsel %vm486, %v1020, %v1022
        %v1027 = vsel %vm486, %v1018, %v1020
        %v1028 = vsel %vm486, %v1024, %v1018
        %v1029 = vld [vmem:[%s491] ss:$8 sm:$0xf]
        %v1031 = vlaneseq
        %v1032 = vshrl.u32 %v1031, 7
        %v1033 = vsub.s32 0, %v1032
        %v1034 = vrot.slane %v1029, %v1033
        %v1035 = vlaneseq
        %v1036 = vshrl.u32 %v1035, 7
        %v1037 = vsub.s32 1, %v1036
        %v1038 = vrot.slane %v1029, %v1037
        %v1039 = vlaneseq
        %v1040 = vshrl.u32 %v1039, 7
        %v1041 = vsub.s32 2, %v1040
        %v1042 = vrot.slane %v1029, %v1041
        %v1043 = vlaneseq
        %v1044 = vshrl.u32 %v1043, 7
        %v1045 = vsub.s32 3, %v1044
        %v1046 = vrot.slane %v1029, %v1045
        %v1051 = vmul.f32 %v1027, %v1034
        %v1052 = vmul.f32 %v1026, %v1038
        %v1053 = vmul.f32 %v1025, %v1042
        %v1054 = vmul.f32 %v1028, %v1046
        %1055 = vst [vmem:[#allocation2 + $0xa0] sm:$0xff] %v1051
        %1056 = vst [vmem:[#allocation2 + $0xa8] sm:$0xff] %v1052
        %1057 = vst [vmem:[#allocation2 + $0xb0] sm:$0xff] %v1053
        %1058 = vst [vmem:[#allocation2 + $0xb8] sm:$0xff] %v1054
        %1059 = vrot.lane.b32.xlu0 %v840, 113
        %v1060 = vpop.permute.xlu0 %1059
        %1061 = vrot.lane.b32.xlu0 %v841, 113
        %v1062 = vpop.permute.xlu0 %1061
        %1063 = vrot.lane.b32.xlu0 %v842, 113
        %v1064 = vpop.permute.xlu0 %1063
        %1065 = vrot.lane.b32.xlu0 %v843, 113
        %v1066 = vpop.permute.xlu0 %1065
        %v1067 = vsel %vm530, %v1064, %v1066
        %v1068 = vsel %vm530, %v1062, %v1064
        %v1069 = vsel %vm530, %v1060, %v1062
        %v1070 = vsel %vm530, %v1066, %v1060
        %v1071 = vld [vmem:[%s535] ss:$8 sm:$0xf]
        %v1073 = vlaneseq
        %v1074 = vshrl.u32 %v1073, 7
        %v1075 = vsub.s32 0, %v1074
        %v1076 = vrot.slane %v1071, %v1075
        %v1077 = vlaneseq
        %v1078 = vshrl.u32 %v1077, 7
        %v1079 = vsub.s32 1, %v1078
        %v1080 = vrot.slane %v1071, %v1079
        %v1081 = vlaneseq
        %v1082 = vshrl.u32 %v1081, 7
        %v1083 = vsub.s32 2, %v1082
        %v1084 = vrot.slane %v1071, %v1083
        %v1085 = vlaneseq
        %v1086 = vshrl.u32 %v1085, 7
        %v1087 = vsub.s32 3, %v1086
        %v1088 = vrot.slane %v1071, %v1087
        %v1093 = vmul.f32 %v1069, %v1076
        %v1094 = vmul.f32 %v1068, %v1080
        %v1095 = vmul.f32 %v1067, %v1084
        %v1096 = vmul.f32 %v1070, %v1088
        %1097 = vst [vmem:[#allocation2 + $0xc0] sm:$0xff] %v1093
        %1098 = vst [vmem:[#allocation2 + $0xc8] sm:$0xff] %v1094
        %1099 = vst [vmem:[#allocation2 + $0xd0] sm:$0xff] %v1095
        %1100 = vst [vmem:[#allocation2 + $0xd8] sm:$0xff] %v1096
        %1101 = vrot.lane.b32.xlu0 %v840, 112
        %v1102 = vpop.permute.xlu0 %1101
        %1103 = vrot.lane.b32.xlu0 %v841, 112
        %v1104 = vpop.permute.xlu0 %1103
        %1105 = vrot.lane.b32.xlu0 %v842, 112
        %v1106 = vpop.permute.xlu0 %1105
        %1107 = vrot.lane.b32.xlu0 %v843, 112
        %v1108 = vpop.permute.xlu0 %1107
        %v1109 = vsel %vm574, %v1106, %v1108
        %v1110 = vsel %vm574, %v1104, %v1106
        %v1111 = vsel %vm574, %v1102, %v1104
        %v1112 = vsel %vm574, %v1108, %v1102
        %v1113 = vld [vmem:[%s579] ss:$8 sm:$0xf]
        %v1115 = vlaneseq
        %v1116 = vshrl.u32 %v1115, 7
        %v1117 = vsub.s32 0, %v1116
        %v1118 = vrot.slane %v1113, %v1117
        %v1119 = vlaneseq
        %v1120 = vshrl.u32 %v1119, 7
        %v1121 = vsub.s32 1, %v1120
        %v1122 = vrot.slane %v1113, %v1121
        %v1123 = vlaneseq
        %v1124 = vshrl.u32 %v1123, 7
        %v1125 = vsub.s32 2, %v1124
        %v1126 = vrot.slane %v1113, %v1125
        %v1127 = vlaneseq
        %v1128 = vshrl.u32 %v1127, 7
        %v1129 = vsub.s32 3, %v1128
        %v1130 = vrot.slane %v1113, %v1129
        %v1135 = vmul.f32 %v1111, %v1118
        %v1136 = vmul.f32 %v1110, %v1122
        %v1137 = vmul.f32 %v1109, %v1126
        %v1138 = vmul.f32 %v1112, %v1130
        %1139 = vst [vmem:[#allocation2 + $0xe0] sm:$0xff] %v1135
        %1140 = vst [vmem:[#allocation2 + $0xe8] sm:$0xff] %v1136
        %1141 = vst [vmem:[#allocation2 + $0xf0] sm:$0xff] %v1137
        %1142 = vst [vmem:[#allocation2 + $0xf8] sm:$0xff] %v1138
        %1143 = vrot.lane.b32.xlu0 %v840, 111
        %v1144 = vpop.permute.xlu0 %1143
        %1145 = vrot.lane.b32.xlu0 %v841, 111
        %v1146 = vpop.permute.xlu0 %1145
        %1147 = vrot.lane.b32.xlu0 %v842, 111
        %v1148 = vpop.permute.xlu0 %1147
        %1149 = vrot.lane.b32.xlu0 %v843, 111
        %v1150 = vpop.permute.xlu0 %1149
        %v1151 = vsel %vm618, %v1148, %v1150
        %v1152 = vsel %vm618, %v1146, %v1148
        %v1153 = vsel %vm618, %v1144, %v1146
        %v1154 = vsel %vm618, %v1150, %v1144
        %v1155 = vld [vmem:[%s623] ss:$8 sm:$0xf]
        %v1157 = vlaneseq
        %v1158 = vshrl.u32 %v1157, 7
        %v1159 = vsub.s32 0, %v1158
        %v1160 = vrot.slane %v1155, %v1159
        %v1161 = vlaneseq
        %v1162 = vshrl.u32 %v1161, 7
        %v1163 = vsub.s32 1, %v1162
        %v1164 = vrot.slane %v1155, %v1163
        %v1165 = vlaneseq
        %v1166 = vshrl.u32 %v1165, 7
        %v1167 = vsub.s32 2, %v1166
        %v1168 = vrot.slane %v1155, %v1167
        %v1169 = vlaneseq
        %v1170 = vshrl.u32 %v1169, 7
        %v1171 = vsub.s32 3, %v1170
        %v1172 = vrot.slane %v1155, %v1171
        %v1177 = vmul.f32 %v1153, %v1160
        %v1178 = vmul.f32 %v1152, %v1164
        %v1179 = vmul.f32 %v1151, %v1168
        %v1180 = vmul.f32 %v1154, %v1172
        %1181 = vst [vmem:[#allocation2 + $0x100] sm:$0xff] %v1177
        %1182 = vst [vmem:[#allocation2 + $0x108] sm:$0xff] %v1178
        %1183 = vst [vmem:[#allocation2 + $0x110] sm:$0xff] %v1179
        %1184 = vst [vmem:[#allocation2 + $0x118] sm:$0xff] %v1180
        %v1185 = vld [vmem:[#allocation2] sm:$0xff]
        %v1186 = vld [vmem:[#allocation2 + $0x8] sm:$0xff]
        %v1187 = vld [vmem:[#allocation2 + $0x10] sm:$0xff]
        %v1188 = vld [vmem:[#allocation2 + $0x18] sm:$0xff]
        %v1189 = vld [vmem:[#allocation2 + $0x20] sm:$0xff]
        %v1190 = vld [vmem:[#allocation2 + $0x28] sm:$0xff]
        %v1191 = vld [vmem:[#allocation2 + $0x30] sm:$0xff]
        %v1192 = vld [vmem:[#allocation2 + $0x38] sm:$0xff]
        %v1193 = vld [vmem:[#allocation2 + $0x40] sm:$0xff]
        %v1194 = vld [vmem:[#allocation2 + $0x48] sm:$0xff]
        %v1195 = vld [vmem:[#allocation2 + $0x50] sm:$0xff]
        %v1196 = vld [vmem:[#allocation2 + $0x58] sm:$0xff]
        %v1197 = vld [vmem:[#allocation2 + $0x60] sm:$0xff]
        %v1198 = vld [vmem:[#allocation2 + $0x68] sm:$0xff]
        %v1199 = vld [vmem:[#allocation2 + $0x70] sm:$0xff]
        %v1200 = vld [vmem:[#allocation2 + $0x78] sm:$0xff]
        %v1201 = vld [vmem:[#allocation2 + $0x80] sm:$0xff]
        %v1202 = vld [vmem:[#allocation2 + $0x88] sm:$0xff]
        %v1203 = vld [vmem:[#allocation2 + $0x90] sm:$0xff]
        %v1204 = vld [vmem:[#allocation2 + $0x98] sm:$0xff]
        %v1205 = vld [vmem:[#allocation2 + $0xa0] sm:$0xff]
        %v1206 = vld [vmem:[#allocation2 + $0xa8] sm:$0xff]
        %v1207 = vld [vmem:[#allocation2 + $0xb0] sm:$0xff]
        %v1208 = vld [vmem:[#allocation2 + $0xb8] sm:$0xff]
        %v1209 = vld [vmem:[#allocation2 + $0xc0] sm:$0xff]
        %v1210 = vld [vmem:[#allocation2 + $0xc8] sm:$0xff]
        %v1211 = vld [vmem:[#allocation2 + $0xd0] sm:$0xff]
        %v1212 = vld [vmem:[#allocation2 + $0xd8] sm:$0xff]
        %v1213 = vld [vmem:[#allocation2 + $0xe0] sm:$0xff]
        %v1214 = vld [vmem:[#allocation2 + $0xe8] sm:$0xff]
        %v1215 = vld [vmem:[#allocation2 + $0xf0] sm:$0xff]
        %v1216 = vld [vmem:[#allocation2 + $0xf8] sm:$0xff]
        %v1217 = vld [vmem:[#allocation2 + $0x100] sm:$0xff]
        %v1218 = vld [vmem:[#allocation2 + $0x108] sm:$0xff]
        %v1219 = vld [vmem:[#allocation2 + $0x110] sm:$0xff]
        %v1220 = vld [vmem:[#allocation2 + $0x118] sm:$0xff]
        %v1221 = vld [vmem:[#allocation2 + $0x120] sm:$0xff]
        %v1222 = vld [vmem:[#allocation2 + $0x128] sm:$0xff]
        %v1223 = vld [vmem:[#allocation2 + $0x130] sm:$0xff]
        %v1224 = vld [vmem:[#allocation2 + $0x138] sm:$0xff]
        %v1226 = vsel %vm694, %v844, 0
        %1228 = vmatprep.subr.mxu0 %v1186
        %1229 = vmatpush1.msra.mxu0 %v1185
        %1230 = vmatprep.subr.mxu0 %v1190
        %1231 = vmatpush1.msra.mxu0 %v1189
        %1232 = vmatprep.subr.mxu0 %v1194
        %1233 = vmatpush1.msra.mxu0 %v1193
        %1234 = vmatprep.subr.mxu0 %v1198
        %1235 = vmatpush1.msra.mxu0 %v1197
        %1236 = vmatprep.subr.mxu0 %v1202
        %1237 = vmatpush1.msra.mxu0 %v1201
        %1238 = vmatprep.subr.mxu0 %v1206
        %1239 = vmatpush1.msra.mxu0 %v1205
        %1240 = vmatprep.subr.mxu0 %v1210
        %1241 = vmatpush1.msra.mxu0 %v1209
        %1242 = vmatprep.subr.mxu0 %v1214
        %1243 = vmatpush1.msra.mxu0 %v1213
        %1244 = vmatprep.subr.mxu0 %v1218
        %1245 = vmatpush1.msra.mxu0 %v1217
        %1246 = vmatprep.subr.mxu0 %v1222
        %1247 = vmatpush1.msra.mxu0 %v1221
        %1248 = vmatprep.subr.mxu0 0.0
        %1249 = vmatpush1.msra.mxu0 0.0
        %1250 = vmatprep.subr.mxu0 0.0
        %1251 = vmatpush1.msra.mxu0 0.0
        %1252 = vmatprep.subr.mxu0 0.0
        %1253 = vmatpush1.msra.mxu0 0.0
        %1254 = vmatprep.subr.mxu0 0.0
        %1255 = vmatpush1.msra.mxu0 0.0
        %1256 = vmatprep.subr.mxu0 0.0
        %1257 = vmatpush1.msra.mxu0 0.0
        %1258 = vmatprep.subr.mxu0 0.0
        %1259 = vmatpush1.msra.mxu0 0.0
        %1260 = vmatprep.subr.mxu0 0.0
        %1261 = vmatpush1.msra.mxu0 0.0
        %1262 = vmatprep.subr.mxu0 0.0
        %1263 = vmatpush1.msra.mxu0 0.0
        %1264 = vmatprep.subr.mxu0 0.0
        %1265 = vmatpush1.msra.mxu0 0.0
        %1266 = vmatprep.subr.mxu0 0.0
        %1267 = vmatpush1.msra.mxu0 0.0
        %1268 = vmatprep.subr.mxu0 0.0
        %1269 = vmatpush1.msra.mxu0 0.0
        %1270 = vmatprep.subr.mxu0 0.0
        %1271 = vmatpush1.msra.mxu0 0.0
        %1272 = vmatprep.subr.mxu0 0.0
        %1273 = vmatpush1.msra.mxu0 0.0
        %1274 = vmatprep.subr.mxu0 0.0
        %1275 = vmatpush1.msra.mxu0 0.0
        %1276 = vmatprep.subr.mxu0 0.0
        %1277 = vmatpush1.msra.mxu0 0.0
        %1278 = vmatprep.subr.mxu0 0.0
        %1279 = vmatpush1.msra.mxu0 0.0
        %1280 = vmatprep.subr.mxu0 0.0
        %1281 = vmatpush1.msra.mxu0 0.0
        %1282 = vmatprep.subr.mxu0 0.0
        %1283 = vmatpush1.msra.mxu0 0.0
        %1284 = vmatprep.subr.mxu0 0.0
        %1285 = vmatpush1.msra.mxu0 0.0
        %1286 = vmatprep.subr.mxu0 0.0
        %1287 = vmatpush1.msra.mxu0 0.0
        %1288 = vmatprep.subr.mxu0 0.0
        %1289 = vmatpush1.msra.mxu0 0.0
        %1290 = vmatprep.subr.mxu0 0.0
        %1291 = vmatpush1.msra.mxu0 0.0
        %1292 = vmatprep.mubr.f32.mxu0 0.0
        %1293 = vmatmul.mubr.f32.gmra.mrb[0].mxu0 %v1226
        %v1294 = vpop.f32.mrb[0].mxu0
        %v1295 = vadd.f32 %v292, %v1294
        %v1296 = vpop.f32.mrb[0].mxu0
        %v1297 = vadd.f32 %v293, %v1296
        %1298 = vdwg.mxu0
        %1299 = vmatprep.subr.mxu0 %v1188
        %1300 = vmatpush1.msra.mxu0 %v1187
        %1301 = vmatprep.subr.mxu0 %v1192
        %1302 = vmatpush1.msra.mxu0 %v1191
        %1303 = vmatprep.subr.mxu0 %v1196
        %1304 = vmatpush1.msra.mxu0 %v1195
        %1305 = vmatprep.subr.mxu0 %v1200
        %1306 = vmatpush1.msra.mxu0 %v1199
        %1307 = vmatprep.subr.mxu0 %v1204
        %1308 = vmatpush1.msra.mxu0 %v1203
        %1309 = vmatprep.subr.mxu0 %v1208
        %1310 = vmatpush1.msra.mxu0 %v1207
        %1311 = vmatprep.subr.mxu0 %v1212
        %1312 = vmatpush1.msra.mxu0 %v1211
        %1313 = vmatprep.subr.mxu0 %v1216
        %1314 = vmatpush1.msra.mxu0 %v1215
        %1315 = vmatprep.subr.mxu0 %v1220
        %1316 = vmatpush1.msra.mxu0 %v1219
        %1317 = vmatprep.subr.mxu0 %v1224
        %1318 = vmatpush1.msra.mxu0 %v1223
        %1319 = vmatprep.subr.mxu0 0.0
        %1320 = vmatpush1.msra.mxu0 0.0
        %1321 = vmatprep.subr.mxu0 0.0
        %1322 = vmatpush1.msra.mxu0 0.0
        %1323 = vmatprep.subr.mxu0 0.0
        %1324 = vmatpush1.msra.mxu0 0.0
        %1325 = vmatprep.subr.mxu0 0.0
        %1326 = vmatpush1.msra.mxu0 0.0
        %1327 = vmatprep.subr.mxu0 0.0
        %1328 = vmatpush1.msra.mxu0 0.0
        %1329 = vmatprep.subr.mxu0 0.0
        %1330 = vmatpush1.msra.mxu0 0.0
        %1331 = vmatprep.subr.mxu0 0.0
        %1332 = vmatpush1.msra.mxu0 0.0
        %1333 = vmatprep.subr.mxu0 0.0
        %1334 = vmatpush1.msra.mxu0 0.0
        %1335 = vmatprep.subr.mxu0 0.0
        %1336 = vmatpush1.msra.mxu0 0.0
        %1337 = vmatprep.subr.mxu0 0.0
        %1338 = vmatpush1.msra.mxu0 0.0
        %1339 = vmatprep.subr.mxu0 0.0
        %1340 = vmatpush1.msra.mxu0 0.0
        %1341 = vmatprep.subr.mxu0 0.0
        %1342 = vmatpush1.msra.mxu0 0.0
        %1343 = vmatprep.subr.mxu0 0.0
        %1344 = vmatpush1.msra.mxu0 0.0
        %1345 = vmatprep.subr.mxu0 0.0
        %1346 = vmatpush1.msra.mxu0 0.0
        %1347 = vmatprep.subr.mxu0 0.0
        %1348 = vmatpush1.msra.mxu0 0.0
        %1349 = vmatprep.subr.mxu0 0.0
        %1350 = vmatpush1.msra.mxu0 0.0
        %1351 = vmatprep.subr.mxu0 0.0
        %1352 = vmatpush1.msra.mxu0 0.0
        %1353 = vmatprep.subr.mxu0 0.0
        %1354 = vmatpush1.msra.mxu0 0.0
        %1355 = vmatprep.subr.mxu0 0.0
        %1356 = vmatpush1.msra.mxu0 0.0
        %1357 = vmatprep.subr.mxu0 0.0
        %1358 = vmatpush1.msra.mxu0 0.0
        %1359 = vmatprep.subr.mxu0 0.0
        %1360 = vmatpush1.msra.mxu0 0.0
        %1361 = vmatprep.subr.mxu0 0.0
        %1362 = vmatpush1.msra.mxu0 0.0
        %1363 = vmatprep.mubr.f32.mxu0 0.0
        %1364 = vmatmul.mubr.f32.gmra.mrb[0].mxu0 %v1226
        %v1365 = vpop.f32.mrb[0].mxu0
        %v1366 = vadd.f32 %v294, %v1365
        %v1367 = vpop.f32.mrb[0].mxu0
        %v1368 = vadd.f32 %v295, %v1367
        %1369 = vdwg.mxu0
        %v1370 = vmax.f32 %v1295, 0.0
        %v1371 = vmax.f32 %v1297, 0.0
        %v1372 = vmax.f32 %v1366, 0.0
        %v1373 = vmax.f32 %v1368, 0.0
        %s1374 = scalar_lea.vmem [#allocation9], 8
        %v1375 = vld [vmem:[%s1374] sm:$0xff]
        %1376 = vrot.lane.b32.xlu0 %v1370, 17
        %v1377 = vpop.permute.xlu0 %1376
        %1378 = vrot.lane.b32.xlu0 %v1371, 17
        %v1379 = vpop.permute.xlu0 %1378
        %1380 = vrot.lane.b32.xlu0 %v1372, 17
        %v1381 = vpop.permute.xlu0 %1380
        %1382 = vrot.lane.b32.xlu0 %v1373, 17
        %v1383 = vpop.permute.xlu0 %1382
        %v1384 = vsel %vm307, %v1381, %v1383
        %v1385 = vsel %vm307, %v1379, %v1381
        %v1386 = vsel %vm307, %v1377, %v1379
        %v1387 = vsel %vm307, %v1383, %v1377
        %v1388 = vld [vmem:[#allocation7] ss:$8 sm:$0xf]
        %v1390 = vlaneseq
        %v1391 = vshrl.u32 %v1390, 7
        %v1392 = vsub.s32 0, %v1391
        %v1393 = vrot.slane %v1388, %v1392
        %v1394 = vlaneseq
        %v1395 = vshrl.u32 %v1394, 7
        %v1396 = vsub.s32 1, %v1395
        %v1397 = vrot.slane %v1388, %v1396
        %v1398 = vlaneseq
        %v1399 = vshrl.u32 %v1398, 7
        %v1400 = vsub.s32 2, %v1399
        %v1401 = vrot.slane %v1388, %v1400
        %v1402 = vlaneseq
        %v1403 = vshrl.u32 %v1402, 7
        %v1404 = vsub.s32 3, %v1403
        %v1405 = vrot.slane %v1388, %v1404
        %v1410 = vmul.f32 %v1387, %v1393
        %v1411 = vmul.f32 %v1386, %v1397
        %v1412 = vmul.f32 %v1385, %v1401
        %v1413 = vmul.f32 %v1384, %v1405
        %1414 = vst [vmem:[#allocation2] sm:$0xff] %v1410
        %1415 = vst [vmem:[#allocation2 + $0x8] sm:$0xff] %v1411
        %1416 = vst [vmem:[#allocation2 + $0x10] sm:$0xff] %v1412
        %1417 = vst [vmem:[#allocation2 + $0x18] sm:$0xff] %v1413
        %1418 = vrot.lane.b32.xlu0 %v1370, 16
        %v1419 = vpop.permute.xlu0 %1418
        %1420 = vrot.lane.b32.xlu0 %v1371, 16
        %v1421 = vpop.permute.xlu0 %1420
        %1422 = vrot.lane.b32.xlu0 %v1372, 16
        %v1423 = vpop.permute.xlu0 %1422
        %1424 = vrot.lane.b32.xlu0 %v1373, 16
        %v1425 = vpop.permute.xlu0 %1424
        %v1426 = vsel %vm350, %v1423, %v1425
        %v1427 = vsel %vm350, %v1421, %v1423
        %v1428 = vsel %vm350, %v1419, %v1421
        %v1429 = vsel %vm350, %v1425, %v1419
        %v1430 = vld [vmem:[%s355] ss:$8 sm:$0xf]
        %v1432 = vlaneseq
        %v1433 = vshrl.u32 %v1432, 7
        %v1434 = vsub.s32 0, %v1433
        %v1435 = vrot.slane %v1430, %v1434
        %v1436 = vlaneseq
        %v1437 = vshrl.u32 %v1436, 7
        %v1438 = vsub.s32 1, %v1437
        %v1439 = vrot.slane %v1430, %v1438
        %v1440 = vlaneseq
        %v1441 = vshrl.u32 %v1440, 7
        %v1442 = vsub.s32 2, %v1441
        %v1443 = vrot.slane %v1430, %v1442
        %v1444 = vlaneseq
        %v1445 = vshrl.u32 %v1444, 7
        %v1446 = vsub.s32 3, %v1445
        %v1447 = vrot.slane %v1430, %v1446
        %v1452 = vmul.f32 %v1429, %v1435
        %v1453 = vmul.f32 %v1428, %v1439
        %v1454 = vmul.f32 %v1427, %v1443
        %v1455 = vmul.f32 %v1426, %v1447
        %1456 = vst [vmem:[#allocation2 + $0x20] sm:$0xff] %v1452
        %1457 = vst [vmem:[#allocation2 + $0x28] sm:$0xff] %v1453
        %1458 = vst [vmem:[#allocation2 + $0x30] sm:$0xff] %v1454
        %1459 = vst [vmem:[#allocation2 + $0x38] sm:$0xff] %v1455
        %1460 = vrot.lane.b32.xlu0 %v1370, 15
        %v1461 = vpop.permute.xlu0 %1460
        %1462 = vrot.lane.b32.xlu0 %v1371, 15
        %v1463 = vpop.permute.xlu0 %1462
        %1464 = vrot.lane.b32.xlu0 %v1372, 15
        %v1465 = vpop.permute.xlu0 %1464
        %1466 = vrot.lane.b32.xlu0 %v1373, 15
        %v1467 = vpop.permute.xlu0 %1466
        %v1468 = vsel %vm394, %v1465, %v1467
        %v1469 = vsel %vm394, %v1463, %v1465
        %v1470 = vsel %vm394, %v1461, %v1463
        %v1471 = vsel %vm394, %v1467, %v1461
        %v1472 = vld [vmem:[%s399] ss:$8 sm:$0xf]
        %v1474 = vlaneseq
        %v1475 = vshrl.u32 %v1474, 7
        %v1476 = vsub.s32 0, %v1475
        %v1477 = vrot.slane %v1472, %v1476
        %v1478 = vlaneseq
        %v1479 = vshrl.u32 %v1478, 7
        %v1480 = vsub.s32 1, %v1479
        %v1481 = vrot.slane %v1472, %v1480
        %v1482 = vlaneseq
        %v1483 = vshrl.u32 %v1482, 7
        %v1484 = vsub.s32 2, %v1483
        %v1485 = vrot.slane %v1472, %v1484
        %v1486 = vlaneseq
        %v1487 = vshrl.u32 %v1486, 7
        %v1488 = vsub.s32 3, %v1487
        %v1489 = vrot.slane %v1472, %v1488
        %v1494 = vmul.f32 %v1471, %v1477
        %v1495 = vmul.f32 %v1470, %v1481
        %v1496 = vmul.f32 %v1469, %v1485
        %v1497 = vmul.f32 %v1468, %v1489
        %1498 = vst [vmem:[#allocation2 + $0x40] sm:$0xff] %v1494
        %1499 = vst [vmem:[#allocation2 + $0x48] sm:$0xff] %v1495
        %1500 = vst [vmem:[#allocation2 + $0x50] sm:$0xff] %v1496
        %1501 = vst [vmem:[#allocation2 + $0x58] sm:$0xff] %v1497
        %1502 = vrot.lane.b32.xlu0 %v1370, 1
        %v1503 = vpop.permute.xlu0 %1502
        %1504 = vrot.lane.b32.xlu0 %v1371, 1
        %v1505 = vpop.permute.xlu0 %1504
        %1506 = vrot.lane.b32.xlu0 %v1372, 1
        %v1507 = vpop.permute.xlu0 %1506
        %1508 = vrot.lane.b32.xlu0 %v1373, 1
        %v1509 = vpop.permute.xlu0 %1508
        %v1510 = vsel %vm438, %v1507, %v1509
        %v1511 = vsel %vm438, %v1505, %v1507
        %v1512 = vsel %vm438, %v1503, %v1505
        %v1513 = vsel %vm438, %v1509, %v1503
        %v1514 = vld [vmem:[%s443] ss:$8 sm:$0xf]
        %v1516 = vlaneseq
        %v1517 = vshrl.u32 %v1516, 7
        %v1518 = vsub.s32 0, %v1517
        %v1519 = vrot.slane %v1514, %v1518
        %v1520 = vlaneseq
        %v1521 = vshrl.u32 %v1520, 7
        %v1522 = vsub.s32 1, %v1521
        %v1523 = vrot.slane %v1514, %v1522
        %v1524 = vlaneseq
        %v1525 = vshrl.u32 %v1524, 7
        %v1526 = vsub.s32 2, %v1525
        %v1527 = vrot.slane %v1514, %v1526
        %v1528 = vlaneseq
        %v1529 = vshrl.u32 %v1528, 7
        %v1530 = vsub.s32 3, %v1529
        %v1531 = vrot.slane %v1514, %v1530
        %v1536 = vmul.f32 %v1513, %v1519
        %v1537 = vmul.f32 %v1512, %v1523
        %v1538 = vmul.f32 %v1511, %v1527
        %v1539 = vmul.f32 %v1510, %v1531
        %1540 = vst [vmem:[#allocation2 + $0x60] sm:$0xff] %v1536
        %1541 = vst [vmem:[#allocation2 + $0x68] sm:$0xff] %v1537
        %1542 = vst [vmem:[#allocation2 + $0x70] sm:$0xff] %v1538
        %1543 = vst [vmem:[#allocation2 + $0x78] sm:$0xff] %v1539
        %1544 = vst [vmem:[#allocation2 + $0x80] sm:$0xff] %v1370
        %1545 = vst [vmem:[#allocation2 + $0x88] sm:$0xff] %v1371
        %1546 = vst [vmem:[#allocation2 + $0x90] sm:$0xff] %v1372
        %1547 = vst [vmem:[#allocation2 + $0x98] sm:$0xff] %v1373
        %1548 = vrot.lane.b32.xlu0 %v1370, 127
        %v1549 = vpop.permute.xlu0 %1548
        %1550 = vrot.lane.b32.xlu0 %v1371, 127
        %v1551 = vpop.permute.xlu0 %1550
        %1552 = vrot.lane.b32.xlu0 %v1372, 127
        %v1553 = vpop.permute.xlu0 %1552
        %1554 = vrot.lane.b32.xlu0 %v1373, 127
        %v1555 = vpop.permute.xlu0 %1554
        %v1556 = vsel %vm486, %v1553, %v1555
        %v1557 = vsel %vm486, %v1551, %v1553
        %v1558 = vsel %vm486, %v1549, %v1551
        %v1559 = vsel %vm486, %v1555, %v1549
        %v1560 = vld [vmem:[%s491] ss:$8 sm:$0xf]
        %v1562 = vlaneseq
        %v1563 = vshrl.u32 %v1562, 7
        %v1564 = vsub.s32 0, %v1563
        %v1565 = vrot.slane %v1560, %v1564
        %v1566 = vlaneseq
        %v1567 = vshrl.u32 %v1566, 7
        %v1568 = vsub.s32 1, %v1567
        %v1569 = vrot.slane %v1560, %v1568
        %v1570 = vlaneseq
        %v1571 = vshrl.u32 %v1570, 7
        %v1572 = vsub.s32 2, %v1571
        %v1573 = vrot.slane %v1560, %v1572
        %v1574 = vlaneseq
        %v1575 = vshrl.u32 %v1574, 7
        %v1576 = vsub.s32 3, %v1575
        %v1577 = vrot.slane %v1560, %v1576
        %v1582 = vmul.f32 %v1558, %v1565
        %v1583 = vmul.f32 %v1557, %v1569
        %v1584 = vmul.f32 %v1556, %v1573
        %v1585 = vmul.f32 %v1559, %v1577
        %1586 = vst [vmem:[#allocation2 + $0xa0] sm:$0xff] %v1582
        %1587 = vst [vmem:[#allocation2 + $0xa8] sm:$0xff] %v1583
        %1588 = vst [vmem:[#allocation2 + $0xb0] sm:$0xff] %v1584
        %1589 = vst [vmem:[#allocation2 + $0xb8] sm:$0xff] %v1585
        %1590 = vrot.lane.b32.xlu0 %v1370, 113
        %v1591 = vpop.permute.xlu0 %1590
        %1592 = vrot.lane.b32.xlu0 %v1371, 113
        %v1593 = vpop.permute.xlu0 %1592
        %1594 = vrot.lane.b32.xlu0 %v1372, 113
        %v1595 = vpop.permute.xlu0 %1594
        %1596 = vrot.lane.b32.xlu0 %v1373, 113
        %v1597 = vpop.permute.xlu0 %1596
        %v1598 = vsel %vm530, %v1595, %v1597
        %v1599 = vsel %vm530, %v1593, %v1595
        %v1600 = vsel %vm530, %v1591, %v1593
        %v1601 = vsel %vm530, %v1597, %v1591
        %v1602 = vld [vmem:[%s535] ss:$8 sm:$0xf]
        %v1604 = vlaneseq
        %v1605 = vshrl.u32 %v1604, 7
        %v1606 = vsub.s32 0, %v1605
        %v1607 = vrot.slane %v1602, %v1606
        %v1608 = vlaneseq
        %v1609 = vshrl.u32 %v1608, 7
        %v1610 = vsub.s32 1, %v1609
        %v1611 = vrot.slane %v1602, %v1610
        %v1612 = vlaneseq
        %v1613 = vshrl.u32 %v1612, 7
        %v1614 = vsub.s32 2, %v1613
        %v1615 = vrot.slane %v1602, %v1614
        %v1616 = vlaneseq
        %v1617 = vshrl.u32 %v1616, 7
        %v1618 = vsub.s32 3, %v1617
        %v1619 = vrot.slane %v1602, %v1618
        %v1624 = vmul.f32 %v1600, %v1607
        %v1625 = vmul.f32 %v1599, %v1611
        %v1626 = vmul.f32 %v1598, %v1615
        %v1627 = vmul.f32 %v1601, %v1619
        %1628 = vst [vmem:[#allocation2 + $0xc0] sm:$0xff] %v1624
        %1629 = vst [vmem:[#allocation2 + $0xc8] sm:$0xff] %v1625
        %1630 = vst [vmem:[#allocation2 + $0xd0] sm:$0xff] %v1626
        %1631 = vst [vmem:[#allocation2 + $0xd8] sm:$0xff] %v1627
        %1632 = vrot.lane.b32.xlu0 %v1370, 112
        %v1633 = vpop.permute.xlu0 %1632
        %1634 = vrot.lane.b32.xlu0 %v1371, 112
        %v1635 = vpop.permute.xlu0 %1634
        %1636 = vrot.lane.b32.xlu0 %v1372, 112
        %v1637 = vpop.permute.xlu0 %1636
        %1638 = vrot.lane.b32.xlu0 %v1373, 112
        %v1639 = vpop.permute.xlu0 %1638
        %v1640 = vsel %vm574, %v1637, %v1639
        %v1641 = vsel %vm574, %v1635, %v1637
        %v1642 = vsel %vm574, %v1633, %v1635
        %v1643 = vsel %vm574, %v1639, %v1633
        %v1644 = vld [vmem:[%s579] ss:$8 sm:$0xf]
        %v1646 = vlaneseq
        %v1647 = vshrl.u32 %v1646, 7
        %v1648 = vsub.s32 0, %v1647
        %v1649 = vrot.slane %v1644, %v1648
        %v1650 = vlaneseq
        %v1651 = vshrl.u32 %v1650, 7
        %v1652 = vsub.s32 1, %v1651
        %v1653 = vrot.slane %v1644, %v1652
        %v1654 = vlaneseq
        %v1655 = vshrl.u32 %v1654, 7
        %v1656 = vsub.s32 2, %v1655
        %v1657 = vrot.slane %v1644, %v1656
        %v1658 = vlaneseq
        %v1659 = vshrl.u32 %v1658, 7
        %v1660 = vsub.s32 3, %v1659
        %v1661 = vrot.slane %v1644, %v1660
        %v1666 = vmul.f32 %v1642, %v1649
        %v1667 = vmul.f32 %v1641, %v1653
        %v1668 = vmul.f32 %v1640, %v1657
        %v1669 = vmul.f32 %v1643, %v1661
        %1670 = vst [vmem:[#allocation2 + $0xe0] sm:$0xff] %v1666
        %1671 = vst [vmem:[#allocation2 + $0xe8] sm:$0xff] %v1667
        %1672 = vst [vmem:[#allocation2 + $0xf0] sm:$0xff] %v1668
        %1673 = vst [vmem:[#allocation2 + $0xf8] sm:$0xff] %v1669
        %1674 = vrot.lane.b32.xlu0 %v1370, 111
        %v1675 = vpop.permute.xlu0 %1674
        %1676 = vrot.lane.b32.xlu0 %v1371, 111
        %v1677 = vpop.permute.xlu0 %1676
        %1678 = vrot.lane.b32.xlu0 %v1372, 111
        %v1679 = vpop.permute.xlu0 %1678
        %1680 = vrot.lane.b32.xlu0 %v1373, 111
        %v1681 = vpop.permute.xlu0 %1680
        %v1682 = vsel %vm618, %v1679, %v1681
        %v1683 = vsel %vm618, %v1677, %v1679
        %v1684 = vsel %vm618, %v1675, %v1677
        %v1685 = vsel %vm618, %v1681, %v1675
        %v1686 = vld [vmem:[%s623] ss:$8 sm:$0xf]
        %v1688 = vlaneseq
        %v1689 = vshrl.u32 %v1688, 7
        %v1690 = vsub.s32 0, %v1689
        %v1691 = vrot.slane %v1686, %v1690
        %v1692 = vlaneseq
        %v1693 = vshrl.u32 %v1692, 7
        %v1694 = vsub.s32 1, %v1693
        %v1695 = vrot.slane %v1686, %v1694
        %v1696 = vlaneseq
        %v1697 = vshrl.u32 %v1696, 7
        %v1698 = vsub.s32 2, %v1697
        %v1699 = vrot.slane %v1686, %v1698
        %v1700 = vlaneseq
        %v1701 = vshrl.u32 %v1700, 7
        %v1702 = vsub.s32 3, %v1701
        %v1703 = vrot.slane %v1686, %v1702
        %v1708 = vmul.f32 %v1684, %v1691
        %v1709 = vmul.f32 %v1683, %v1695
        %v1710 = vmul.f32 %v1682, %v1699
        %v1711 = vmul.f32 %v1685, %v1703
        %1712 = vst [vmem:[#allocation2 + $0x100] sm:$0xff] %v1708
        %1713 = vst [vmem:[#allocation2 + $0x108] sm:$0xff] %v1709
        %1714 = vst [vmem:[#allocation2 + $0x110] sm:$0xff] %v1710
        %1715 = vst [vmem:[#allocation2 + $0x118] sm:$0xff] %v1711
        %v1716 = vld [vmem:[#allocation2] sm:$0xff]
        %v1717 = vld [vmem:[#allocation2 + $0x8] sm:$0xff]
        %v1718 = vld [vmem:[#allocation2 + $0x10] sm:$0xff]
        %v1719 = vld [vmem:[#allocation2 + $0x18] sm:$0xff]
        %v1720 = vld [vmem:[#allocation2 + $0x20] sm:$0xff]
        %v1721 = vld [vmem:[#allocation2 + $0x28] sm:$0xff]
        %v1722 = vld [vmem:[#allocation2 + $0x30] sm:$0xff]
        %v1723 = vld [vmem:[#allocation2 + $0x38] sm:$0xff]
        %v1724 = vld [vmem:[#allocation2 + $0x40] sm:$0xff]
        %v1725 = vld [vmem:[#allocation2 + $0x48] sm:$0xff]
        %v1726 = vld [vmem:[#allocation2 + $0x50] sm:$0xff]
        %v1727 = vld [vmem:[#allocation2 + $0x58] sm:$0xff]
        %v1728 = vld [vmem:[#allocation2 + $0x60] sm:$0xff]
        %v1729 = vld [vmem:[#allocation2 + $0x68] sm:$0xff]
        %v1730 = vld [vmem:[#allocation2 + $0x70] sm:$0xff]
        %v1731 = vld [vmem:[#allocation2 + $0x78] sm:$0xff]
        %v1732 = vld [vmem:[#allocation2 + $0x80] sm:$0xff]
        %v1733 = vld [vmem:[#allocation2 + $0x88] sm:$0xff]
        %v1734 = vld [vmem:[#allocation2 + $0x90] sm:$0xff]
        %v1735 = vld [vmem:[#allocation2 + $0x98] sm:$0xff]
        %v1736 = vld [vmem:[#allocation2 + $0xa0] sm:$0xff]
        %v1737 = vld [vmem:[#allocation2 + $0xa8] sm:$0xff]
        %v1738 = vld [vmem:[#allocation2 + $0xb0] sm:$0xff]
        %v1739 = vld [vmem:[#allocation2 + $0xb8] sm:$0xff]
        %v1740 = vld [vmem:[#allocation2 + $0xc0] sm:$0xff]
        %v1741 = vld [vmem:[#allocation2 + $0xc8] sm:$0xff]
        %v1742 = vld [vmem:[#allocation2 + $0xd0] sm:$0xff]
        %v1743 = vld [vmem:[#allocation2 + $0xd8] sm:$0xff]
        %v1744 = vld [vmem:[#allocation2 + $0xe0] sm:$0xff]
        %v1745 = vld [vmem:[#allocation2 + $0xe8] sm:$0xff]
        %v1746 = vld [vmem:[#allocation2 + $0xf0] sm:$0xff]
        %v1747 = vld [vmem:[#allocation2 + $0xf8] sm:$0xff]
        %v1748 = vld [vmem:[#allocation2 + $0x100] sm:$0xff]
        %v1749 = vld [vmem:[#allocation2 + $0x108] sm:$0xff]
        %v1750 = vld [vmem:[#allocation2 + $0x110] sm:$0xff]
        %v1751 = vld [vmem:[#allocation2 + $0x118] sm:$0xff]
        %v1752 = vld [vmem:[#allocation2 + $0x120] sm:$0xff]
        %v1753 = vld [vmem:[#allocation2 + $0x128] sm:$0xff]
        %v1754 = vld [vmem:[#allocation2 + $0x130] sm:$0xff]
        %v1755 = vld [vmem:[#allocation2 + $0x138] sm:$0xff]
        %v1757 = vsel %vm694, %v1375, 0
        %1759 = vmatprep.subr.mxu0 %v1717
        %1760 = vmatpush1.msra.mxu0 %v1716
        %1761 = vmatprep.subr.mxu0 %v1721
        %1762 = vmatpush1.msra.mxu0 %v1720
        %1763 = vmatprep.subr.mxu0 %v1725
        %1764 = vmatpush1.msra.mxu0 %v1724
        %1765 = vmatprep.subr.mxu0 %v1729
        %1766 = vmatpush1.msra.mxu0 %v1728
        %1767 = vmatprep.subr.mxu0 %v1733
        %1768 = vmatpush1.msra.mxu0 %v1732
        %1769 = vmatprep.subr.mxu0 %v1737
        %1770 = vmatpush1.msra.mxu0 %v1736
        %1771 = vmatprep.subr.mxu0 %v1741
        %1772 = vmatpush1.msra.mxu0 %v1740
        %1773 = vmatprep.subr.mxu0 %v1745
        %1774 = vmatpush1.msra.mxu0 %v1744
        %1775 = vmatprep.subr.mxu0 %v1749
        %1776 = vmatpush1.msra.mxu0 %v1748
        %1777 = vmatprep.subr.mxu0 %v1753
        %1778 = vmatpush1.msra.mxu0 %v1752
        %1779 = vmatprep.subr.mxu0 0.0
        %1780 = vmatpush1.msra.mxu0 0.0
        %1781 = vmatprep.subr.mxu0 0.0
        %1782 = vmatpush1.msra.mxu0 0.0
        %1783 = vmatprep.subr.mxu0 0.0
        %1784 = vmatpush1.msra.mxu0 0.0
        %1785 = vmatprep.subr.mxu0 0.0
        %1786 = vmatpush1.msra.mxu0 0.0
        %1787 = vmatprep.subr.mxu0 0.0
        %1788 = vmatpush1.msra.mxu0 0.0
        %1789 = vmatprep.subr.mxu0 0.0
        %1790 = vmatpush1.msra.mxu0 0.0
        %1791 = vmatprep.subr.mxu0 0.0
        %1792 = vmatpush1.msra.mxu0 0.0
        %1793 = vmatprep.subr.mxu0 0.0
        %1794 = vmatpush1.msra.mxu0 0.0
        %1795 = vmatprep.subr.mxu0 0.0
        %1796 = vmatpush1.msra.mxu0 0.0
        %1797 = vmatprep.subr.mxu0 0.0
        %1798 = vmatpush1.msra.mxu0 0.0
        %1799 = vmatprep.subr.mxu0 0.0
        %1800 = vmatpush1.msra.mxu0 0.0
        %1801 = vmatprep.subr.mxu0 0.0
        %1802 = vmatpush1.msra.mxu0 0.0
        %1803 = vmatprep.subr.mxu0 0.0
        %1804 = vmatpush1.msra.mxu0 0.0
        %1805 = vmatprep.subr.mxu0 0.0
        %1806 = vmatpush1.msra.mxu0 0.0
        %1807 = vmatprep.subr.mxu0 0.0
        %1808 = vmatpush1.msra.mxu0 0.0
        %1809 = vmatprep.subr.mxu0 0.0
        %1810 = vmatpush1.msra.mxu0 0.0
        %1811 = vmatprep.subr.mxu0 0.0
        %1812 = vmatpush1.msra.mxu0 0.0
        %1813 = vmatprep.subr.mxu0 0.0
        %1814 = vmatpush1.msra.mxu0 0.0
        %1815 = vmatprep.subr.mxu0 0.0
        %1816 = vmatpush1.msra.mxu0 0.0
        %1817 = vmatprep.subr.mxu0 0.0
        %1818 = vmatpush1.msra.mxu0 0.0
        %1819 = vmatprep.subr.mxu0 0.0
        %1820 = vmatpush1.msra.mxu0 0.0
        %1821 = vmatprep.subr.mxu0 0.0
        %1822 = vmatpush1.msra.mxu0 0.0
        %1823 = vmatprep.mubr.f32.mxu0 0.0
        %1824 = vmatmul.mubr.f32.gmra.mrb[0].mxu0 %v1757
        %v1825 = vpop.f32.mrb[0].mxu0
        %v1826 = vadd.f32 0.0, %v1825
        %v1827 = vpop.f32.mrb[0].mxu0
        %v1828 = vadd.f32 0.0, %v1827
        %1829 = vdwg.mxu0
        %1830 = vmatprep.subr.mxu0 %v1719
        %1831 = vmatpush1.msra.mxu0 %v1718
        %1832 = vmatprep.subr.mxu0 %v1723
        %1833 = vmatpush1.msra.mxu0 %v1722
        %1834 = vmatprep.subr.mxu0 %v1727
        %1835 = vmatpush1.msra.mxu0 %v1726
        %1836 = vmatprep.subr.mxu0 %v1731
        %1837 = vmatpush1.msra.mxu0 %v1730
        %1838 = vmatprep.subr.mxu0 %v1735
        %1839 = vmatpush1.msra.mxu0 %v1734
        %1840 = vmatprep.subr.mxu0 %v1739
        %1841 = vmatpush1.msra.mxu0 %v1738
        %1842 = vmatprep.subr.mxu0 %v1743
        %1843 = vmatpush1.msra.mxu0 %v1742
        %1844 = vmatprep.subr.mxu0 %v1747
        %1845 = vmatpush1.msra.mxu0 %v1746
        %1846 = vmatprep.subr.mxu0 %v1751
        %1847 = vmatpush1.msra.mxu0 %v1750
        %1848 = vmatprep.subr.mxu0 %v1755
        %1849 = vmatpush1.msra.mxu0 %v1754
        %1850 = vmatprep.subr.mxu0 0.0
        %1851 = vmatpush1.msra.mxu0 0.0
        %1852 = vmatprep.subr.mxu0 0.0
        %1853 = vmatpush1.msra.mxu0 0.0
        %1854 = vmatprep.subr.mxu0 0.0
        %1855 = vmatpush1.msra.mxu0 0.0
        %1856 = vmatprep.subr.mxu0 0.0
        %1857 = vmatpush1.msra.mxu0 0.0
        %1858 = vmatprep.subr.mxu0 0.0
        %1859 = vmatpush1.msra.mxu0 0.0
        %1860 = vmatprep.subr.mxu0 0.0
        %1861 = vmatpush1.msra.mxu0 0.0
        %1862 = vmatprep.subr.mxu0 0.0
        %1863 = vmatpush1.msra.mxu0 0.0
        %1864 = vmatprep.subr.mxu0 0.0
        %1865 = vmatpush1.msra.mxu0 0.0
        %1866 = vmatprep.subr.mxu0 0.0
        %1867 = vmatpush1.msra.mxu0 0.0
        %1868 = vmatprep.subr.mxu0 0.0
        %1869 = vmatpush1.msra.mxu0 0.0
        %1870 = vmatprep.subr.mxu0 0.0
        %1871 = vmatpush1.msra.mxu0 0.0
        %1872 = vmatprep.subr.mxu0 0.0
        %1873 = vmatpush1.msra.mxu0 0.0
        %1874 = vmatprep.subr.mxu0 0.0
        %1875 = vmatpush1.msra.mxu0 0.0
        %1876 = vmatprep.subr.mxu0 0.0
        %1877 = vmatpush1.msra.mxu0 0.0
        %1878 = vmatprep.subr.mxu0 0.0
        %1879 = vmatpush1.msra.mxu0 0.0
        %1880 = vmatprep.subr.mxu0 0.0
        %1881 = vmatpush1.msra.mxu0 0.0
        %1882 = vmatprep.subr.mxu0 0.0
        %1883 = vmatpush1.msra.mxu0 0.0
        %1884 = vmatprep.subr.mxu0 0.0
        %1885 = vmatpush1.msra.mxu0 0.0
        %1886 = vmatprep.subr.mxu0 0.0
        %1887 = vmatpush1.msra.mxu0 0.0
        %1888 = vmatprep.subr.mxu0 0.0
        %1889 = vmatpush1.msra.mxu0 0.0
        %1890 = vmatprep.subr.mxu0 0.0
        %1891 = vmatpush1.msra.mxu0 0.0
        %1892 = vmatprep.subr.mxu0 0.0
        %1893 = vmatpush1.msra.mxu0 0.0
        %1894 = vmatprep.mubr.f32.mxu0 0.0
        %1895 = vmatmul.mubr.f32.gmra.mrb[0].mxu0 %v1757
        %v1896 = vpop.f32.mrb[0].mxu0
        %v1897 = vadd.f32 0.0, %v1896
        %v1898 = vpop.f32.mrb[0].mxu0
        %v1899 = vadd.f32 0.0, %v1898
        %1900 = vdwg.mxu0
        %v1901 = vmax.f32 %v1826, 0.0
        %v1902 = vmax.f32 %v1828, 0.0
        %v1903 = vmax.f32 %v1897, 0.0
        %v1904 = vmax.f32 %v1899, 0.0
        %s1905 = scalar_lea.vmem [#allocation10], 8
        %v1906 = vld [vmem:[%s1905] sm:$0xff]
        %1907 = vrot.lane.b32.xlu0 %v1901, 17
        %v1908 = vpop.permute.xlu0 %1907
        %1909 = vrot.lane.b32.xlu0 %v1902, 17
        %v1910 = vpop.permute.xlu0 %1909
        %1911 = vrot.lane.b32.xlu0 %v1903, 17
        %v1912 = vpop.permute.xlu0 %1911
        %1913 = vrot.lane.b32.xlu0 %v1904, 17
        %v1914 = vpop.permute.xlu0 %1913
        %v1915 = vsel %vm307, %v1912, %v1914
        %v1916 = vsel %vm307, %v1910, %v1912
        %v1917 = vsel %vm307, %v1908, %v1910
        %v1918 = vsel %vm307, %v1914, %v1908
        %v1919 = vld [vmem:[#allocation7] ss:$8 sm:$0xf]
        %v1921 = vlaneseq
        %v1922 = vshrl.u32 %v1921, 7
        %v1923 = vsub.s32 0, %v1922
        %v1924 = vrot.slane %v1919, %v1923
        %v1925 = vlaneseq
        %v1926 = vshrl.u32 %v1925, 7
        %v1927 = vsub.s32 1, %v1926
        %v1928 = vrot.slane %v1919, %v1927
        %v1929 = vlaneseq
        %v1930 = vshrl.u32 %v1929, 7
        %v1931 = vsub.s32 2, %v1930
        %v1932 = vrot.slane %v1919, %v1931
        %v1933 = vlaneseq
        %v1934 = vshrl.u32 %v1933, 7
        %v1935 = vsub.s32 3, %v1934
        %v1936 = vrot.slane %v1919, %v1935
        %v1941 = vmul.f32 %v1918, %v1924
        %v1942 = vmul.f32 %v1917, %v1928
        %v1943 = vmul.f32 %v1916, %v1932
        %v1944 = vmul.f32 %v1915, %v1936
        %1945 = vst [vmem:[#allocation2] sm:$0xff] %v1941
        %1946 = vst [vmem:[#allocation2 + $0x8] sm:$0xff] %v1942
        %1947 = vst [vmem:[#allocation2 + $0x10] sm:$0xff] %v1943
        %1948 = vst [vmem:[#allocation2 + $0x18] sm:$0xff] %v1944
        %1949 = vrot.lane.b32.xlu0 %v1901, 16
        %v1950 = vpop.permute.xlu0 %1949
        %1951 = vrot.lane.b32.xlu0 %v1902, 16
        %v1952 = vpop.permute.xlu0 %1951
        %1953 = vrot.lane.b32.xlu0 %v1903, 16
        %v1954 = vpop.permute.xlu0 %1953
        %1955 = vrot.lane.b32.xlu0 %v1904, 16
        %v1956 = vpop.permute.xlu0 %1955
        %v1957 = vsel %vm350, %v1954, %v1956
        %v1958 = vsel %vm350, %v1952, %v1954
        %v1959 = vsel %vm350, %v1950, %v1952
        %v1960 = vsel %vm350, %v1956, %v1950
        %v1961 = vld [vmem:[%s355] ss:$8 sm:$0xf]
        %v1963 = vlaneseq
        %v1964 = vshrl.u32 %v1963, 7
        %v1965 = vsub.s32 0, %v1964
        %v1966 = vrot.slane %v1961, %v1965
        %v1967 = vlaneseq
        %v1968 = vshrl.u32 %v1967, 7
        %v1969 = vsub.s32 1, %v1968
        %v1970 = vrot.slane %v1961, %v1969
        %v1971 = vlaneseq
        %v1972 = vshrl.u32 %v1971, 7
        %v1973 = vsub.s32 2, %v1972
        %v1974 = vrot.slane %v1961, %v1973
        %v1975 = vlaneseq
        %v1976 = vshrl.u32 %v1975, 7
        %v1977 = vsub.s32 3, %v1976
        %v1978 = vrot.slane %v1961, %v1977
        %v1983 = vmul.f32 %v1960, %v1966
        %v1984 = vmul.f32 %v1959, %v1970
        %v1985 = vmul.f32 %v1958, %v1974
        %v1986 = vmul.f32 %v1957, %v1978
        %1987 = vst [vmem:[#allocation2 + $0x20] sm:$0xff] %v1983
        %1988 = vst [vmem:[#allocation2 + $0x28] sm:$0xff] %v1984
        %1989 = vst [vmem:[#allocation2 + $0x30] sm:$0xff] %v1985
        %1990 = vst [vmem:[#allocation2 + $0x38] sm:$0xff] %v1986
        %1991 = vrot.lane.b32.xlu0 %v1901, 15
        %v1992 = vpop.permute.xlu0 %1991
        %1993 = vrot.lane.b32.xlu0 %v1902, 15
        %v1994 = vpop.permute.xlu0 %1993
        %1995 = vrot.lane.b32.xlu0 %v1903, 15
        %v1996 = vpop.permute.xlu0 %1995
        %1997 = vrot.lane.b32.xlu0 %v1904, 15
        %v1998 = vpop.permute.xlu0 %1997
        %v1999 = vsel %vm394, %v1996, %v1998
        %v2000 = vsel %vm394, %v1994, %v1996
        %v2001 = vsel %vm394, %v1992, %v1994
        %v2002 = vsel %vm394, %v1998, %v1992
        %v2003 = vld [vmem:[%s399] ss:$8 sm:$0xf]
        %v2005 = vlaneseq
        %v2006 = vshrl.u32 %v2005, 7
        %v2007 = vsub.s32 0, %v2006
        %v2008 = vrot.slane %v2003, %v2007
        %v2009 = vlaneseq
        %v2010 = vshrl.u32 %v2009, 7
        %v2011 = vsub.s32 1, %v2010
        %v2012 = vrot.slane %v2003, %v2011
        %v2013 = vlaneseq
        %v2014 = vshrl.u32 %v2013, 7
        %v2015 = vsub.s32 2, %v2014
        %v2016 = vrot.slane %v2003, %v2015
        %v2017 = vlaneseq
        %v2018 = vshrl.u32 %v2017, 7
        %v2019 = vsub.s32 3, %v2018
        %v2020 = vrot.slane %v2003, %v2019
        %v2025 = vmul.f32 %v2002, %v2008
        %v2026 = vmul.f32 %v2001, %v2012
        %v2027 = vmul.f32 %v2000, %v2016
        %v2028 = vmul.f32 %v1999, %v2020
        %2029 = vst [vmem:[#allocation2 + $0x40] sm:$0xff] %v2025
        %2030 = vst [vmem:[#allocation2 + $0x48] sm:$0xff] %v2026
        %2031 = vst [vmem:[#allocation2 + $0x50] sm:$0xff] %v2027
        %2032 = vst [vmem:[#allocation2 + $0x58] sm:$0xff] %v2028
        %2033 = vrot.lane.b32.xlu0 %v1901, 1
        %v2034 = vpop.permute.xlu0 %2033
        %2035 = vrot.lane.b32.xlu0 %v1902, 1
        %v2036 = vpop.permute.xlu0 %2035
        %2037 = vrot.lane.b32.xlu0 %v1903, 1
        %v2038 = vpop.permute.xlu0 %2037
        %2039 = vrot.lane.b32.xlu0 %v1904, 1
        %v2040 = vpop.permute.xlu0 %2039
        %v2041 = vsel %vm438, %v2038, %v2040
        %v2042 = vsel %vm438, %v2036, %v2038
        %v2043 = vsel %vm438, %v2034, %v2036
        %v2044 = vsel %vm438, %v2040, %v2034
        %v2045 = vld [vmem:[%s443] ss:$8 sm:$0xf]
        %v2047 = vlaneseq
        %v2048 = vshrl.u32 %v2047, 7
        %v2049 = vsub.s32 0, %v2048
        %v2050 = vrot.slane %v2045, %v2049
        %v2051 = vlaneseq
        %v2052 = vshrl.u32 %v2051, 7
        %v2053 = vsub.s32 1, %v2052
        %v2054 = vrot.slane %v2045, %v2053
        %v2055 = vlaneseq
        %v2056 = vshrl.u32 %v2055, 7
        %v2057 = vsub.s32 2, %v2056
        %v2058 = vrot.slane %v2045, %v2057
        %v2059 = vlaneseq
        %v2060 = vshrl.u32 %v2059, 7
        %v2061 = vsub.s32 3, %v2060
        %v2062 = vrot.slane %v2045, %v2061
        %v2067 = vmul.f32 %v2044, %v2050
        %v2068 = vmul.f32 %v2043, %v2054
        %v2069 = vmul.f32 %v2042, %v2058
        %v2070 = vmul.f32 %v2041, %v2062
        %2071 = vst [vmem:[#allocation2 + $0x60] sm:$0xff] %v2067
        %2072 = vst [vmem:[#allocation2 + $0x68] sm:$0xff] %v2068
        %2073 = vst [vmem:[#allocation2 + $0x70] sm:$0xff] %v2069
        %2074 = vst [vmem:[#allocation2 + $0x78] sm:$0xff] %v2070
        %2075 = vst [vmem:[#allocation2 + $0x80] sm:$0xff] %v1901
        %2076 = vst [vmem:[#allocation2 + $0x88] sm:$0xff] %v1902
        %2077 = vst [vmem:[#allocation2 + $0x90] sm:$0xff] %v1903
        %2078 = vst [vmem:[#allocation2 + $0x98] sm:$0xff] %v1904
        %2079 = vrot.lane.b32.xlu0 %v1901, 127
        %v2080 = vpop.permute.xlu0 %2079
        %2081 = vrot.lane.b32.xlu0 %v1902, 127
        %v2082 = vpop.permute.xlu0 %2081
        %2083 = vrot.lane.b32.xlu0 %v1903, 127
        %v2084 = vpop.permute.xlu0 %2083
        %2085 = vrot.lane.b32.xlu0 %v1904, 127
        %v2086 = vpop.permute.xlu0 %2085
        %v2087 = vsel %vm486, %v2084, %v2086
        %v2088 = vsel %vm486, %v2082, %v2084
        %v2089 = vsel %vm486, %v2080, %v2082
        %v2090 = vsel %vm486, %v2086, %v2080
        %v2091 = vld [vmem:[%s491] ss:$8 sm:$0xf]
        %v2093 = vlaneseq
        %v2094 = vshrl.u32 %v2093, 7
        %v2095 = vsub.s32 0, %v2094
        %v2096 = vrot.slane %v2091, %v2095
        %v2097 = vlaneseq
        %v2098 = vshrl.u32 %v2097, 7
        %v2099 = vsub.s32 1, %v2098
        %v2100 = vrot.slane %v2091, %v2099
        %v2101 = vlaneseq
        %v2102 = vshrl.u32 %v2101, 7
        %v2103 = vsub.s32 2, %v2102
        %v2104 = vrot.slane %v2091, %v2103
        %v2105 = vlaneseq
        %v2106 = vshrl.u32 %v2105, 7
        %v2107 = vsub.s32 3, %v2106
        %v2108 = vrot.slane %v2091, %v2107
        %v2113 = vmul.f32 %v2089, %v2096
        %v2114 = vmul.f32 %v2088, %v2100
        %v2115 = vmul.f32 %v2087, %v2104
        %v2116 = vmul.f32 %v2090, %v2108
        %2117 = vst [vmem:[#allocation2 + $0xa0] sm:$0xff] %v2113
        %2118 = vst [vmem:[#allocation2 + $0xa8] sm:$0xff] %v2114
        %2119 = vst [vmem:[#allocation2 + $0xb0] sm:$0xff] %v2115
        %2120 = vst [vmem:[#allocation2 + $0xb8] sm:$0xff] %v2116
        %2121 = vrot.lane.b32.xlu0 %v1901, 113
        %v2122 = vpop.permute.xlu0 %2121
        %2123 = vrot.lane.b32.xlu0 %v1902, 113
        %v2124 = vpop.permute.xlu0 %2123
        %2125 = vrot.lane.b32.xlu0 %v1903, 113
        %v2126 = vpop.permute.xlu0 %2125
        %2127 = vrot.lane.b32.xlu0 %v1904, 113
        %v2128 = vpop.permute.xlu0 %2127
        %v2129 = vsel %vm530, %v2126, %v2128
        %v2130 = vsel %vm530, %v2124, %v2126
        %v2131 = vsel %vm530, %v2122, %v2124
        %v2132 = vsel %vm530, %v2128, %v2122
        %v2133 = vld [vmem:[%s535] ss:$8 sm:$0xf]
        %v2135 = vlaneseq
        %v2136 = vshrl.u32 %v2135, 7
        %v2137 = vsub.s32 0, %v2136
        %v2138 = vrot.slane %v2133, %v2137
        %v2139 = vlaneseq
        %v2140 = vshrl.u32 %v2139, 7
        %v2141 = vsub.s32 1, %v2140
        %v2142 = vrot.slane %v2133, %v2141
        %v2143 = vlaneseq
        %v2144 = vshrl.u32 %v2143, 7
        %v2145 = vsub.s32 2, %v2144
        %v2146 = vrot.slane %v2133, %v2145
        %v2147 = vlaneseq
        %v2148 = vshrl.u32 %v2147, 7
        %v2149 = vsub.s32 3, %v2148
        %v2150 = vrot.slane %v2133, %v2149
        %v2155 = vmul.f32 %v2131, %v2138
        %v2156 = vmul.f32 %v2130, %v2142
        %v2157 = vmul.f32 %v2129, %v2146
        %v2158 = vmul.f32 %v2132, %v2150
        %2159 = vst [vmem:[#allocation2 + $0xc0] sm:$0xff] %v2155
        %2160 = vst [vmem:[#allocation2 + $0xc8] sm:$0xff] %v2156
        %2161 = vst [vmem:[#allocation2 + $0xd0] sm:$0xff] %v2157
        %2162 = vst [vmem:[#allocation2 + $0xd8] sm:$0xff] %v2158
        %2163 = vrot.lane.b32.xlu0 %v1901, 112
        %v2164 = vpop.permute.xlu0 %2163
        %2165 = vrot.lane.b32.xlu0 %v1902, 112
        %v2166 = vpop.permute.xlu0 %2165
        %2167 = vrot.lane.b32.xlu0 %v1903, 112
        %v2168 = vpop.permute.xlu0 %2167
        %2169 = vrot.lane.b32.xlu0 %v1904, 112
        %v2170 = vpop.permute.xlu0 %2169
        %v2171 = vsel %vm574, %v2168, %v2170
        %v2172 = vsel %vm574, %v2166, %v2168
        %v2173 = vsel %vm574, %v2164, %v2166
        %v2174 = vsel %vm574, %v2170, %v2164
        %v2175 = vld [vmem:[%s579] ss:$8 sm:$0xf]
        %v2177 = vlaneseq
        %v2178 = vshrl.u32 %v2177, 7
        %v2179 = vsub.s32 0, %v2178
        %v2180 = vrot.slane %v2175, %v2179
        %v2181 = vlaneseq
        %v2182 = vshrl.u32 %v2181, 7
        %v2183 = vsub.s32 1, %v2182
        %v2184 = vrot.slane %v2175, %v2183
        %v2185 = vlaneseq
        %v2186 = vshrl.u32 %v2185, 7
        %v2187 = vsub.s32 2, %v2186
        %v2188 = vrot.slane %v2175, %v2187
        %v2189 = vlaneseq
        %v2190 = vshrl.u32 %v2189, 7
        %v2191 = vsub.s32 3, %v2190
        %v2192 = vrot.slane %v2175, %v2191
        %v2197 = vmul.f32 %v2173, %v2180
        %v2198 = vmul.f32 %v2172, %v2184
        %v2199 = vmul.f32 %v2171, %v2188
        %v2200 = vmul.f32 %v2174, %v2192
        %2201 = vst [vmem:[#allocation2 + $0xe0] sm:$0xff] %v2197
        %2202 = vst [vmem:[#allocation2 + $0xe8] sm:$0xff] %v2198
        %2203 = vst [vmem:[#allocation2 + $0xf0] sm:$0xff] %v2199
        %2204 = vst [vmem:[#allocation2 + $0xf8] sm:$0xff] %v2200
        %2205 = vrot.lane.b32.xlu0 %v1901, 111
        %v2206 = vpop.permute.xlu0 %2205
        %2207 = vrot.lane.b32.xlu0 %v1902, 111
        %v2208 = vpop.permute.xlu0 %2207
        %2209 = vrot.lane.b32.xlu0 %v1903, 111
        %v2210 = vpop.permute.xlu0 %2209
        %2211 = vrot.lane.b32.xlu0 %v1904, 111
        %v2212 = vpop.permute.xlu0 %2211
        %v2213 = vsel %vm618, %v2210, %v2212
        %v2214 = vsel %vm618, %v2208, %v2210
        %v2215 = vsel %vm618, %v2206, %v2208
        %v2216 = vsel %vm618, %v2212, %v2206
        %v2217 = vld [vmem:[%s623] ss:$8 sm:$0xf]
        %v2219 = vlaneseq
        %v2220 = vshrl.u32 %v2219, 7
        %v2221 = vsub.s32 0, %v2220
        %v2222 = vrot.slane %v2217, %v2221
        %v2223 = vlaneseq
        %v2224 = vshrl.u32 %v2223, 7
        %v2225 = vsub.s32 1, %v2224
        %v2226 = vrot.slane %v2217, %v2225
        %v2227 = vlaneseq
        %v2228 = vshrl.u32 %v2227, 7
        %v2229 = vsub.s32 2, %v2228
        %v2230 = vrot.slane %v2217, %v2229
        %v2231 = vlaneseq
        %v2232 = vshrl.u32 %v2231, 7
        %v2233 = vsub.s32 3, %v2232
        %v2234 = vrot.slane %v2217, %v2233
        %v2239 = vmul.f32 %v2215, %v2222
        %v2240 = vmul.f32 %v2214, %v2226
        %v2241 = vmul.f32 %v2213, %v2230
        %v2242 = vmul.f32 %v2216, %v2234
        %2243 = vst [vmem:[#allocation2 + $0x100] sm:$0xff] %v2239
        %2244 = vst [vmem:[#allocation2 + $0x108] sm:$0xff] %v2240
        %2245 = vst [vmem:[#allocation2 + $0x110] sm:$0xff] %v2241
        %2246 = vst [vmem:[#allocation2 + $0x118] sm:$0xff] %v2242
        %v2247 = vld [vmem:[#allocation2] sm:$0xff]
        %v2248 = vld [vmem:[#allocation2 + $0x8] sm:$0xff]
        %v2249 = vld [vmem:[#allocation2 + $0x10] sm:$0xff]
        %v2250 = vld [vmem:[#allocation2 + $0x18] sm:$0xff]
        %v2251 = vld [vmem:[#allocation2 + $0x20] sm:$0xff]
        %v2252 = vld [vmem:[#allocation2 + $0x28] sm:$0xff]
        %v2253 = vld [vmem:[#allocation2 + $0x30] sm:$0xff]
        %v2254 = vld [vmem:[#allocation2 + $0x38] sm:$0xff]
        %v2255 = vld [vmem:[#allocation2 + $0x40] sm:$0xff]
        %v2256 = vld [vmem:[#allocation2 + $0x48] sm:$0xff]
        %v2257 = vld [vmem:[#allocation2 + $0x50] sm:$0xff]
        %v2258 = vld [vmem:[#allocation2 + $0x58] sm:$0xff]
        %v2259 = vld [vmem:[#allocation2 + $0x60] sm:$0xff]
        %v2260 = vld [vmem:[#allocation2 + $0x68] sm:$0xff]
        %v2261 = vld [vmem:[#allocation2 + $0x70] sm:$0xff]
        %v2262 = vld [vmem:[#allocation2 + $0x78] sm:$0xff]
        %v2263 = vld [vmem:[#allocation2 + $0x80] sm:$0xff]
        %v2264 = vld [vmem:[#allocation2 + $0x88] sm:$0xff]
        %v2265 = vld [vmem:[#allocation2 + $0x90] sm:$0xff]
        %v2266 = vld [vmem:[#allocation2 + $0x98] sm:$0xff]
        %v2267 = vld [vmem:[#allocation2 + $0xa0] sm:$0xff]
        %v2268 = vld [vmem:[#allocation2 + $0xa8] sm:$0xff]
        %v2269 = vld [vmem:[#allocation2 + $0xb0] sm:$0xff]
        %v2270 = vld [vmem:[#allocation2 + $0xb8] sm:$0xff]
        %v2271 = vld [vmem:[#allocation2 + $0xc0] sm:$0xff]
        %v2272 = vld [vmem:[#allocation2 + $0xc8] sm:$0xff]
        %v2273 = vld [vmem:[#allocation2 + $0xd0] sm:$0xff]
        %v2274 = vld [vmem:[#allocation2 + $0xd8] sm:$0xff]
        %v2275 = vld [vmem:[#allocation2 + $0xe0] sm:$0xff]
        %v2276 = vld [vmem:[#allocation2 + $0xe8] sm:$0xff]
        %v2277 = vld [vmem:[#allocation2 + $0xf0] sm:$0xff]
        %v2278 = vld [vmem:[#allocation2 + $0xf8] sm:$0xff]
        %v2279 = vld [vmem:[#allocation2 + $0x100] sm:$0xff]
        %v2280 = vld [vmem:[#allocation2 + $0x108] sm:$0xff]
        %v2281 = vld [vmem:[#allocation2 + $0x110] sm:$0xff]
        %v2282 = vld [vmem:[#allocation2 + $0x118] sm:$0xff]
        %v2283 = vld [vmem:[#allocation2 + $0x120] sm:$0xff]
        %v2284 = vld [vmem:[#allocation2 + $0x128] sm:$0xff]
        %v2285 = vld [vmem:[#allocation2 + $0x130] sm:$0xff]
        %v2286 = vld [vmem:[#allocation2 + $0x138] sm:$0xff]
        %v2288 = vsel %vm694, %v1906, 0
        %2290 = vmatprep.subr.mxu0 %v2248
        %2291 = vmatpush1.msra.mxu0 %v2247
        %2292 = vmatprep.subr.mxu0 %v2252
        %2293 = vmatpush1.msra.mxu0 %v2251
        %2294 = vmatprep.subr.mxu0 %v2256
        %2295 = vmatpush1.msra.mxu0 %v2255
        %2296 = vmatprep.subr.mxu0 %v2260
        %2297 = vmatpush1.msra.mxu0 %v2259
        %2298 = vmatprep.subr.mxu0 %v2264
        %2299 = vmatpush1.msra.mxu0 %v2263
        %2300 = vmatprep.subr.mxu0 %v2268
        %2301 = vmatpush1.msra.mxu0 %v2267
        %2302 = vmatprep.subr.mxu0 %v2272
        %2303 = vmatpush1.msra.mxu0 %v2271
        %2304 = vmatprep.subr.mxu0 %v2276
        %2305 = vmatpush1.msra.mxu0 %v2275
        %2306 = vmatprep.subr.mxu0 %v2280
        %2307 = vmatpush1.msra.mxu0 %v2279
        %2308 = vmatprep.subr.mxu0 %v2284
        %2309 = vmatpush1.msra.mxu0 %v2283
        %2310 = vmatprep.subr.mxu0 0.0
        %2311 = vmatpush1.msra.mxu0 0.0
        %2312 = vmatprep.subr.mxu0 0.0
        %2313 = vmatpush1.msra.mxu0 0.0
        %2314 = vmatprep.subr.mxu0 0.0
        %2315 = vmatpush1.msra.mxu0 0.0
        %2316 = vmatprep.subr.mxu0 0.0
        %2317 = vmatpush1.msra.mxu0 0.0
        %2318 = vmatprep.subr.mxu0 0.0
        %2319 = vmatpush1.msra.mxu0 0.0
        %2320 = vmatprep.subr.mxu0 0.0
        %2321 = vmatpush1.msra.mxu0 0.0
        %2322 = vmatprep.subr.mxu0 0.0
        %2323 = vmatpush1.msra.mxu0 0.0
        %2324 = vmatprep.subr.mxu0 0.0
        %2325 = vmatpush1.msra.mxu0 0.0
        %2326 = vmatprep.subr.mxu0 0.0
        %2327 = vmatpush1.msra.mxu0 0.0
        %2328 = vmatprep.subr.mxu0 0.0
        %2329 = vmatpush1.msra.mxu0 0.0
        %2330 = vmatprep.subr.mxu0 0.0
        %2331 = vmatpush1.msra.mxu0 0.0
        %2332 = vmatprep.subr.mxu0 0.0
        %2333 = vmatpush1.msra.mxu0 0.0
        %2334 = vmatprep.subr.mxu0 0.0
        %2335 = vmatpush1.msra.mxu0 0.0
        %2336 = vmatprep.subr.mxu0 0.0
        %2337 = vmatpush1.msra.mxu0 0.0
        %2338 = vmatprep.subr.mxu0 0.0
        %2339 = vmatpush1.msra.mxu0 0.0
        %2340 = vmatprep.subr.mxu0 0.0
        %2341 = vmatpush1.msra.mxu0 0.0
        %2342 = vmatprep.subr.mxu0 0.0
        %2343 = vmatpush1.msra.mxu0 0.0
        %2344 = vmatprep.subr.mxu0 0.0
        %2345 = vmatpush1.msra.mxu0 0.0
        %2346 = vmatprep.subr.mxu0 0.0
        %2347 = vmatpush1.msra.mxu0 0.0
        %2348 = vmatprep.subr.mxu0 0.0
        %2349 = vmatpush1.msra.mxu0 0.0
        %2350 = vmatprep.subr.mxu0 0.0
        %2351 = vmatpush1.msra.mxu0 0.0
        %2352 = vmatprep.subr.mxu0 0.0
        %2353 = vmatpush1.msra.mxu0 0.0
        %2354 = vmatprep.mubr.f32.mxu0 0.0
        %2355 = vmatmul.mubr.f32.gmra.mrb[0].mxu0 %v2288
        %v2356 = vpop.f32.mrb[0].mxu0
        %v2357 = vadd.f32 %v1370, %v2356
        %v2358 = vpop.f32.mrb[0].mxu0
        %v2359 = vadd.f32 %v1371, %v2358
        %2360 = vdwg.mxu0
        %2361 = vmatprep.subr.mxu0 %v2250
        %2362 = vmatpush1.msra.mxu0 %v2249
        %2363 = vmatprep.subr.mxu0 %v2254
        %2364 = vmatpush1.msra.mxu0 %v2253
        %2365 = vmatprep.subr.mxu0 %v2258
        %2366 = vmatpush1.msra.mxu0 %v2257
        %2367 = vmatprep.subr.mxu0 %v2262
        %2368 = vmatpush1.msra.mxu0 %v2261
        %2369 = vmatprep.subr.mxu0 %v2266
        %2370 = vmatpush1.msra.mxu0 %v2265
        %2371 = vmatprep.subr.mxu0 %v2270
        %2372 = vmatpush1.msra.mxu0 %v2269
        %2373 = vmatprep.subr.mxu0 %v2274
        %2374 = vmatpush1.msra.mxu0 %v2273
        %2375 = vmatprep.subr.mxu0 %v2278
        %2376 = vmatpush1.msra.mxu0 %v2277
        %2377 = vmatprep.subr.mxu0 %v2282
        %2378 = vmatpush1.msra.mxu0 %v2281
        %2379 = vmatprep.subr.mxu0 %v2286
        %2380 = vmatpush1.msra.mxu0 %v2285
        %2381 = vmatprep.subr.mxu0 0.0
        %2382 = vmatpush1.msra.mxu0 0.0
        %2383 = vmatprep.subr.mxu0 0.0
        %2384 = vmatpush1.msra.mxu0 0.0
        %2385 = vmatprep.subr.mxu0 0.0
        %2386 = vmatpush1.msra.mxu0 0.0
        %2387 = vmatprep.subr.mxu0 0.0
        %2388 = vmatpush1.msra.mxu0 0.0
        %2389 = vmatprep.subr.mxu0 0.0
        %2390 = vmatpush1.msra.mxu0 0.0
        %2391 = vmatprep.subr.mxu0 0.0
        %2392 = vmatpush1.msra.mxu0 0.0
        %2393 = vmatprep.subr.mxu0 0.0
        %2394 = vmatpush1.msra.mxu0 0.0
        %2395 = vmatprep.subr.mxu0 0.0
        %2396 = vmatpush1.msra.mxu0 0.0
        %2397 = vmatprep.subr.mxu0 0.0
        %2398 = vmatpush1.msra.mxu0 0.0
        %2399 = vmatprep.subr.mxu0 0.0
        %2400 = vmatpush1.msra.mxu0 0.0
        %2401 = vmatprep.subr.mxu0 0.0
        %2402 = vmatpush1.msra.mxu0 0.0
        %2403 = vmatprep.subr.mxu0 0.0
        %2404 = vmatpush1.msra.mxu0 0.0
        %2405 = vmatprep.subr.mxu0 0.0
        %2406 = vmatpush1.msra.mxu0 0.0
        %2407 = vmatprep.subr.mxu0 0.0
        %2408 = vmatpush1.msra.mxu0 0.0
        %2409 = vmatprep.subr.mxu0 0.0
        %2410 = vmatpush1.msra.mxu0 0.0
        %2411 = vmatprep.subr.mxu0 0.0
        %2412 = vmatpush1.msra.mxu0 0.0
        %2413 = vmatprep.subr.mxu0 0.0
        %2414 = vmatpush1.msra.mxu0 0.0
        %2415 = vmatprep.subr.mxu0 0.0
        %2416 = vmatpush1.msra.mxu0 0.0
        %2417 = vmatprep.subr.mxu0 0.0
        %2418 = vmatpush1.msra.mxu0 0.0
        %2419 = vmatprep.subr.mxu0 0.0
        %2420 = vmatpush1.msra.mxu0 0.0
        %2421 = vmatprep.subr.mxu0 0.0
        %2422 = vmatpush1.msra.mxu0 0.0
        %2423 = vmatprep.subr.mxu0 0.0
        %2424 = vmatpush1.msra.mxu0 0.0
        %2425 = vmatprep.mubr.f32.mxu0 0.0
        %2426 = vmatmul.mubr.f32.gmra.mrb[0].mxu0 %v2288
        %v2427 = vpop.f32.mrb[0].mxu0
        %v2428 = vadd.f32 %v1372, %v2427
        %v2429 = vpop.f32.mrb[0].mxu0
        %v2430 = vadd.f32 %v1373, %v2429
        %2431 = vdwg.mxu0
        %v2432 = vmax.f32 %v2357, 0.0
        %v2433 = vmax.f32 %v2359, 0.0
        %v2434 = vmax.f32 %v2428, 0.0
        %v2435 = vmax.f32 %v2430, 0.0
        %s2436 = sld [smem:[#allocation3]]
        %v2437 = vstv %s2436
        %v2438 = vsub.f32 %v2432, %v2437
        %v2439 = vsub.f32 %v2433, %v2437
        %v2440 = vsub.f32 %v2434, %v2437
        %v2441 = vsub.f32 %v2435, %v2437
        %v2442 = vmax.f32 %v2438, 0.0
        %v2443 = vmax.f32 %v2439, 0.0
        %v2444 = vmax.f32 %v2440, 0.0
        %v2445 = vmax.f32 %v2441, 0.0
        %2446 = vst [vmem:[%s283] sm:$0xff] %v2442
        %2447 = vst [vmem:[%s283 + $0x8] sm:$0xff] %v2443
        %2448 = vst [vmem:[%s283 + $0x10] sm:$0xff] %v2444
        %2449 = vst [vmem:[%s283 + $0x18] sm:$0xff] %v2445
        %s2450 = sand.u32 %s143, 1
        %s2451 = scalar_lea.sflag [#allocation6], %s2450
        %s2452 = sand.u32 %s143, 1
        %s2453 = smul.addr %s2452, 32
        %s2454 = scalar_lea.vmem [#allocation12], %s2453
        // Predicated region
        $region57: #{tpu_custom_call.1} parent=39 // pred_check
          %p2455 = pneg %p153
        $region58: #{tpu_custom_call.1} parent=39 // pred_check_branch
          %2457 = sbr.rel (%p2455) target = $region60
        $region59: #{tpu_custom_call.1} parent=39 // pred_region
          %s2459 = ssub.s32 512, 512
          %2460 = vsyncadd %s2451, %s2459
          %s2461 = smul.addr %s25, 4
          %s2462 = smul.addr %s2461, 128
          %s2463 = scalar_lea.hbm %s5, %s2462
          %s2465 = sshll.u32 %s2454, 4
          %s2466 = int_to_ptr.vmem [resolvable:$true] %s2465
          %2468 = dma.vmem_to_hbm [thread:$0]  %s2466, 512, %s2463, %s2451
        $region60: #{tpu_custom_call.1} parent=39 // pred_fallthru
          _
      $region40: #{tpu_custom_call.1} parent=5 // pred_fallthru
        _
      %p2469 = scmp.le.s32.totalorder 2, %s20
      // Predicated region
      $region61: #{tpu_custom_call.1} parent=5 // pred_check
        %p2470 = pneg %p2469
      $region62: #{tpu_custom_call.1} parent=5 // pred_check_branch
        %2472 = sbr.rel (%p2470) target = $region64
      $region63: #{tpu_custom_call.1} parent=5 // pred_region
        %s2473 = ssub.s32 %s20, 2
        // Predicated region
        $region65: #{tpu_custom_call.1} parent=63 // pred_check
          %p2474 = pneg %p159
        $region66: #{tpu_custom_call.1} parent=63 // pred_check_branch
          %2476 = sbr.rel (%p2474) target = $region68
        $region67: #{tpu_custom_call.1} parent=63 // pred_region
          %s2477 = sand.u32 %s144, 1
          %s2478 = scalar_lea.sflag [#allocation6], %s2477
          %s2479 = sand.u32 %s144, 1
          %s2480 = smul.addr %s2479, 32
          %s2481 = scalar_lea.vmem [#allocation12], %s2480
          %2482 = dma.done %s2478, 512
        $region68: #{tpu_custom_call.1} parent=63 // pred_fallthru
          _
      $region64: #{tpu_custom_call.1} parent=5 // pred_fallthru
        _
    $region6: #{tpu_custom_call.1} parent=1 // loop_footer
      %s24 = sadd.s32 1, %s20
    $region7: #{tpu_custom_call.1} parent=1 // loop_footer_branch
      %19 = sbr.rel target = $region3
    $region8: #{tpu_custom_call.1} parent=1 // loop_exit
      _
    %2483 = vsyncpa [#allocation5], 1
    %s2484 = scalar_lea.sflag [#allocation5], 1
    %2485 = vsyncpa %s2484, 1
    %2486 = vsyncpa [#allocation8], 1
    %2487 = vsyncpa [#allocation11], 1
    %2488 = vsyncpa [#allocation6], 1
    %s2489 = scalar_lea.sflag [#allocation6], 1
    %2490 = vsyncpa %s2489, 1

</llo_original>
